<compile_context>
chip_gen: v7x
topology: tpu7x:2x2x1
jax: 0.10.0
libtpu: 0.0.40
codegen_flags: <defaults>
</compile_context>

<pallas_src>
import functools

import jax
import jax.numpy as jnp
from jax.experimental import pallas as pl
from jax.experimental.pallas import tpu as pltpu

# ---- module config (small, consistent with Qwen3Attention semantics) ----
HIDDEN       = 512                     # hidden_size
NUM_HEADS    = 4                       # num_heads (tp_size = 1)
NUM_KV_HEADS = 2                       # num_kv_heads
HEAD_DIM     = 128                     # head_dim
Q_SIZE       = NUM_HEADS * HEAD_DIM    # 512
KV_SIZE      = NUM_KV_HEADS * HEAD_DIM # 256
QKV_OUT      = Q_SIZE + 2 * KV_SIZE    # 1024
EPS          = 1e-6                    # rms_norm_eps
ROPE_THETA   = 10000.0
SEQ          = 8                       # number of tokens
SCALE        = HEAD_DIM ** -0.5
HEADS_PER_KV = NUM_HEADS // NUM_KV_HEADS


def _rmsnorm(x, w):
    # x: (T, HEAD_DIM) f32, w: (1, HEAD_DIM) f32
    var = jnp.mean(x * x, axis=-1, keepdims=True)
    return x * jax.lax.rsqrt(var + EPS) * w


def _rope(x, cos, sin_signed):
    # neox rotary with the rotate_half sign baked into sin_signed = [-sin, sin].
    # Rolling by HEAD_DIM//2 swaps the halves -> [x2, x1], so
    #   x*cos + roll(x)*sin_signed = [x1*cos - x2*sin, x2*cos + x1*sin].
    return x * cos + pltpu.roll(x, shift=HEAD_DIM // 2, axis=1) * sin_signed


def qwen3_attn_kernel(x_ref, wqkv_ref, wo_ref, qnw_ref, knw_ref,
                      cos_ref, sin_ref, out_ref, *, tq):
    seq = x_ref.shape[0]
    i = pl.program_id(0)
    q_start = pl.multiple_of(i * tq, tq)

    # Activations cast to bf16 for the MXU; accumulation stays f32.
    x_full = x_ref[...].astype(jnp.bfloat16)                     # (seq, H)
    x_q = x_ref[pl.ds(q_start, tq), :].astype(jnp.bfloat16)      # (tq, H)

    # Projections: q only for this query tile, k/v for the whole sequence.
    q_all = jnp.dot(x_q, wqkv_ref[:, :Q_SIZE],
                    preferred_element_type=jnp.float32)          # (tq, Q_SIZE)
    kv_all = jnp.dot(x_full, wqkv_ref[:, Q_SIZE:QKV_OUT],
                     preferred_element_type=jnp.float32)         # (seq, 2*KV)

    qnw = qnw_ref[...]            # already pre-scaled by SCALE in the wrapper
    knw = knw_ref[...]
    cos_f, sin_f = cos_ref[...], sin_ref[...]
    cos_q = cos_ref[pl.ds(q_start, tq), :]
    sin_q = sin_ref[pl.ds(q_start, tq), :]

    # Causal mask for the stacked-head score tile (HEADS_PER_KV*tq, seq).
    row = jax.lax.broadcasted_iota(jnp.int32, (HEADS_PER_KV * tq, seq), 0)
    col = jax.lax.broadcasted_iota(jnp.int32, (HEADS_PER_KV * tq, seq), 1)
    causal = col <= q_start + (row % tq)

    acc = jnp.zeros((tq, HIDDEN), jnp.float32)
    for g in range(NUM_KV_HEADS):
        # K / V for this kv head: RMSNorm + RoPE on K (f32), V untouched.
        k_g = kv_all[:, g * HEAD_DIM:(g + 1) * HEAD_DIM]
        k_g = _rope(_rmsnorm(k_g, knw), cos_f, sin_f).astype(jnp.bfloat16)
        v_g = kv_all[:, KV_SIZE + g * HEAD_DIM:
                        KV_SIZE + (g + 1) * HEAD_DIM].astype(jnp.bfloat16)

        # Stack the query heads mapped to this kv head along the row axis.
        q_parts = []
        for r in range(HEADS_PER_KV):
            h = g * HEADS_PER_KV + r
            qh = q_all[:, h * HEAD_DIM:(h + 1) * HEAD_DIM]
            q_parts.append(_rope(_rmsnorm(qh, qnw), cos_q, sin_q))
        q_grp = jnp.concatenate(q_parts, axis=0).astype(jnp.bfloat16)

        # Scores: contract head_dim of q against head_dim of k (no .T).
        s = jax.lax.dot_general(q_grp, k_g, (((1,), (1,)), ((), ())),
                                preferred_element_type=jnp.float32)
        s = jnp.where(causal, s, -1e30)
        m = jnp.max(s, axis=-1, keepdims=True)
        p = jnp.exp(s - m)
        denom = jnp.sum(p, axis=-1, keepdims=True)
        p = (p * pl.reciprocal(denom, approx=True)).astype(jnp.bfloat16)

        pv = jnp.dot(p, v_g, preferred_element_type=jnp.float32)  # (hpk*tq, D)

        # o_proj accumulated per head: static 128-aligned slices of wo,
        # no lane-dim concatenate of the per-head outputs.
        for r in range(HEADS_PER_KV):
            h = g * HEADS_PER_KV + r
            pv_h = pv[r * tq:(r + 1) * tq, :].astype(jnp.bfloat16)
            acc = acc + jnp.dot(pv_h,
                                wo_ref[h * HEAD_DIM:(h + 1) * HEAD_DIM, :],
                                preferred_element_type=jnp.float32)

    out_ref[...] = acc


def qwen3_attention(positions, hidden_states, wqkv, wo, q_norm_w, k_norm_w):
    t = hidden_states.shape[0]
    tq = min(t, 256)                 # query tile; keeps MXU M dim fat at scale
    assert t % tq == 0 and tq % 8 == 0

    # Rotary table (glue): neox style, sign of rotate_half folded into sin.
    inv_freq = 1.0 / (ROPE_THETA ** (
        jnp.arange(0, HEAD_DIM, 2, dtype=jnp.float32) / HEAD_DIM))
    freqs = positions.astype(jnp.float32)[:, None] * inv_freq[None, :]
    cos = jnp.concatenate([jnp.cos(freqs), jnp.cos(freqs)], axis=-1)       # (T, D)
    sin_signed = jnp.concatenate([-jnp.sin(freqs), jnp.sin(freqs)], axis=-1)

    # bf16 weights (native MXU input, halves weight DMA); norms stay f32.
    wqkv_bf = wqkv.astype(jnp.bfloat16)
    wo_bf = wo.astype(jnp.bfloat16)
    # Fold the attention scale into the q RMSNorm weight (RoPE is linear).
    qnw = (q_norm_w * SCALE).reshape(1, HEAD_DIM)
    knw = k_norm_w.reshape(1, HEAD_DIM)

    vmem = pltpu.MemorySpace.VMEM

    def resident(shape):
        return pl.BlockSpec(shape, lambda i: (0,) * len(shape),
                            memory_space=vmem)

    return pl.pallas_call(
        functools.partial(qwen3_attn_kernel, tq=tq),
        out_shape=jax.ShapeDtypeStruct((t, HIDDEN), jnp.float32),
        grid=(t // tq,),
        in_specs=[
            resident((t, HIDDEN)),        # hidden_states (full: needed for K/V)
            resident((HIDDEN, QKV_OUT)),  # qkv_proj weight (bf16)
            resident((Q_SIZE, HIDDEN)),   # o_proj weight (bf16)
            resident((1, HEAD_DIM)),      # q_norm weight * scale
            resident((1, HEAD_DIM)),      # k_norm weight
            resident((t, HEAD_DIM)),      # cos
            resident((t, HEAD_DIM)),      # signed sin
        ],
        out_specs=pl.BlockSpec((tq, HIDDEN), lambda i: (i, 0),
                               memory_space=vmem),
        compiler_params=pltpu.CompilerParams(
            dimension_semantics=("parallel",),      # megacore split on v7x
            vmem_limit_bytes=32 * 1024 * 1024,      # safe on v5e/v6e/v7x; ~3 MiB used
        ),
    )(hidden_states, wqkv_bf, wo_bf, qnw, knw, cos, sin_signed)


def qwen3_attention_ref(positions, x, wqkv, wo, q_norm_w, k_norm_w):
    """Pure-JAX f32 reference (mirrors the PyTorch module)."""
    t = x.shape[0]
    qkv = x @ wqkv
    q = qkv[:, :Q_SIZE].reshape(t, NUM_HEADS, HEAD_DIM)
    k = qkv[:, Q_SIZE:Q_SIZE + KV_SIZE].reshape(t, NUM_KV_HEADS, HEAD_DIM)
    v = qkv[:, Q_SIZE + KV_SIZE:].reshape(t, NUM_KV_HEADS, HEAD_DIM)

    def rms(a, w):
        return a * jax.lax.rsqrt(jnp.mean(a * a, -1, keepdims=True) + EPS) * w

    q = rms(q, q_norm_w)
    k = rms(k, k_norm_w)

    inv_freq = 1.0 / (ROPE_THETA ** (
        jnp.arange(0, HEAD_DIM, 2, dtype=jnp.float32) / HEAD_DIM))
    fr = positions.astype(jnp.float32)[:, None] * inv_freq[None, :]
    cos = jnp.concatenate([jnp.cos(fr), jnp.cos(fr)], -1)[:, None, :]
    sin = jnp.concatenate([jnp.sin(fr), jnp.sin(fr)], -1)[:, None, :]

    def rope(a):
        half = HEAD_DIM // 2
        rot = jnp.concatenate([-a[..., half:], a[..., :half]], -1)
        return a * cos + rot * sin

    q = rope(q)
    k = rope(k)
    k = jnp.repeat(k, HEADS_PER_KV, axis=1)
    v = jnp.repeat(v, HEADS_PER_KV, axis=1)

    s = jnp.einsum('qhd,khd->hqk', q, k) * SCALE
    mask = jnp.tril(jnp.ones((t, t), bool))
    s = jnp.where(mask[None], s, -jnp.inf)
    p = jax.nn.softmax(s, axis=-1)
    o = jnp.einsum('hqk,khd->qhd', p, v).reshape(t, Q_SIZE)
    return o @ wo


if __name__ == "__main__":
    key = jax.random.PRNGKey(0)
    k0, k1, k2, k3, k4 = jax.random.split(key, 5)

    positions = jnp.arange(SEQ, dtype=jnp.int32)
    hidden_states = jax.random.normal(k0, (SEQ, HIDDEN), dtype=jnp.float32)

    # qkv_proj weight: [hidden, q_size + 2*kv_size] (qkv_bias=False)
    wqkv = 0.02 * jax.random.normal(k1, (HIDDEN, QKV_OUT), dtype=jnp.float32)
    # o_proj weight: [num_heads*head_dim, hidden] (no bias)
    wo = 0.02 * jax.random.normal(k2, (Q_SIZE, HIDDEN), dtype=jnp.float32)
    # q_norm / k_norm RMSNorm weights over head_dim
    q_norm_w = 1.0 + 0.01 * jax.random.normal(k3, (HEAD_DIM,), dtype=jnp.float32)
    k_norm_w = 1.0 + 0.01 * jax.random.normal(k4, (HEAD_DIM,), dtype=jnp.float32)

    out = qwen3_attention(positions, hidden_states, wqkv, wo,
                          q_norm_w, k_norm_w)
    jax.block_until_ready(out)
    assert out.shape == (SEQ, HIDDEN)

    ref = qwen3_attention_ref(positions, hidden_states, wqkv, wo,
                              q_norm_w, k_norm_w)
    err = float(jnp.max(jnp.abs(out - ref)))
    assert err < 7.5e-2, f"max abs error vs f32 reference too large: {err}"

    print("KERNEL_OK")
</pallas_src>

<mosaic_0001>
module attributes {stable_mosaic.version = 11 : i64} {
  func.func @qwen3_attn_kernel(%arg0: i32, %arg1: memref<8x512xf32, #tpu.memory_space<vmem>>, %arg2: memref<512x1024xbf16, #tpu.memory_space<vmem>>, %arg3: memref<512x512xbf16, #tpu.memory_space<vmem>>, %arg4: memref<1x128xf32, #tpu.memory_space<vmem>>, %arg5: memref<1x128xf32, #tpu.memory_space<vmem>>, %arg6: memref<8x128xf32, #tpu.memory_space<vmem>>, %arg7: memref<8x128xf32, #tpu.memory_space<vmem>>, %arg8: memref<8x512xf32, #tpu.memory_space<vmem>>) attributes {dimension_semantics = [#tpu.dimension_semantics<parallel>], iteration_bounds = array<i64: 1>, scalar_prefetch = 0 : i64, scratch_operands = 0 : i64, tpu.core_type = #tpu.core_type<tc>, window_params = [{pipeline_mode = #tpu.pipeline_mode<synchronous>, transform_indices = @transform_0, window_bounds = array<i64: 8, 512>}, {pipeline_mode = #tpu.pipeline_mode<synchronous>, transform_indices = @transform_1, window_bounds = array<i64: 512, 1024>}, {pipeline_mode = #tpu.pipeline_mode<synchronous>, transform_indices = @transform_2, window_bounds = array<i64: 512, 512>}, {pipeline_mode = #tpu.pipeline_mode<synchronous>, transform_indices = @transform_3, window_bounds = array<i64: 1, 128>}, {pipeline_mode = #tpu.pipeline_mode<synchronous>, transform_indices = @transform_4, window_bounds = array<i64: 1, 128>}, {pipeline_mode = #tpu.pipeline_mode<synchronous>, transform_indices = @transform_5, window_bounds = array<i64: 8, 128>}, {pipeline_mode = #tpu.pipeline_mode<synchronous>, transform_indices = @transform_6, window_bounds = array<i64: 8, 128>}, {transform_indices = @transform_7, window_bounds = array<i64: 8, 512>}]} {
    %c8_i32 = arith.constant 8 : i32
    %0 = arith.muli %arg0, %c8_i32 : i32
    %1 = tpu.assume_multiple %0, 8 : i32
    %c0 = arith.constant 0 : index
    %c0_0 = arith.constant 0 : index
    %2 = vector.load %arg1[%c0, %c0_0] : memref<8x512xf32, #tpu.memory_space<vmem>>, vector<8x512xf32>
    %3 = arith.truncf %2 : vector<8x512xf32> to vector<8x512xbf16>
    %4 = arith.index_cast %1 : i32 to index
    %c0_1 = arith.constant 0 : index
    %5 = vector.load %arg1[%4, %c0_1] : memref<8x512xf32, #tpu.memory_space<vmem>>, vector<8x512xf32>
    %6 = arith.truncf %5 : vector<8x512xf32> to vector<8x512xbf16>
    %c0_2 = arith.constant 0 : index
    %c0_3 = arith.constant 0 : index
    %7 = vector.load %arg2[%c0_2, %c0_3] : memref<512x1024xbf16, #tpu.memory_space<vmem>>, vector<512x512xbf16>
    %cst = arith.constant dense<0.000000e+00> : vector<8x512xf32>
    %8 = tpu.matmul %6, %7, %cst {dimension_numbers = #tpu.dot_dimension_numbers<[1], [0], [0], [1], [0, 0, 1, 1], [], []>} : vector<8x512xbf16>, vector<512x512xbf16>, vector<8x512xf32> -> vector<8x512xf32>
    %c0_4 = arith.constant 0 : index
    %c512 = arith.constant 512 : index
    %9 = vector.load %arg2[%c0_4, %c512] : memref<512x1024xbf16, #tpu.memory_space<vmem>>, vector<512x512xbf16>
    %cst_5 = arith.constant dense<0.000000e+00> : vector<8x512xf32>
    %10 = tpu.matmul %3, %9, %cst_5 {dimension_numbers = #tpu.dot_dimension_numbers<[1], [0], [0], [1], [0, 0, 1, 1], [], []>} : vector<8x512xbf16>, vector<512x512xbf16>, vector<8x512xf32> -> vector<8x512xf32>
    %c0_6 = arith.constant 0 : index
    %c0_7 = arith.constant 0 : index
    %11 = vector.load %arg4[%c0_6, %c0_7] : memref<1x128xf32, #tpu.memory_space<vmem>>, vector<1x128xf32>
    %c0_8 = arith.constant 0 : index
    %c0_9 = arith.constant 0 : index
    %12 = vector.load %arg5[%c0_8, %c0_9] : memref<1x128xf32, #tpu.memory_space<vmem>>, vector<1x128xf32>
    %c0_10 = arith.constant 0 : index
    %c0_11 = arith.constant 0 : index
    %13 = vector.load %arg6[%c0_10, %c0_11] : memref<8x128xf32, #tpu.memory_space<vmem>>, vector<8x128xf32>
    %c0_12 = arith.constant 0 : index
    %c0_13 = arith.constant 0 : index
    %14 = vector.load %arg7[%c0_12, %c0_13] : memref<8x128xf32, #tpu.memory_space<vmem>>, vector<8x128xf32>
    %15 = arith.index_cast %1 : i32 to index
    %c0_14 = arith.constant 0 : index
    %16 = vector.load %arg6[%15, %c0_14] : memref<8x128xf32, #tpu.memory_space<vmem>>, vector<8x128xf32>
    %17 = arith.index_cast %1 : i32 to index
    %c0_15 = arith.constant 0 : index
    %18 = vector.load %arg7[%17, %c0_15] : memref<8x128xf32, #tpu.memory_space<vmem>>, vector<8x128xf32>
    %19 = tpu.iota {dimensions = array<i32: 0>} : vector<16x8xi32>
    %20 = tpu.iota {dimensions = array<i32: 1>} : vector<16x8xi32>
    %c8_i32_16 = arith.constant 8 : i32
    %c0_i32 = arith.constant 0 : i32
    %21 = arith.cmpi eq, %c8_i32_16, %c0_i32 : i32
    %c1_i32 = arith.constant 1 : i32
    %22 = arith.select %21, %c1_i32, %c8_i32_16 : i32
    %23 = vector.broadcast %22 : i32 to vector<16x8xi32>
    %24 = arith.remsi %19, %23 : vector<16x8xi32>
    %c0_i32_17 = arith.constant 0 : i32
    %25 = vector.broadcast %c0_i32_17 : i32 to vector<16x8xi32>
    %26 = arith.cmpi ne, %24, %25 : vector<16x8xi32>
    %c0_i32_18 = arith.constant 0 : i32
    %27 = vector.broadcast %c0_i32_18 : i32 to vector<16x8xi32>
    %28 = arith.cmpi slt, %24, %27 : vector<16x8xi32>
    %c0_i32_19 = arith.constant 0 : i32
    %29 = arith.cmpi slt, %22, %c0_i32_19 : i32
    %30 = vector.broadcast %29 : i1 to vector<16x8xi1>
    %31 = vector.broadcast %30 : vector<16x8xi1> to vector<16x8xi1>
    %32 = arith.xori %28, %31 : vector<16x8xi1>
    %33 = arith.andi %32, %26 : vector<16x8xi1>
    %34 = vector.broadcast %22 : i32 to vector<16x8xi32>
    %35 = arith.addi %24, %34 : vector<16x8xi32>
    %36 = arith.select %33, %35, %24 : vector<16x8xi1>, vector<16x8xi32>
    %37 = vector.broadcast %1 : i32 to vector<16x8xi32>
    %38 = arith.addi %37, %36 : vector<16x8xi32>
    %39 = arith.cmpi sle, %20, %38 : vector<16x8xi32>
    %cst_20 = arith.constant 0.000000e+00 : f32
    %40 = vector.broadcast %cst_20 : f32 to vector<8x512xf32>
    %41 = vector.extract_strided_slice %10 {offsets = [0, 0], sizes = [8, 128], strides = [1, 1]} : vector<8x512xf32> to vector<8x128xf32>
    %42 = arith.mulf %41, %41 : vector<8x128xf32>
    %cst_21 = arith.constant dense<0.000000e+00> : vector<8xf32>
    %43 = vector.multi_reduction <add>, %42, %cst_21 [1] : vector<8x128xf32> to vector<8xf32>
    %44 = vector.shape_cast %43 : vector<8xf32> to vector<8x1xf32>
    %cst_22 = arith.constant 1.280000e+02 : f32
    %45 = vector.broadcast %cst_22 : f32 to vector<8x1xf32>
    %46 = arith.divf %44, %45 : vector<8x1xf32>
    %cst_23 = arith.constant 9.99999997E-7 : f32
    %47 = vector.broadcast %cst_23 : f32 to vector<8x1xf32>
    %48 = arith.addf %46, %47 : vector<8x1xf32>
    %49 = math.rsqrt %48 : vector<8x1xf32>
    %50 = vector.broadcast %49 : vector<8x1xf32> to vector<8x128xf32>
    %51 = arith.mulf %41, %50 : vector<8x128xf32>
    %52 = vector.broadcast %12 : vector<1x128xf32> to vector<8x128xf32>
    %53 = arith.mulf %51, %52 : vector<8x128xf32>
    %54 = arith.mulf %53, %13 : vector<8x128xf32>
    %c64_i32 = arith.constant 64 : i32
    %55 = tpu.dynamic_rotate %53 by %c64_i32 dim 1 : vector<8x128xf32>, i32 -> vector<8x128xf32>
    %56 = arith.mulf %55, %14 : vector<8x128xf32>
    %57 = arith.addf %54, %56 : vector<8x128xf32>
    %58 = arith.truncf %57 : vector<8x128xf32> to vector<8x128xbf16>
    %59 = vector.extract_strided_slice %10 {offsets = [0, 256], sizes = [8, 128], strides = [1, 1]} : vector<8x512xf32> to vector<8x128xf32>
    %60 = arith.truncf %59 : vector<8x128xf32> to vector<8x128xbf16>
    %61 = vector.extract_strided_slice %8 {offsets = [0, 0], sizes = [8, 128], strides = [1, 1]} : vector<8x512xf32> to vector<8x128xf32>
    %62 = arith.mulf %61, %61 : vector<8x128xf32>
    %cst_24 = arith.constant dense<0.000000e+00> : vector<8xf32>
    %63 = vector.multi_reduction <add>, %62, %cst_24 [1] : vector<8x128xf32> to vector<8xf32>
    %64 = vector.shape_cast %63 : vector<8xf32> to vector<8x1xf32>
    %cst_25 = arith.constant 1.280000e+02 : f32
    %65 = vector.broadcast %cst_25 : f32 to vector<8x1xf32>
    %66 = arith.divf %64, %65 : vector<8x1xf32>
    %cst_26 = arith.constant 9.99999997E-7 : f32
    %67 = vector.broadcast %cst_26 : f32 to vector<8x1xf32>
    %68 = arith.addf %66, %67 : vector<8x1xf32>
    %69 = math.rsqrt %68 : vector<8x1xf32>
    %70 = vector.broadcast %69 : vector<8x1xf32> to vector<8x128xf32>
    %71 = arith.mulf %61, %70 : vector<8x128xf32>
    %72 = vector.broadcast %11 : vector<1x128xf32> to vector<8x128xf32>
    %73 = arith.mulf %71, %72 : vector<8x128xf32>
    %74 = arith.mulf %73, %16 : vector<8x128xf32>
    %c64_i32_27 = arith.constant 64 : i32
    %75 = tpu.dynamic_rotate %73 by %c64_i32_27 dim 1 : vector<8x128xf32>, i32 -> vector<8x128xf32>
    %76 = arith.mulf %75, %18 : vector<8x128xf32>
    %77 = arith.addf %74, %76 : vector<8x128xf32>
    %78 = vector.extract_strided_slice %8 {offsets = [0, 128], sizes = [8, 128], strides = [1, 1]} : vector<8x512xf32> to vector<8x128xf32>
    %79 = arith.mulf %78, %78 : vector<8x128xf32>
    %cst_28 = arith.constant dense<0.000000e+00> : vector<8xf32>
    %80 = vector.multi_reduction <add>, %79, %cst_28 [1] : vector<8x128xf32> to vector<8xf32>
    %81 = vector.shape_cast %80 : vector<8xf32> to vector<8x1xf32>
    %cst_29 = arith.constant 1.280000e+02 : f32
    %82 = vector.broadcast %cst_29 : f32 to vector<8x1xf32>
    %83 = arith.divf %81, %82 : vector<8x1xf32>
    %cst_30 = arith.constant 9.99999997E-7 : f32
    %84 = vector.broadcast %cst_30 : f32 to vector<8x1xf32>
    %85 = arith.addf %83, %84 : vector<8x1xf32>
    %86 = math.rsqrt %85 : vector<8x1xf32>
    %87 = vector.broadcast %86 : vector<8x1xf32> to vector<8x128xf32>
    %88 = arith.mulf %78, %87 : vector<8x128xf32>
    %89 = vector.broadcast %11 : vector<1x128xf32> to vector<8x128xf32>
    %90 = arith.mulf %88, %89 : vector<8x128xf32>
    %91 = arith.mulf %90, %16 : vector<8x128xf32>
    %c64_i32_31 = arith.constant 64 : i32
    %92 = tpu.dynamic_rotate %90 by %c64_i32_31 dim 1 : vector<8x128xf32>, i32 -> vector<8x128xf32>
    %93 = arith.mulf %92, %18 : vector<8x128xf32>
    %94 = arith.addf %91, %93 : vector<8x128xf32>
    %95 = tpu.concatenate %77, %94 in 0 : vector<8x128xf32>, vector<8x128xf32> -> vector<16x128xf32>
    %96 = arith.truncf %95 : vector<16x128xf32> to vector<16x128xbf16>
    %cst_32 = arith.constant dense<0.000000e+00> : vector<16x8xf32>
    %97 = tpu.matmul %96, %58, %cst_32 {dimension_numbers = #tpu.dot_dimension_numbers<[1], [1], [0], [0], [0, 0, 1, 0], [], []>} : vector<16x128xbf16>, vector<8x128xbf16>, vector<16x8xf32> -> vector<16x8xf32>
    %cst_33 = arith.constant -1.000000e+30 : f32
    %98 = vector.broadcast %cst_33 : f32 to vector<16x8xf32>
    %99 = arith.select %39, %97, %98 : vector<16x8xi1>, vector<16x8xf32>
    %cst_34 = arith.constant dense<0xFF800000> : vector<16xf32>
    %100 = vector.multi_reduction <maximumf>, %99, %cst_34 [1] : vector<16x8xf32> to vector<16xf32>
    %101 = vector.shape_cast %100 : vector<16xf32> to vector<16x1xf32>
    %102 = vector.broadcast %101 : vector<16x1xf32> to vector<16x8xf32>
    %103 = arith.subf %99, %102 : vector<16x8xf32>
    %104 = math.exp %103 : vector<16x8xf32>
    %cst_35 = arith.constant dense<0.000000e+00> : vector<16xf32>
    %105 = vector.multi_reduction <add>, %104, %cst_35 [1] : vector<16x8xf32> to vector<16xf32>
    %106 = vector.shape_cast %105 : vector<16xf32> to vector<16x1xf32>
    %107 = tpu.reciprocal %106 {approx = true} : vector<16x1xf32> -> vector<16x1xf32>
    %108 = vector.broadcast %107 : vector<16x1xf32> to vector<16x8xf32>
    %109 = arith.mulf %104, %108 : vector<16x8xf32>
    %110 = arith.truncf %109 : vector<16x8xf32> to vector<16x8xbf16>
    %cst_36 = arith.constant dense<0.000000e+00> : vector<16x128xf32>
    %111 = tpu.matmul %110, %60, %cst_36 {dimension_numbers = #tpu.dot_dimension_numbers<[1], [0], [0], [1], [0, 0, 1, 1], [], []>} : vector<16x8xbf16>, vector<8x128xbf16>, vector<16x128xf32> -> vector<16x128xf32>
    %112 = vector.extract_strided_slice %111 {offsets = [0, 0], sizes = [8, 128], strides = [1, 1]} : vector<16x128xf32> to vector<8x128xf32>
    %113 = arith.truncf %112 : vector<8x128xf32> to vector<8x128xbf16>
    %c0_37 = arith.constant 0 : index
    %c0_38 = arith.constant 0 : index
    %114 = vector.load %arg3[%c0_37, %c0_38] : memref<512x512xbf16, #tpu.memory_space<vmem>>, vector<128x512xbf16>
    %cst_39 = arith.constant dense<0.000000e+00> : vector<8x512xf32>
    %115 = tpu.matmul %113, %114, %cst_39 {dimension_numbers = #tpu.dot_dimension_numbers<[1], [0], [0], [1], [0, 0, 1, 1], [], []>} : vector<8x128xbf16>, vector<128x512xbf16>, vector<8x512xf32> -> vector<8x512xf32>
    %116 = arith.addf %40, %115 : vector<8x512xf32>
    %117 = vector.extract_strided_slice %111 {offsets = [8, 0], sizes = [8, 128], strides = [1, 1]} : vector<16x128xf32> to vector<8x128xf32>
    %118 = arith.truncf %117 : vector<8x128xf32> to vector<8x128xbf16>
    %c128 = arith.constant 128 : index
    %c0_40 = arith.constant 0 : index
    %119 = vector.load %arg3[%c128, %c0_40] : memref<512x512xbf16, #tpu.memory_space<vmem>>, vector<128x512xbf16>
    %cst_41 = arith.constant dense<0.000000e+00> : vector<8x512xf32>
    %120 = tpu.matmul %118, %119, %cst_41 {dimension_numbers = #tpu.dot_dimension_numbers<[1], [0], [0], [1], [0, 0, 1, 1], [], []>} : vector<8x128xbf16>, vector<128x512xbf16>, vector<8x512xf32> -> vector<8x512xf32>
    %121 = arith.addf %116, %120 : vector<8x512xf32>
    %122 = vector.extract_strided_slice %10 {offsets = [0, 128], sizes = [8, 128], strides = [1, 1]} : vector<8x512xf32> to vector<8x128xf32>
    %123 = arith.mulf %122, %122 : vector<8x128xf32>
    %cst_42 = arith.constant dense<0.000000e+00> : vector<8xf32>
    %124 = vector.multi_reduction <add>, %123, %cst_42 [1] : vector<8x128xf32> to vector<8xf32>
    %125 = vector.shape_cast %124 : vector<8xf32> to vector<8x1xf32>
    %cst_43 = arith.constant 1.280000e+02 : f32
    %126 = vector.broadcast %cst_43 : f32 to vector<8x1xf32>
    %127 = arith.divf %125, %126 : vector<8x1xf32>
    %cst_44 = arith.constant 9.99999997E-7 : f32
    %128 = vector.broadcast %cst_44 : f32 to vector<8x1xf32>
    %129 = arith.addf %127, %128 : vector<8x1xf32>
    %130 = math.rsqrt %129 : vector<8x1xf32>
    %131 = vector.broadcast %130 : vector<8x1xf32> to vector<8x128xf32>
    %132 = arith.mulf %122, %131 : vector<8x128xf32>
    %133 = vector.broadcast %12 : vector<1x128xf32> to vector<8x128xf32>
    %134 = arith.mulf %132, %133 : vector<8x128xf32>
    %135 = arith.mulf %134, %13 : vector<8x128xf32>
    %c64_i32_45 = arith.constant 64 : i32
    %136 = tpu.dynamic_rotate %134 by %c64_i32_45 dim 1 : vector<8x128xf32>, i32 -> vector<8x128xf32>
    %137 = arith.mulf %136, %14 : vector<8x128xf32>
    %138 = arith.addf %135, %137 : vector<8x128xf32>
    %139 = arith.truncf %138 : vector<8x128xf32> to vector<8x128xbf16>
    %140 = vector.extract_strided_slice %10 {offsets = [0, 384], sizes = [8, 128], strides = [1, 1]} : vector<8x512xf32> to vector<8x128xf32>
    %141 = arith.truncf %140 : vector<8x128xf32> to vector<8x128xbf16>
    %142 = vector.extract_strided_slice %8 {offsets = [0, 256], sizes = [8, 128], strides = [1, 1]} : vector<8x512xf32> to vector<8x128xf32>
    %143 = arith.mulf %142, %142 : vector<8x128xf32>
    %cst_46 = arith.constant dense<0.000000e+00> : vector<8xf32>
    %144 = vector.multi_reduction <add>, %143, %cst_46 [1] : vector<8x128xf32> to vector<8xf32>
    %145 = vector.shape_cast %144 : vector<8xf32> to vector<8x1xf32>
    %cst_47 = arith.constant 1.280000e+02 : f32
    %146 = vector.broadcast %cst_47 : f32 to vector<8x1xf32>
    %147 = arith.divf %145, %146 : vector<8x1xf32>
    %cst_48 = arith.constant 9.99999997E-7 : f32
    %148 = vector.broadcast %cst_48 : f32 to vector<8x1xf32>
    %149 = arith.addf %147, %148 : vector<8x1xf32>
    %150 = math.rsqrt %149 : vector<8x1xf32>
    %151 = vector.broadcast %150 : vector<8x1xf32> to vector<8x128xf32>
    %152 = arith.mulf %142, %151 : vector<8x128xf32>
    %153 = vector.broadcast %11 : vector<1x128xf32> to vector<8x128xf32>
    %154 = arith.mulf %152, %153 : vector<8x128xf32>
    %155 = arith.mulf %154, %16 : vector<8x128xf32>
    %c64_i32_49 = arith.constant 64 : i32
    %156 = tpu.dynamic_rotate %154 by %c64_i32_49 dim 1 : vector<8x128xf32>, i32 -> vector<8x128xf32>
    %157 = arith.mulf %156, %18 : vector<8x128xf32>
    %158 = arith.addf %155, %157 : vector<8x128xf32>
    %159 = vector.extract_strided_slice %8 {offsets = [0, 384], sizes = [8, 128], strides = [1, 1]} : vector<8x512xf32> to vector<8x128xf32>
    %160 = arith.mulf %159, %159 : vector<8x128xf32>
    %cst_50 = arith.constant dense<0.000000e+00> : vector<8xf32>
    %161 = vector.multi_reduction <add>, %160, %cst_50 [1] : vector<8x128xf32> to vector<8xf32>
    %162 = vector.shape_cast %161 : vector<8xf32> to vector<8x1xf32>
    %cst_51 = arith.constant 1.280000e+02 : f32
    %163 = vector.broadcast %cst_51 : f32 to vector<8x1xf32>
    %164 = arith.divf %162, %163 : vector<8x1xf32>
    %cst_52 = arith.constant 9.99999997E-7 : f32
    %165 = vector.broadcast %cst_52 : f32 to vector<8x1xf32>
    %166 = arith.addf %164, %165 : vector<8x1xf32>
    %167 = math.rsqrt %166 : vector<8x1xf32>
    %168 = vector.broadcast %167 : vector<8x1xf32> to vector<8x128xf32>
    %169 = arith.mulf %159, %168 : vector<8x128xf32>
    %170 = vector.broadcast %11 : vector<1x128xf32> to vector<8x128xf32>
    %171 = arith.mulf %169, %170 : vector<8x128xf32>
    %172 = arith.mulf %171, %16 : vector<8x128xf32>
    %c64_i32_53 = arith.constant 64 : i32
    %173 = tpu.dynamic_rotate %171 by %c64_i32_53 dim 1 : vector<8x128xf32>, i32 -> vector<8x128xf32>
    %174 = arith.mulf %173, %18 : vector<8x128xf32>
    %175 = arith.addf %172, %174 : vector<8x128xf32>
    %176 = tpu.concatenate %158, %175 in 0 : vector<8x128xf32>, vector<8x128xf32> -> vector<16x128xf32>
    %177 = arith.truncf %176 : vector<16x128xf32> to vector<16x128xbf16>
    %cst_54 = arith.constant dense<0.000000e+00> : vector<16x8xf32>
    %178 = tpu.matmul %177, %139, %cst_54 {dimension_numbers = #tpu.dot_dimension_numbers<[1], [1], [0], [0], [0, 0, 1, 0], [], []>} : vector<16x128xbf16>, vector<8x128xbf16>, vector<16x8xf32> -> vector<16x8xf32>
    %cst_55 = arith.constant -1.000000e+30 : f32
    %179 = vector.broadcast %cst_55 : f32 to vector<16x8xf32>
    %180 = arith.select %39, %178, %179 : vector<16x8xi1>, vector<16x8xf32>
    %cst_56 = arith.constant dense<0xFF800000> : vector<16xf32>
    %181 = vector.multi_reduction <maximumf>, %180, %cst_56 [1] : vector<16x8xf32> to vector<16xf32>
    %182 = vector.shape_cast %181 : vector<16xf32> to vector<16x1xf32>
    %183 = vector.broadcast %182 : vector<16x1xf32> to vector<16x8xf32>
    %184 = arith.subf %180, %183 : vector<16x8xf32>
    %185 = math.exp %184 : vector<16x8xf32>
    %cst_57 = arith.constant dense<0.000000e+00> : vector<16xf32>
    %186 = vector.multi_reduction <add>, %185, %cst_57 [1] : vector<16x8xf32> to vector<16xf32>
    %187 = vector.shape_cast %186 : vector<16xf32> to vector<16x1xf32>
    %188 = tpu.reciprocal %187 {approx = true} : vector<16x1xf32> -> vector<16x1xf32>
    %189 = vector.broadcast %188 : vector<16x1xf32> to vector<16x8xf32>
    %190 = arith.mulf %185, %189 : vector<16x8xf32>
    %191 = arith.truncf %190 : vector<16x8xf32> to vector<16x8xbf16>
    %cst_58 = arith.constant dense<0.000000e+00> : vector<16x128xf32>
    %192 = tpu.matmul %191, %141, %cst_58 {dimension_numbers = #tpu.dot_dimension_numbers<[1], [0], [0], [1], [0, 0, 1, 1], [], []>} : vector<16x8xbf16>, vector<8x128xbf16>, vector<16x128xf32> -> vector<16x128xf32>
    %193 = vector.extract_strided_slice %192 {offsets = [0, 0], sizes = [8, 128], strides = [1, 1]} : vector<16x128xf32> to vector<8x128xf32>
    %194 = arith.truncf %193 : vector<8x128xf32> to vector<8x128xbf16>
    %c256 = arith.constant 256 : index
    %c0_59 = arith.constant 0 : index
    %195 = vector.load %arg3[%c256, %c0_59] : memref<512x512xbf16, #tpu.memory_space<vmem>>, vector<128x512xbf16>
    %cst_60 = arith.constant dense<0.000000e+00> : vector<8x512xf32>
    %196 = tpu.matmul %194, %195, %cst_60 {dimension_numbers = #tpu.dot_dimension_numbers<[1], [0], [0], [1], [0, 0, 1, 1], [], []>} : vector<8x128xbf16>, vector<128x512xbf16>, vector<8x512xf32> -> vector<8x512xf32>
    %197 = arith.addf %121, %196 : vector<8x512xf32>
    %198 = vector.extract_strided_slice %192 {offsets = [8, 0], sizes = [8, 128], strides = [1, 1]} : vector<16x128xf32> to vector<8x128xf32>
    %199 = arith.truncf %198 : vector<8x128xf32> to vector<8x128xbf16>
    %c384 = arith.constant 384 : index
    %c0_61 = arith.constant 0 : index
    %200 = vector.load %arg3[%c384, %c0_61] : memref<512x512xbf16, #tpu.memory_space<vmem>>, vector<128x512xbf16>
    %cst_62 = arith.constant dense<0.000000e+00> : vector<8x512xf32>
    %201 = tpu.matmul %199, %200, %cst_62 {dimension_numbers = #tpu.dot_dimension_numbers<[1], [0], [0], [1], [0, 0, 1, 1], [], []>} : vector<8x128xbf16>, vector<128x512xbf16>, vector<8x512xf32> -> vector<8x512xf32>
    %202 = arith.addf %197, %201 : vector<8x512xf32>
    %c0_63 = arith.constant 0 : index
    %c0_64 = arith.constant 0 : index
    %203 = vector.load %arg8[%c0_63, %c0_64] : memref<8x512xf32, #tpu.memory_space<vmem>>, vector<8x512xf32>
    tpu.vector_store %arg8[%c0_63, %c0_64], %202 {strides = array<i32>} : memref<8x512xf32, #tpu.memory_space<vmem>>, vector<8x512xf32>,
    return
  }
  func.func @transform_0(%arg0: i32) -> (i32, i32) {
    %c0_i32 = arith.constant 0 : i32
    %c0_i32_0 = arith.constant 0 : i32
    %c0_i32_1 = arith.constant 0 : i32
    return %c0_i32, %c0_i32_0 : i32, i32
  }
  func.func @transform_1(%arg0: i32) -> (i32, i32) {
    %c0_i32 = arith.constant 0 : i32
    %c0_i32_0 = arith.constant 0 : i32
    %c0_i32_1 = arith.constant 0 : i32
    return %c0_i32, %c0_i32_0 : i32, i32
  }
  func.func @transform_2(%arg0: i32) -> (i32, i32) {
    %c0_i32 = arith.constant 0 : i32
    %c0_i32_0 = arith.constant 0 : i32
    %c0_i32_1 = arith.constant 0 : i32
    return %c0_i32, %c0_i32_0 : i32, i32
  }
  func.func @transform_3(%arg0: i32) -> (i32, i32) {
    %c0_i32 = arith.constant 0 : i32
    %c0_i32_0 = arith.constant 0 : i32
    %c0_i32_1 = arith.constant 0 : i32
    return %c0_i32, %c0_i32_0 : i32, i32
  }
  func.func @transform_4(%arg0: i32) -> (i32, i32) {
    %c0_i32 = arith.constant 0 : i32
    %c0_i32_0 = arith.constant 0 : i32
    %c0_i32_1 = arith.constant 0 : i32
    return %c0_i32, %c0_i32_0 : i32, i32
  }
  func.func @transform_5(%arg0: i32) -> (i32, i32) {
    %c0_i32 = arith.constant 0 : i32
    %c0_i32_0 = arith.constant 0 : i32
    %c0_i32_1 = arith.constant 0 : i32
    return %c0_i32, %c0_i32_0 : i32, i32
  }
  func.func @transform_6(%arg0: i32) -> (i32, i32) {
    %c0_i32 = arith.constant 0 : i32
    %c0_i32_0 = arith.constant 0 : i32
    %c0_i32_1 = arith.constant 0 : i32
    return %c0_i32, %c0_i32_0 : i32, i32
  }
  func.func @transform_7(%arg0: i32) -> (i32, i32) {
    %c0_i32 = arith.constant 0 : i32
    %c0_i32_0 = arith.constant 0 : i32
    return %arg0, %c0_i32 : i32, i32
  }
}

</mosaic_0001>

<llo_original>
// kernel: tpu_custom_call.1
$region0: #{tpu_custom_call.1}
  #allocation0 [shape = 'u32[]', space=smem, size = 0x4, offset = 0x4, fixed_abs, tag = 'smem constant byte address 0x4 - core index']
  #allocation1 [shape = 'u32[144,128]{1,0:T(1,128)}', space=vmem, size = 0x12000, scoped, tag = 'internal scratch']
  %s0 = inlined_call_operand.hbm [shape: f32[8,512], index: 0, kind: input, shape index: {}]
  %s1 = inlined_call_operand.hbm [shape: bf16[512,1024], index: 1, kind: input, shape index: {}]
  %s2 = inlined_call_operand.hbm [shape: bf16[512,512], index: 2, kind: input, shape index: {}]
  %s3 = inlined_call_operand.vmem [shape: f32[1,128], index: 3, kind: input, shape index: {}]
  %s4 = inlined_call_operand.vmem [shape: f32[1,128], index: 4, kind: input, shape index: {}]
  %s5 = inlined_call_operand.vmem [shape: f32[8,128], index: 5, kind: input, shape index: {}]
  %s6 = inlined_call_operand.vmem [shape: f32[8,128], index: 6, kind: input, shape index: {}]
  %s7 = inlined_call_operand.hbm [shape: f32[8,512], index: 7, kind: output, shape index: {}]
  %s8 = sld [smem:[#allocation0]]
  $region50: #{tpu_custom_call.1} parent=0
    _
  %s10 = ssub.s32 1, %s8
  %s11 = scalar_select 0, %s10, %s8
  $region1: #{tpu_custom_call.1} parent=0
    #allocation2 [shape = 'u8[16384]{0}', space=vmem, size = 0x4000, scoped, tag = 'input window, operand 0, single buffered']
    #allocation3 [shape = 's32[1]{0}', space=sflag, size = 0x4, scoped, tag = 'scoped memory for tpu_custom_call.1']
    #allocation4 [shape = 's32[1]{0}', space=sflag, size = 0x4, scoped, tag = 'scoped memory for tpu_custom_call.1']
    #allocation5 [shape = 'u8[1048576]{0}', space=vmem, size = 0x100000, scoped, tag = 'input window, operand 1, single buffered']
    #allocation6 [shape = 's32[1]{0}', space=sflag, size = 0x4, scoped, tag = 'scoped memory for tpu_custom_call.1']
    #allocation7 [shape = 'u8[524288]{0}', space=vmem, size = 0x80000, scoped, tag = 'input window, operand 2, single buffered']
    #allocation8 [shape = 'u8[16384]{0}', space=vmem, size = 0x4000, scoped, tag = 'output window, operand 0, single buffered']
    %12 = vsyncpa [#allocation3], 0
    %13 = vsyncpa [#allocation6], 0
    %14 = vsyncpa [#allocation4], 0
    // Predicated region
    $region2: #{tpu_custom_call.1} parent=1 // pred_check
      _
    $region3: #{tpu_custom_call.1} parent=1 // pred_check_branch
      %16 = sbr.rel (0) target = $region5
    $region4: #{tpu_custom_call.1} parent=1 // pred_region
      %s18 = ssub.s32 512, 512
      %19 = vsyncadd [#allocation3], %s18
      %s21 = sshll.u32 [#allocation2], 4
      %s22 = int_to_ptr.vmem [resolvable:$true] %s21
      %24 = dma.hbm_to_vmem [thread:$0]  %s0, 512, %s22, [#allocation3]
    $region5: #{tpu_custom_call.1} parent=1 // pred_fallthru
      _
    // Predicated region
    $region6: #{tpu_custom_call.1} parent=1 // pred_check
      _
    $region7: #{tpu_custom_call.1} parent=1 // pred_check_branch
      %26 = sbr.rel (0) target = $region9
    $region8: #{tpu_custom_call.1} parent=1 // pred_region
      %s28 = ssub.s32 32768, 32768
      %29 = vsyncadd [#allocation6], %s28
      %s30 = sshll.u32 [#allocation5], 4
      %s31 = int_to_ptr.vmem [resolvable:$true] %s30
      %36 = dma.hbm_to_vmem [thread:$0]  %s1, 32768, %s31, [#allocation6], 512, 512, 32
    $region9: #{tpu_custom_call.1} parent=1 // pred_fallthru
      _
    // Predicated region
    $region10: #{tpu_custom_call.1} parent=1 // pred_check
      _
    $region11: #{tpu_custom_call.1} parent=1 // pred_check_branch
      %38 = sbr.rel (0) target = $region13
    $region12: #{tpu_custom_call.1} parent=1 // pred_region
      %s40 = ssub.s32 16384, 16384
      %41 = vsyncadd [#allocation6], %s40
      %s42 = sshll.u32 [#allocation7], 4
      %s43 = int_to_ptr.vmem [resolvable:$true] %s42
      %48 = dma.hbm_to_vmem [thread:$0]  %s2, 16384, %s43, [#allocation6], 256, 256, 16
    $region13: #{tpu_custom_call.1} parent=1 // pred_fallthru
      _
    // Predicated region
    $region14: #{tpu_custom_call.1} parent=1 // pred_check
      _
    $region15: #{tpu_custom_call.1} parent=1 // pred_check_branch
      %50 = sbr.rel (0) target = $region17
    $region16: #{tpu_custom_call.1} parent=1 // pred_region
      _
    $region17: #{tpu_custom_call.1} parent=1 // pred_fallthru
      _
    // Predicated region
    $region18: #{tpu_custom_call.1} parent=1 // pred_check
      _
    $region19: #{tpu_custom_call.1} parent=1 // pred_check_branch
      %52 = sbr.rel (0) target = $region21
    $region20: #{tpu_custom_call.1} parent=1 // pred_region
      _
    $region21: #{tpu_custom_call.1} parent=1 // pred_fallthru
      _
    // Predicated region
    $region22: #{tpu_custom_call.1} parent=1 // pred_check
      _
    $region23: #{tpu_custom_call.1} parent=1 // pred_check_branch
      %54 = sbr.rel (0) target = $region25
    $region24: #{tpu_custom_call.1} parent=1 // pred_region
      _
    $region25: #{tpu_custom_call.1} parent=1 // pred_fallthru
      _
    // Predicated region
    $region26: #{tpu_custom_call.1} parent=1 // pred_check
      _
    $region27: #{tpu_custom_call.1} parent=1 // pred_check_branch
      %56 = sbr.rel (0) target = $region29
    $region28: #{tpu_custom_call.1} parent=1 // pred_region
      _
    $region29: #{tpu_custom_call.1} parent=1 // pred_fallthru
      _
    // Predicated region
    $region30: #{tpu_custom_call.1} parent=1 // pred_check
      _
    $region31: #{tpu_custom_call.1} parent=1 // pred_check_branch
      %58 = sbr.rel (0) target = $region33
    $region32: #{tpu_custom_call.1} parent=1 // pred_region
      %59 = dma.done [#allocation3], 512
    $region33: #{tpu_custom_call.1} parent=1 // pred_fallthru
      _
    // Predicated region
    $region34: #{tpu_custom_call.1} parent=1 // pred_check
      _
    $region35: #{tpu_custom_call.1} parent=1 // pred_check_branch
      %61 = sbr.rel (0) target = $region37
    $region36: #{tpu_custom_call.1} parent=1 // pred_region
      %62 = dma.done [#allocation6], 32768
    $region37: #{tpu_custom_call.1} parent=1 // pred_fallthru
      _
    // Predicated region
    $region38: #{tpu_custom_call.1} parent=1 // pred_check
      _
    $region39: #{tpu_custom_call.1} parent=1 // pred_check_branch
      %64 = sbr.rel (0) target = $region41
    $region40: #{tpu_custom_call.1} parent=1 // pred_region
      %65 = dma.done [#allocation6], 16384
    $region41: #{tpu_custom_call.1} parent=1 // pred_fallthru
      _
    %s67 = smul.u32 0, 8
    %v68 = vld [vmem:[#allocation2] sm:$0xff]
    %v69 = vld [vmem:[#allocation2 + $0x8] sm:$0xff]
    %v70 = vld [vmem:[#allocation2 + $0x10] sm:$0xff]
    %v71 = vld [vmem:[#allocation2 + $0x18] sm:$0xff]
    %v72 = vpack.c.bf16 %v68, %v68
    %v73 = vpack.c.bf16 %v69, %v69
    %v74 = vpack.c.bf16 %v70, %v70
    %v75 = vpack.c.bf16 %v71, %v71
    %s76 = sshra.s32 %s67, 3
    %s77 = sand.u32 %s67, 7
    %s78 = smul.u32 %s76, 4
    %s79 = smul.addr %s78, 8
    %s80 = scalar_lea.vmem [#allocation2], %s79
    %v81 = vld [vmem:[%s80] sm:$0xff]
    %v82 = vld [vmem:[%s80 + $0x8] sm:$0xff]
    %v83 = vld [vmem:[%s80 + $0x10] sm:$0xff]
    %v84 = vld [vmem:[%s80 + $0x18] sm:$0xff]
    %v85 = vpack.c.bf16 %v81, %v81
    %v86 = vpack.c.bf16 %v82, %v82
    %v87 = vpack.c.bf16 %v83, %v83
    %v88 = vpack.c.bf16 %v84, %v84
    %v89 = vld [vmem:[#allocation5] sm:$0xff]
    %v90 = vld [vmem:[#allocation5 + $0x8] sm:$0xff]
    %v91 = vld [vmem:[#allocation5 + $0x20] sm:$0xff]
    %v92 = vld [vmem:[#allocation5 + $0x28] sm:$0xff]
    %v93 = vld [vmem:[#allocation5 + $0x40] sm:$0xff]
    %v94 = vld [vmem:[#allocation5 + $0x48] sm:$0xff]
    %v95 = vld [vmem:[#allocation5 + $0x60] sm:$0xff]
    %v96 = vld [vmem:[#allocation5 + $0x68] sm:$0xff]
    %v97 = vld [vmem:[#allocation5 + $0x80] sm:$0xff]
    %v98 = vld [vmem:[#allocation5 + $0x88] sm:$0xff]
    %v99 = vld [vmem:[#allocation5 + $0xa0] sm:$0xff]
    %v100 = vld [vmem:[#allocation5 + $0xa8] sm:$0xff]
    %v101 = vld [vmem:[#allocation5 + $0xc0] sm:$0xff]
    %v102 = vld [vmem:[#allocation5 + $0xc8] sm:$0xff]
    %v103 = vld [vmem:[#allocation5 + $0xe0] sm:$0xff]
    %v104 = vld [vmem:[#allocation5 + $0xe8] sm:$0xff]
    %v105 = vld [vmem:[#allocation5 + $0x100] sm:$0xff]
    %v106 = vld [vmem:[#allocation5 + $0x108] sm:$0xff]
    %v107 = vld [vmem:[#allocation5 + $0x120] sm:$0xff]
    %v108 = vld [vmem:[#allocation5 + $0x128] sm:$0xff]
    %v109 = vld [vmem:[#allocation5 + $0x140] sm:$0xff]
    %v110 = vld [vmem:[#allocation5 + $0x148] sm:$0xff]
    %v111 = vld [vmem:[#allocation5 + $0x160] sm:$0xff]
    %v112 = vld [vmem:[#allocation5 + $0x168] sm:$0xff]
    %v113 = vld [vmem:[#allocation5 + $0x180] sm:$0xff]
    %v114 = vld [vmem:[#allocation5 + $0x188] sm:$0xff]
    %v115 = vld [vmem:[#allocation5 + $0x1a0] sm:$0xff]
    %v116 = vld [vmem:[#allocation5 + $0x1a8] sm:$0xff]
    %v117 = vld [vmem:[#allocation5 + $0x1c0] sm:$0xff]
    %v118 = vld [vmem:[#allocation5 + $0x1c8] sm:$0xff]
    %v119 = vld [vmem:[#allocation5 + $0x1e0] sm:$0xff]
    %v120 = vld [vmem:[#allocation5 + $0x1e8] sm:$0xff]
    %v121 = vld [vmem:[#allocation5 + $0x200] sm:$0xff]
    %v122 = vld [vmem:[#allocation5 + $0x208] sm:$0xff]
    %v123 = vld [vmem:[#allocation5 + $0x220] sm:$0xff]
    %v124 = vld [vmem:[#allocation5 + $0x228] sm:$0xff]
    %v125 = vld [vmem:[#allocation5 + $0x240] sm:$0xff]
    %v126 = vld [vmem:[#allocation5 + $0x248] sm:$0xff]
    %v127 = vld [vmem:[#allocation5 + $0x260] sm:$0xff]
    %v128 = vld [vmem:[#allocation5 + $0x268] sm:$0xff]
    %v129 = vld [vmem:[#allocation5 + $0x280] sm:$0xff]
    %v130 = vld [vmem:[#allocation5 + $0x288] sm:$0xff]
    %v131 = vld [vmem:[#allocation5 + $0x2a0] sm:$0xff]
    %v132 = vld [vmem:[#allocation5 + $0x2a8] sm:$0xff]
    %v133 = vld [vmem:[#allocation5 + $0x2c0] sm:$0xff]
    %v134 = vld [vmem:[#allocation5 + $0x2c8] sm:$0xff]
    %v135 = vld [vmem:[#allocation5 + $0x2e0] sm:$0xff]
    %v136 = vld [vmem:[#allocation5 + $0x2e8] sm:$0xff]
    %v137 = vld [vmem:[#allocation5 + $0x300] sm:$0xff]
    %v138 = vld [vmem:[#allocation5 + $0x308] sm:$0xff]
    %v139 = vld [vmem:[#allocation5 + $0x320] sm:$0xff]
    %v140 = vld [vmem:[#allocation5 + $0x328] sm:$0xff]
    %v141 = vld [vmem:[#allocation5 + $0x340] sm:$0xff]
    %v142 = vld [vmem:[#allocation5 + $0x348] sm:$0xff]
    %v143 = vld [vmem:[#allocation5 + $0x360] sm:$0xff]
    %v144 = vld [vmem:[#allocation5 + $0x368] sm:$0xff]
    %v145 = vld [vmem:[#allocation5 + $0x380] sm:$0xff]
    %v146 = vld [vmem:[#allocation5 + $0x388] sm:$0xff]
    %v147 = vld [vmem:[#allocation5 + $0x3a0] sm:$0xff]
    %v148 = vld [vmem:[#allocation5 + $0x3a8] sm:$0xff]
    %v149 = vld [vmem:[#allocation5 + $0x3c0] sm:$0xff]
    %v150 = vld [vmem:[#allocation5 + $0x3c8] sm:$0xff]
    %v151 = vld [vmem:[#allocation5 + $0x3e0] sm:$0xff]
    %v152 = vld [vmem:[#allocation5 + $0x3e8] sm:$0xff]
    %v153 = vld [vmem:[#allocation5 + $0x400] sm:$0xff]
    %v154 = vld [vmem:[#allocation5 + $0x408] sm:$0xff]
    %v155 = vld [vmem:[#allocation5 + $0x420] sm:$0xff]
    %v156 = vld [vmem:[#allocation5 + $0x428] sm:$0xff]
    %v157 = vld [vmem:[#allocation5 + $0x440] sm:$0xff]
    %v158 = vld [vmem:[#allocation5 + $0x448] sm:$0xff]
    %v159 = vld [vmem:[#allocation5 + $0x460] sm:$0xff]
    %v160 = vld [vmem:[#allocation5 + $0x468] sm:$0xff]
    %v161 = vld [vmem:[#allocation5 + $0x480] sm:$0xff]
    %v162 = vld [vmem:[#allocation5 + $0x488] sm:$0xff]
    %v163 = vld [vmem:[#allocation5 + $0x4a0] sm:$0xff]
    %v164 = vld [vmem:[#allocation5 + $0x4a8] sm:$0xff]
    %v165 = vld [vmem:[#allocation5 + $0x4c0] sm:$0xff]
    %v166 = vld [vmem:[#allocation5 + $0x4c8] sm:$0xff]
    %v167 = vld [vmem:[#allocation5 + $0x4e0] sm:$0xff]
    %v168 = vld [vmem:[#allocation5 + $0x4e8] sm:$0xff]
    %v169 = vld [vmem:[#allocation5 + $0x500] sm:$0xff]
    %v170 = vld [vmem:[#allocation5 + $0x508] sm:$0xff]
    %v171 = vld [vmem:[#allocation5 + $0x520] sm:$0xff]
    %v172 = vld [vmem:[#allocation5 + $0x528] sm:$0xff]
    %v173 = vld [vmem:[#allocation5 + $0x540] sm:$0xff]
    %v174 = vld [vmem:[#allocation5 + $0x548] sm:$0xff]
    %v175 = vld [vmem:[#allocation5 + $0x560] sm:$0xff]
    %v176 = vld [vmem:[#allocation5 + $0x568] sm:$0xff]
    %v177 = vld [vmem:[#allocation5 + $0x580] sm:$0xff]
    %v178 = vld [vmem:[#allocation5 + $0x588] sm:$0xff]
    %v179 = vld [vmem:[#allocation5 + $0x5a0] sm:$0xff]
    %v180 = vld [vmem:[#allocation5 + $0x5a8] sm:$0xff]
    %v181 = vld [vmem:[#allocation5 + $0x5c0] sm:$0xff]
    %v182 = vld [vmem:[#allocation5 + $0x5c8] sm:$0xff]
    %v183 = vld [vmem:[#allocation5 + $0x5e0] sm:$0xff]
    %v184 = vld [vmem:[#allocation5 + $0x5e8] sm:$0xff]
    %v185 = vld [vmem:[#allocation5 + $0x600] sm:$0xff]
    %v186 = vld [vmem:[#allocation5 + $0x608] sm:$0xff]
    %v187 = vld [vmem:[#allocation5 + $0x620] sm:$0xff]
    %v188 = vld [vmem:[#allocation5 + $0x628] sm:$0xff]
    %v189 = vld [vmem:[#allocation5 + $0x640] sm:$0xff]
    %v190 = vld [vmem:[#allocation5 + $0x648] sm:$0xff]
    %v191 = vld [vmem:[#allocation5 + $0x660] sm:$0xff]
    %v192 = vld [vmem:[#allocation5 + $0x668] sm:$0xff]
    %v193 = vld [vmem:[#allocation5 + $0x680] sm:$0xff]
    %v194 = vld [vmem:[#allocation5 + $0x688] sm:$0xff]
    %v195 = vld [vmem:[#allocation5 + $0x6a0] sm:$0xff]
    %v196 = vld [vmem:[#allocation5 + $0x6a8] sm:$0xff]
    %v197 = vld [vmem:[#allocation5 + $0x6c0] sm:$0xff]
    %v198 = vld [vmem:[#allocation5 + $0x6c8] sm:$0xff]
    %v199 = vld [vmem:[#allocation5 + $0x6e0] sm:$0xff]
    %v200 = vld [vmem:[#allocation5 + $0x6e8] sm:$0xff]
    %v201 = vld [vmem:[#allocation5 + $0x700] sm:$0xff]
    %v202 = vld [vmem:[#allocation5 + $0x708] sm:$0xff]
    %v203 = vld [vmem:[#allocation5 + $0x720] sm:$0xff]
    %v204 = vld [vmem:[#allocation5 + $0x728] sm:$0xff]
    %v205 = vld [vmem:[#allocation5 + $0x740] sm:$0xff]
    %v206 = vld [vmem:[#allocation5 + $0x748] sm:$0xff]
    %v207 = vld [vmem:[#allocation5 + $0x760] sm:$0xff]
    %v208 = vld [vmem:[#allocation5 + $0x768] sm:$0xff]
    %v209 = vld [vmem:[#allocation5 + $0x780] sm:$0xff]
    %v210 = vld [vmem:[#allocation5 + $0x788] sm:$0xff]
    %v211 = vld [vmem:[#allocation5 + $0x7a0] sm:$0xff]
    %v212 = vld [vmem:[#allocation5 + $0x7a8] sm:$0xff]
    %v213 = vld [vmem:[#allocation5 + $0x7c0] sm:$0xff]
    %v214 = vld [vmem:[#allocation5 + $0x7c8] sm:$0xff]
    %v215 = vld [vmem:[#allocation5 + $0x7e0] sm:$0xff]
    %v216 = vld [vmem:[#allocation5 + $0x7e8] sm:$0xff]
    %v345 = vunpack.c.l.b16 %v89
    %v346 = vunpack.c.h.b16 %v89
    %v347 = vunpack.c.l.b16 %v90
    %v348 = vunpack.c.h.b16 %v90
    %v349 = vunpack.c.l.b16 %v91
    %v350 = vunpack.c.h.b16 %v91
    %v351 = vunpack.c.l.b16 %v92
    %v352 = vunpack.c.h.b16 %v92
    %v353 = vunpack.c.l.b16 %v93
    %v354 = vunpack.c.h.b16 %v93
    %v355 = vunpack.c.l.b16 %v94
    %v356 = vunpack.c.h.b16 %v94
    %v357 = vunpack.c.l.b16 %v95
    %v358 = vunpack.c.h.b16 %v95
    %v359 = vunpack.c.l.b16 %v96
    %v360 = vunpack.c.h.b16 %v96
    %v361 = vunpack.c.l.b16 %v97
    %v362 = vunpack.c.h.b16 %v97
    %v363 = vunpack.c.l.b16 %v98
    %v364 = vunpack.c.h.b16 %v98
    %v365 = vunpack.c.l.b16 %v99
    %v366 = vunpack.c.h.b16 %v99
    %v367 = vunpack.c.l.b16 %v100
    %v368 = vunpack.c.h.b16 %v100
    %v369 = vunpack.c.l.b16 %v101
    %v370 = vunpack.c.h.b16 %v101
    %v371 = vunpack.c.l.b16 %v102
    %v372 = vunpack.c.h.b16 %v102
    %v373 = vunpack.c.l.b16 %v103
    %v374 = vunpack.c.h.b16 %v103
    %v375 = vunpack.c.l.b16 %v104
    %v376 = vunpack.c.h.b16 %v104
    %v377 = vunpack.c.l.b16 %v105
    %v378 = vunpack.c.h.b16 %v105
    %v379 = vunpack.c.l.b16 %v106
    %v380 = vunpack.c.h.b16 %v106
    %v381 = vunpack.c.l.b16 %v107
    %v382 = vunpack.c.h.b16 %v107
    %v383 = vunpack.c.l.b16 %v108
    %v384 = vunpack.c.h.b16 %v108
    %v385 = vunpack.c.l.b16 %v109
    %v386 = vunpack.c.h.b16 %v109
    %v387 = vunpack.c.l.b16 %v110
    %v388 = vunpack.c.h.b16 %v110
    %v389 = vunpack.c.l.b16 %v111
    %v390 = vunpack.c.h.b16 %v111
    %v391 = vunpack.c.l.b16 %v112
    %v392 = vunpack.c.h.b16 %v112
    %v393 = vunpack.c.l.b16 %v113
    %v394 = vunpack.c.h.b16 %v113
    %v395 = vunpack.c.l.b16 %v114
    %v396 = vunpack.c.h.b16 %v114
    %v397 = vunpack.c.l.b16 %v115
    %v398 = vunpack.c.h.b16 %v115
    %v399 = vunpack.c.l.b16 %v116
    %v400 = vunpack.c.h.b16 %v116
    %v401 = vunpack.c.l.b16 %v117
    %v402 = vunpack.c.h.b16 %v117
    %v403 = vunpack.c.l.b16 %v118
    %v404 = vunpack.c.h.b16 %v118
    %v405 = vunpack.c.l.b16 %v119
    %v406 = vunpack.c.h.b16 %v119
    %v407 = vunpack.c.l.b16 %v120
    %v408 = vunpack.c.h.b16 %v120
    %v409 = vunpack.c.l.b16 %v121
    %v410 = vunpack.c.h.b16 %v121
    %v411 = vunpack.c.l.b16 %v122
    %v412 = vunpack.c.h.b16 %v122
    %v413 = vunpack.c.l.b16 %v123
    %v414 = vunpack.c.h.b16 %v123
    %v415 = vunpack.c.l.b16 %v124
    %v416 = vunpack.c.h.b16 %v124
    %v417 = vunpack.c.l.b16 %v125
    %v418 = vunpack.c.h.b16 %v125
    %v419 = vunpack.c.l.b16 %v126
    %v420 = vunpack.c.h.b16 %v126
    %v421 = vunpack.c.l.b16 %v127
    %v422 = vunpack.c.h.b16 %v127
    %v423 = vunpack.c.l.b16 %v128
    %v424 = vunpack.c.h.b16 %v128
    %v425 = vunpack.c.l.b16 %v129
    %v426 = vunpack.c.h.b16 %v129
    %v427 = vunpack.c.l.b16 %v130
    %v428 = vunpack.c.h.b16 %v130
    %v429 = vunpack.c.l.b16 %v131
    %v430 = vunpack.c.h.b16 %v131
    %v431 = vunpack.c.l.b16 %v132
    %v432 = vunpack.c.h.b16 %v132
    %v433 = vunpack.c.l.b16 %v133
    %v434 = vunpack.c.h.b16 %v133
    %v435 = vunpack.c.l.b16 %v134
    %v436 = vunpack.c.h.b16 %v134
    %v437 = vunpack.c.l.b16 %v135
    %v438 = vunpack.c.h.b16 %v135
    %v439 = vunpack.c.l.b16 %v136
    %v440 = vunpack.c.h.b16 %v136
    %v441 = vunpack.c.l.b16 %v137
    %v442 = vunpack.c.h.b16 %v137
    %v443 = vunpack.c.l.b16 %v138
    %v444 = vunpack.c.h.b16 %v138
    %v445 = vunpack.c.l.b16 %v139
    %v446 = vunpack.c.h.b16 %v139
    %v447 = vunpack.c.l.b16 %v140
    %v448 = vunpack.c.h.b16 %v140
    %v449 = vunpack.c.l.b16 %v141
    %v450 = vunpack.c.h.b16 %v141
    %v451 = vunpack.c.l.b16 %v142
    %v452 = vunpack.c.h.b16 %v142
    %v453 = vunpack.c.l.b16 %v143
    %v454 = vunpack.c.h.b16 %v143
    %v455 = vunpack.c.l.b16 %v144
    %v456 = vunpack.c.h.b16 %v144
    %v457 = vunpack.c.l.b16 %v145
    %v458 = vunpack.c.h.b16 %v145
    %v459 = vunpack.c.l.b16 %v146
    %v460 = vunpack.c.h.b16 %v146
    %v461 = vunpack.c.l.b16 %v147
    %v462 = vunpack.c.h.b16 %v147
    %v463 = vunpack.c.l.b16 %v148
    %v464 = vunpack.c.h.b16 %v148
    %v465 = vunpack.c.l.b16 %v149
    %v466 = vunpack.c.h.b16 %v149
    %v467 = vunpack.c.l.b16 %v150
    %v468 = vunpack.c.h.b16 %v150
    %v469 = vunpack.c.l.b16 %v151
    %v470 = vunpack.c.h.b16 %v151
    %v471 = vunpack.c.l.b16 %v152
    %v472 = vunpack.c.h.b16 %v152
    %v473 = vunpack.c.l.b16 %v153
    %v474 = vunpack.c.h.b16 %v153
    %v475 = vunpack.c.l.b16 %v154
    %v476 = vunpack.c.h.b16 %v154
    %v477 = vunpack.c.l.b16 %v155
    %v478 = vunpack.c.h.b16 %v155
    %v479 = vunpack.c.l.b16 %v156
    %v480 = vunpack.c.h.b16 %v156
    %v481 = vunpack.c.l.b16 %v157
    %v482 = vunpack.c.h.b16 %v157
    %v483 = vunpack.c.l.b16 %v158
    %v484 = vunpack.c.h.b16 %v158
    %v485 = vunpack.c.l.b16 %v159
    %v486 = vunpack.c.h.b16 %v159
    %v487 = vunpack.c.l.b16 %v160
    %v488 = vunpack.c.h.b16 %v160
    %v489 = vunpack.c.l.b16 %v161
    %v490 = vunpack.c.h.b16 %v161
    %v491 = vunpack.c.l.b16 %v162
    %v492 = vunpack.c.h.b16 %v162
    %v493 = vunpack.c.l.b16 %v163
    %v494 = vunpack.c.h.b16 %v163
    %v495 = vunpack.c.l.b16 %v164
    %v496 = vunpack.c.h.b16 %v164
    %v497 = vunpack.c.l.b16 %v165
    %v498 = vunpack.c.h.b16 %v165
    %v499 = vunpack.c.l.b16 %v166
    %v500 = vunpack.c.h.b16 %v166
    %v501 = vunpack.c.l.b16 %v167
    %v502 = vunpack.c.h.b16 %v167
    %v503 = vunpack.c.l.b16 %v168
    %v504 = vunpack.c.h.b16 %v168
    %v505 = vunpack.c.l.b16 %v169
    %v506 = vunpack.c.h.b16 %v169
    %v507 = vunpack.c.l.b16 %v170
    %v508 = vunpack.c.h.b16 %v170
    %v509 = vunpack.c.l.b16 %v171
    %v510 = vunpack.c.h.b16 %v171
    %v511 = vunpack.c.l.b16 %v172
    %v512 = vunpack.c.h.b16 %v172
    %v513 = vunpack.c.l.b16 %v173
    %v514 = vunpack.c.h.b16 %v173
    %v515 = vunpack.c.l.b16 %v174
    %v516 = vunpack.c.h.b16 %v174
    %v517 = vunpack.c.l.b16 %v175
    %v518 = vunpack.c.h.b16 %v175
    %v519 = vunpack.c.l.b16 %v176
    %v520 = vunpack.c.h.b16 %v176
    %v521 = vunpack.c.l.b16 %v177
    %v522 = vunpack.c.h.b16 %v177
    %v523 = vunpack.c.l.b16 %v178
    %v524 = vunpack.c.h.b16 %v178
    %v525 = vunpack.c.l.b16 %v179
    %v526 = vunpack.c.h.b16 %v179
    %v527 = vunpack.c.l.b16 %v180
    %v528 = vunpack.c.h.b16 %v180
    %v529 = vunpack.c.l.b16 %v181
    %v530 = vunpack.c.h.b16 %v181
    %v531 = vunpack.c.l.b16 %v182
    %v532 = vunpack.c.h.b16 %v182
    %v533 = vunpack.c.l.b16 %v183
    %v534 = vunpack.c.h.b16 %v183
    %v535 = vunpack.c.l.b16 %v184
    %v536 = vunpack.c.h.b16 %v184
    %v537 = vunpack.c.l.b16 %v185
    %v538 = vunpack.c.h.b16 %v185
    %v539 = vunpack.c.l.b16 %v186
    %v540 = vunpack.c.h.b16 %v186
    %v541 = vunpack.c.l.b16 %v187
    %v542 = vunpack.c.h.b16 %v187
    %v543 = vunpack.c.l.b16 %v188
    %v544 = vunpack.c.h.b16 %v188
    %v545 = vunpack.c.l.b16 %v189
    %v546 = vunpack.c.h.b16 %v189
    %v547 = vunpack.c.l.b16 %v190
    %v548 = vunpack.c.h.b16 %v190
    %v549 = vunpack.c.l.b16 %v191
    %v550 = vunpack.c.h.b16 %v191
    %v551 = vunpack.c.l.b16 %v192
    %v552 = vunpack.c.h.b16 %v192
    %v553 = vunpack.c.l.b16 %v193
    %v554 = vunpack.c.h.b16 %v193
    %v555 = vunpack.c.l.b16 %v194
    %v556 = vunpack.c.h.b16 %v194
    %v557 = vunpack.c.l.b16 %v195
    %v558 = vunpack.c.h.b16 %v195
    %v559 = vunpack.c.l.b16 %v196
    %v560 = vunpack.c.h.b16 %v196
    %v561 = vunpack.c.l.b16 %v197
    %v562 = vunpack.c.h.b16 %v197
    %v563 = vunpack.c.l.b16 %v198
    %v564 = vunpack.c.h.b16 %v198
    %v565 = vunpack.c.l.b16 %v199
    %v566 = vunpack.c.h.b16 %v199
    %v567 = vunpack.c.l.b16 %v200
    %v568 = vunpack.c.h.b16 %v200
    %v569 = vunpack.c.l.b16 %v201
    %v570 = vunpack.c.h.b16 %v201
    %v571 = vunpack.c.l.b16 %v202
    %v572 = vunpack.c.h.b16 %v202
    %v573 = vunpack.c.l.b16 %v203
    %v574 = vunpack.c.h.b16 %v203
    %v575 = vunpack.c.l.b16 %v204
    %v576 = vunpack.c.h.b16 %v204
    %v577 = vunpack.c.l.b16 %v205
    %v578 = vunpack.c.h.b16 %v205
    %v579 = vunpack.c.l.b16 %v206
    %v580 = vunpack.c.h.b16 %v206
    %v581 = vunpack.c.l.b16 %v207
    %v582 = vunpack.c.h.b16 %v207
    %v583 = vunpack.c.l.b16 %v208
    %v584 = vunpack.c.h.b16 %v208
    %v585 = vunpack.c.l.b16 %v209
    %v586 = vunpack.c.h.b16 %v209
    %v587 = vunpack.c.l.b16 %v210
    %v588 = vunpack.c.h.b16 %v210
    %v589 = vunpack.c.l.b16 %v211
    %v590 = vunpack.c.h.b16 %v211
    %v591 = vunpack.c.l.b16 %v212
    %v592 = vunpack.c.h.b16 %v212
    %v593 = vunpack.c.l.b16 %v213
    %v594 = vunpack.c.h.b16 %v213
    %v595 = vunpack.c.l.b16 %v214
    %v596 = vunpack.c.h.b16 %v214
    %v597 = vunpack.c.l.b16 %v215
    %v598 = vunpack.c.h.b16 %v215
    %v599 = vunpack.c.l.b16 %v216
    %v600 = vunpack.c.h.b16 %v216
    %v601 = vpack.c.b16 %v349, %v345
    %v602 = vpack.c.b16 %v350, %v346
    %v603 = vpack.c.b16 %v351, %v347
    %v604 = vpack.c.b16 %v352, %v348
    %v605 = vpack.c.b16 %v357, %v353
    %v606 = vpack.c.b16 %v358, %v354
    %v607 = vpack.c.b16 %v359, %v355
    %v608 = vpack.c.b16 %v360, %v356
    %v609 = vpack.c.b16 %v365, %v361
    %v610 = vpack.c.b16 %v366, %v362
    %v611 = vpack.c.b16 %v367, %v363
    %v612 = vpack.c.b16 %v368, %v364
    %v613 = vpack.c.b16 %v373, %v369
    %v614 = vpack.c.b16 %v374, %v370
    %v615 = vpack.c.b16 %v375, %v371
    %v616 = vpack.c.b16 %v376, %v372
    %v617 = vpack.c.b16 %v381, %v377
    %v618 = vpack.c.b16 %v382, %v378
    %v619 = vpack.c.b16 %v383, %v379
    %v620 = vpack.c.b16 %v384, %v380
    %v621 = vpack.c.b16 %v389, %v385
    %v622 = vpack.c.b16 %v390, %v386
    %v623 = vpack.c.b16 %v391, %v387
    %v624 = vpack.c.b16 %v392, %v388
    %v625 = vpack.c.b16 %v397, %v393
    %v626 = vpack.c.b16 %v398, %v394
    %v627 = vpack.c.b16 %v399, %v395
    %v628 = vpack.c.b16 %v400, %v396
    %v629 = vpack.c.b16 %v405, %v401
    %v630 = vpack.c.b16 %v406, %v402
    %v631 = vpack.c.b16 %v407, %v403
    %v632 = vpack.c.b16 %v408, %v404
    %v633 = vpack.c.b16 %v413, %v409
    %v634 = vpack.c.b16 %v414, %v410
    %v635 = vpack.c.b16 %v415, %v411
    %v636 = vpack.c.b16 %v416, %v412
    %v637 = vpack.c.b16 %v421, %v417
    %v638 = vpack.c.b16 %v422, %v418
    %v639 = vpack.c.b16 %v423, %v419
    %v640 = vpack.c.b16 %v424, %v420
    %v641 = vpack.c.b16 %v429, %v425
    %v642 = vpack.c.b16 %v430, %v426
    %v643 = vpack.c.b16 %v431, %v427
    %v644 = vpack.c.b16 %v432, %v428
    %v645 = vpack.c.b16 %v437, %v433
    %v646 = vpack.c.b16 %v438, %v434
    %v647 = vpack.c.b16 %v439, %v435
    %v648 = vpack.c.b16 %v440, %v436
    %v649 = vpack.c.b16 %v445, %v441
    %v650 = vpack.c.b16 %v446, %v442
    %v651 = vpack.c.b16 %v447, %v443
    %v652 = vpack.c.b16 %v448, %v444
    %v653 = vpack.c.b16 %v453, %v449
    %v654 = vpack.c.b16 %v454, %v450
    %v655 = vpack.c.b16 %v455, %v451
    %v656 = vpack.c.b16 %v456, %v452
    %v657 = vpack.c.b16 %v461, %v457
    %v658 = vpack.c.b16 %v462, %v458
    %v659 = vpack.c.b16 %v463, %v459
    %v660 = vpack.c.b16 %v464, %v460
    %v661 = vpack.c.b16 %v469, %v465
    %v662 = vpack.c.b16 %v470, %v466
    %v663 = vpack.c.b16 %v471, %v467
    %v664 = vpack.c.b16 %v472, %v468
    %v665 = vpack.c.b16 %v477, %v473
    %v666 = vpack.c.b16 %v478, %v474
    %v667 = vpack.c.b16 %v479, %v475
    %v668 = vpack.c.b16 %v480, %v476
    %v669 = vpack.c.b16 %v485, %v481
    %v670 = vpack.c.b16 %v486, %v482
    %v671 = vpack.c.b16 %v487, %v483
    %v672 = vpack.c.b16 %v488, %v484
    %v673 = vpack.c.b16 %v493, %v489
    %v674 = vpack.c.b16 %v494, %v490
    %v675 = vpack.c.b16 %v495, %v491
    %v676 = vpack.c.b16 %v496, %v492
    %v677 = vpack.c.b16 %v501, %v497
    %v678 = vpack.c.b16 %v502, %v498
    %v679 = vpack.c.b16 %v503, %v499
    %v680 = vpack.c.b16 %v504, %v500
    %v681 = vpack.c.b16 %v509, %v505
    %v682 = vpack.c.b16 %v510, %v506
    %v683 = vpack.c.b16 %v511, %v507
    %v684 = vpack.c.b16 %v512, %v508
    %v685 = vpack.c.b16 %v517, %v513
    %v686 = vpack.c.b16 %v518, %v514
    %v687 = vpack.c.b16 %v519, %v515
    %v688 = vpack.c.b16 %v520, %v516
    %v689 = vpack.c.b16 %v525, %v521
    %v690 = vpack.c.b16 %v526, %v522
    %v691 = vpack.c.b16 %v527, %v523
    %v692 = vpack.c.b16 %v528, %v524
    %v693 = vpack.c.b16 %v533, %v529
    %v694 = vpack.c.b16 %v534, %v530
    %v695 = vpack.c.b16 %v535, %v531
    %v696 = vpack.c.b16 %v536, %v532
    %v697 = vpack.c.b16 %v541, %v537
    %v698 = vpack.c.b16 %v542, %v538
    %v699 = vpack.c.b16 %v543, %v539
    %v700 = vpack.c.b16 %v544, %v540
    %v701 = vpack.c.b16 %v549, %v545
    %v702 = vpack.c.b16 %v550, %v546
    %v703 = vpack.c.b16 %v551, %v547
    %v704 = vpack.c.b16 %v552, %v548
    %v705 = vpack.c.b16 %v557, %v553
    %v706 = vpack.c.b16 %v558, %v554
    %v707 = vpack.c.b16 %v559, %v555
    %v708 = vpack.c.b16 %v560, %v556
    %v709 = vpack.c.b16 %v565, %v561
    %v710 = vpack.c.b16 %v566, %v562
    %v711 = vpack.c.b16 %v567, %v563
    %v712 = vpack.c.b16 %v568, %v564
    %v713 = vpack.c.b16 %v573, %v569
    %v714 = vpack.c.b16 %v574, %v570
    %v715 = vpack.c.b16 %v575, %v571
    %v716 = vpack.c.b16 %v576, %v572
    %v717 = vpack.c.b16 %v581, %v577
    %v718 = vpack.c.b16 %v582, %v578
    %v719 = vpack.c.b16 %v583, %v579
    %v720 = vpack.c.b16 %v584, %v580
    %v721 = vpack.c.b16 %v589, %v585
    %v722 = vpack.c.b16 %v590, %v586
    %v723 = vpack.c.b16 %v591, %v587
    %v724 = vpack.c.b16 %v592, %v588
    %v725 = vpack.c.b16 %v597, %v593
    %v726 = vpack.c.b16 %v598, %v594
    %v727 = vpack.c.b16 %v599, %v595
    %v728 = vpack.c.b16 %v600, %v596
    %857 = vmatprep.subr.bf16.mxu0 %v602
    %858 = vmatpush1.bf16.msra.mxu0 %v601
    %859 = vmatprep.subr.bf16.mxu0 %v606
    %860 = vmatpush1.bf16.msra.mxu0 %v605
    %861 = vmatprep.subr.bf16.mxu0 %v610
    %862 = vmatpush1.bf16.msra.mxu0 %v609
    %863 = vmatprep.subr.bf16.mxu0 %v614
    %864 = vmatpush1.bf16.msra.mxu0 %v613
    %865 = vmatprep.subr.bf16.mxu0 %v618
    %866 = vmatpush1.bf16.msra.mxu0 %v617
    %867 = vmatprep.subr.bf16.mxu0 %v622
    %868 = vmatpush1.bf16.msra.mxu0 %v621
    %869 = vmatprep.subr.bf16.mxu0 %v626
    %870 = vmatpush1.bf16.msra.mxu0 %v625
    %871 = vmatprep.subr.bf16.mxu0 %v630
    %872 = vmatpush1.bf16.msra.mxu0 %v629
    %873 = vmatprep.subr.bf16.mxu0 %v634
    %874 = vmatpush1.bf16.msra.mxu0 %v633
    %875 = vmatprep.subr.bf16.mxu0 %v638
    %876 = vmatpush1.bf16.msra.mxu0 %v637
    %877 = vmatprep.subr.bf16.mxu0 %v642
    %878 = vmatpush1.bf16.msra.mxu0 %v641
    %879 = vmatprep.subr.bf16.mxu0 %v646
    %880 = vmatpush1.bf16.msra.mxu0 %v645
    %881 = vmatprep.subr.bf16.mxu0 %v650
    %882 = vmatpush1.bf16.msra.mxu0 %v649
    %883 = vmatprep.subr.bf16.mxu0 %v654
    %884 = vmatpush1.bf16.msra.mxu0 %v653
    %885 = vmatprep.subr.bf16.mxu0 %v658
    %886 = vmatpush1.bf16.msra.mxu0 %v657
    %887 = vmatprep.subr.bf16.mxu0 %v662
    %888 = vmatpush1.bf16.msra.mxu0 %v661
    %889 = vmatprep.mubr.bf16.mxu0 %v86
    %890 = vmatmul.mubr.bf16.gmra.mrb[0].mxu0 %v85
    %v891 = vpop.f32.mrb[0].mxu0
    %v892 = vadd.f32 0.0, %v891
    %v893 = vpop.f32.mrb[0].mxu0
    %v894 = vadd.f32 0.0, %v893
    %v895 = vpop.f32.mrb[0].mxu0
    %v896 = vpop.f32.mrb[0].mxu0
    %897 = vdwg.mxu0
    %898 = vmatprep.subr.bf16.mxu0 %v666
    %899 = vmatpush1.bf16.msra.mxu0 %v665
    %900 = vmatprep.subr.bf16.mxu0 %v670
    %901 = vmatpush1.bf16.msra.mxu0 %v669
    %902 = vmatprep.subr.bf16.mxu0 %v674
    %903 = vmatpush1.bf16.msra.mxu0 %v673
    %904 = vmatprep.subr.bf16.mxu0 %v678
    %905 = vmatpush1.bf16.msra.mxu0 %v677
    %906 = vmatprep.subr.bf16.mxu0 %v682
    %907 = vmatpush1.bf16.msra.mxu0 %v681
    %908 = vmatprep.subr.bf16.mxu0 %v686
    %909 = vmatpush1.bf16.msra.mxu0 %v685
    %910 = vmatprep.subr.bf16.mxu0 %v690
    %911 = vmatpush1.bf16.msra.mxu0 %v689
    %912 = vmatprep.subr.bf16.mxu0 %v694
    %913 = vmatpush1.bf16.msra.mxu0 %v693
    %914 = vmatprep.subr.bf16.mxu0 %v698
    %915 = vmatpush1.bf16.msra.mxu0 %v697
    %916 = vmatprep.subr.bf16.mxu0 %v702
    %917 = vmatpush1.bf16.msra.mxu0 %v701
    %918 = vmatprep.subr.bf16.mxu0 %v706
    %919 = vmatpush1.bf16.msra.mxu0 %v705
    %920 = vmatprep.subr.bf16.mxu0 %v710
    %921 = vmatpush1.bf16.msra.mxu0 %v709
    %922 = vmatprep.subr.bf16.mxu0 %v714
    %923 = vmatpush1.bf16.msra.mxu0 %v713
    %924 = vmatprep.subr.bf16.mxu0 %v718
    %925 = vmatpush1.bf16.msra.mxu0 %v717
    %926 = vmatprep.subr.bf16.mxu0 %v722
    %927 = vmatpush1.bf16.msra.mxu0 %v721
    %928 = vmatprep.subr.bf16.mxu0 %v726
    %929 = vmatpush1.bf16.msra.mxu0 %v725
    %930 = vmatprep.mubr.bf16.mxu0 %v88
    %931 = vmatmul.mubr.bf16.gmra.mrb[0].mxu0 %v87
    %v932 = vpop.f32.mrb[0].mxu0
    %v933 = vadd.f32 %v892, %v932
    %v934 = vpop.f32.mrb[0].mxu0
    %v935 = vadd.f32 %v894, %v934
    %v936 = vpop.f32.mrb[0].mxu0
    %v937 = vpop.f32.mrb[0].mxu0
    %938 = vdwg.mxu0
    %939 = vmatprep.subr.bf16.mxu0 %v604
    %940 = vmatpush1.bf16.msra.mxu0 %v603
    %941 = vmatprep.subr.bf16.mxu0 %v608
    %942 = vmatpush1.bf16.msra.mxu0 %v607
    %943 = vmatprep.subr.bf16.mxu0 %v612
    %944 = vmatpush1.bf16.msra.mxu0 %v611
    %945 = vmatprep.subr.bf16.mxu0 %v616
    %946 = vmatpush1.bf16.msra.mxu0 %v615
    %947 = vmatprep.subr.bf16.mxu0 %v620
    %948 = vmatpush1.bf16.msra.mxu0 %v619
    %949 = vmatprep.subr.bf16.mxu0 %v624
    %950 = vmatpush1.bf16.msra.mxu0 %v623
    %951 = vmatprep.subr.bf16.mxu0 %v628
    %952 = vmatpush1.bf16.msra.mxu0 %v627
    %953 = vmatprep.subr.bf16.mxu0 %v632
    %954 = vmatpush1.bf16.msra.mxu0 %v631
    %955 = vmatprep.subr.bf16.mxu0 %v636
    %956 = vmatpush1.bf16.msra.mxu0 %v635
    %957 = vmatprep.subr.bf16.mxu0 %v640
    %958 = vmatpush1.bf16.msra.mxu0 %v639
    %959 = vmatprep.subr.bf16.mxu0 %v644
    %960 = vmatpush1.bf16.msra.mxu0 %v643
    %961 = vmatprep.subr.bf16.mxu0 %v648
    %962 = vmatpush1.bf16.msra.mxu0 %v647
    %963 = vmatprep.subr.bf16.mxu0 %v652
    %964 = vmatpush1.bf16.msra.mxu0 %v651
    %965 = vmatprep.subr.bf16.mxu0 %v656
    %966 = vmatpush1.bf16.msra.mxu0 %v655
    %967 = vmatprep.subr.bf16.mxu0 %v660
    %968 = vmatpush1.bf16.msra.mxu0 %v659
    %969 = vmatprep.subr.bf16.mxu0 %v664
    %970 = vmatpush1.bf16.msra.mxu0 %v663
    %971 = vmatprep.mubr.bf16.mxu0 %v86
    %972 = vmatmul.mubr.bf16.gmra.mrb[0].mxu0 %v85
    %v973 = vpop.f32.mrb[0].mxu0
    %v974 = vadd.f32 0.0, %v973
    %v975 = vpop.f32.mrb[0].mxu0
    %v976 = vadd.f32 0.0, %v975
    %v977 = vpop.f32.mrb[0].mxu0
    %v978 = vpop.f32.mrb[0].mxu0
    %979 = vdwg.mxu0
    %980 = vmatprep.subr.bf16.mxu0 %v668
    %981 = vmatpush1.bf16.msra.mxu0 %v667
    %982 = vmatprep.subr.bf16.mxu0 %v672
    %983 = vmatpush1.bf16.msra.mxu0 %v671
    %984 = vmatprep.subr.bf16.mxu0 %v676
    %985 = vmatpush1.bf16.msra.mxu0 %v675
    %986 = vmatprep.subr.bf16.mxu0 %v680
    %987 = vmatpush1.bf16.msra.mxu0 %v679
    %988 = vmatprep.subr.bf16.mxu0 %v684
    %989 = vmatpush1.bf16.msra.mxu0 %v683
    %990 = vmatprep.subr.bf16.mxu0 %v688
    %991 = vmatpush1.bf16.msra.mxu0 %v687
    %992 = vmatprep.subr.bf16.mxu0 %v692
    %993 = vmatpush1.bf16.msra.mxu0 %v691
    %994 = vmatprep.subr.bf16.mxu0 %v696
    %995 = vmatpush1.bf16.msra.mxu0 %v695
    %996 = vmatprep.subr.bf16.mxu0 %v700
    %997 = vmatpush1.bf16.msra.mxu0 %v699
    %998 = vmatprep.subr.bf16.mxu0 %v704
    %999 = vmatpush1.bf16.msra.mxu0 %v703
    %1000 = vmatprep.subr.bf16.mxu0 %v708
    %1001 = vmatpush1.bf16.msra.mxu0 %v707
    %1002 = vmatprep.subr.bf16.mxu0 %v712
    %1003 = vmatpush1.bf16.msra.mxu0 %v711
    %1004 = vmatprep.subr.bf16.mxu0 %v716
    %1005 = vmatpush1.bf16.msra.mxu0 %v715
    %1006 = vmatprep.subr.bf16.mxu0 %v720
    %1007 = vmatpush1.bf16.msra.mxu0 %v719
    %1008 = vmatprep.subr.bf16.mxu0 %v724
    %1009 = vmatpush1.bf16.msra.mxu0 %v723
    %1010 = vmatprep.subr.bf16.mxu0 %v728
    %1011 = vmatpush1.bf16.msra.mxu0 %v727
    %1012 = vmatprep.mubr.bf16.mxu0 %v88
    %1013 = vmatmul.mubr.bf16.gmra.mrb[0].mxu0 %v87
    %v1014 = vpop.f32.mrb[0].mxu0
    %v1015 = vadd.f32 %v974, %v1014
    %v1016 = vpop.f32.mrb[0].mxu0
    %v1017 = vadd.f32 %v976, %v1016
    %v1018 = vpop.f32.mrb[0].mxu0
    %v1019 = vpop.f32.mrb[0].mxu0
    %1020 = vdwg.mxu0
    %v1021 = vld [vmem:[#allocation5 + $0x10] sm:$0xff]
    %v1022 = vld [vmem:[#allocation5 + $0x18] sm:$0xff]
    %v1023 = vld [vmem:[#allocation5 + $0x30] sm:$0xff]
    %v1024 = vld [vmem:[#allocation5 + $0x38] sm:$0xff]
    %v1025 = vld [vmem:[#allocation5 + $0x50] sm:$0xff]
    %v1026 = vld [vmem:[#allocation5 + $0x58] sm:$0xff]
    %v1027 = vld [vmem:[#allocation5 + $0x70] sm:$0xff]
    %v1028 = vld [vmem:[#allocation5 + $0x78] sm:$0xff]
    %v1029 = vld [vmem:[#allocation5 + $0x90] sm:$0xff]
    %v1030 = vld [vmem:[#allocation5 + $0x98] sm:$0xff]
    %v1031 = vld [vmem:[#allocation5 + $0xb0] sm:$0xff]
    %v1032 = vld [vmem:[#allocation5 + $0xb8] sm:$0xff]
    %v1033 = vld [vmem:[#allocation5 + $0xd0] sm:$0xff]
    %v1034 = vld [vmem:[#allocation5 + $0xd8] sm:$0xff]
    %v1035 = vld [vmem:[#allocation5 + $0xf0] sm:$0xff]
    %v1036 = vld [vmem:[#allocation5 + $0xf8] sm:$0xff]
    %v1037 = vld [vmem:[#allocation5 + $0x110] sm:$0xff]
    %v1038 = vld [vmem:[#allocation5 + $0x118] sm:$0xff]
    %v1039 = vld [vmem:[#allocation5 + $0x130] sm:$0xff]
    %v1040 = vld [vmem:[#allocation5 + $0x138] sm:$0xff]
    %v1041 = vld [vmem:[#allocation5 + $0x150] sm:$0xff]
    %v1042 = vld [vmem:[#allocation5 + $0x158] sm:$0xff]
    %v1043 = vld [vmem:[#allocation5 + $0x170] sm:$0xff]
    %v1044 = vld [vmem:[#allocation5 + $0x178] sm:$0xff]
    %v1045 = vld [vmem:[#allocation5 + $0x190] sm:$0xff]
    %v1046 = vld [vmem:[#allocation5 + $0x198] sm:$0xff]
    %v1047 = vld [vmem:[#allocation5 + $0x1b0] sm:$0xff]
    %v1048 = vld [vmem:[#allocation5 + $0x1b8] sm:$0xff]
    %v1049 = vld [vmem:[#allocation5 + $0x1d0] sm:$0xff]
    %v1050 = vld [vmem:[#allocation5 + $0x1d8] sm:$0xff]
    %v1051 = vld [vmem:[#allocation5 + $0x1f0] sm:$0xff]
    %v1052 = vld [vmem:[#allocation5 + $0x1f8] sm:$0xff]
    %v1053 = vld [vmem:[#allocation5 + $0x210] sm:$0xff]
    %v1054 = vld [vmem:[#allocation5 + $0x218] sm:$0xff]
    %v1055 = vld [vmem:[#allocation5 + $0x230] sm:$0xff]
    %v1056 = vld [vmem:[#allocation5 + $0x238] sm:$0xff]
    %v1057 = vld [vmem:[#allocation5 + $0x250] sm:$0xff]
    %v1058 = vld [vmem:[#allocation5 + $0x258] sm:$0xff]
    %v1059 = vld [vmem:[#allocation5 + $0x270] sm:$0xff]
    %v1060 = vld [vmem:[#allocation5 + $0x278] sm:$0xff]
    %v1061 = vld [vmem:[#allocation5 + $0x290] sm:$0xff]
    %v1062 = vld [vmem:[#allocation5 + $0x298] sm:$0xff]
    %v1063 = vld [vmem:[#allocation5 + $0x2b0] sm:$0xff]
    %v1064 = vld [vmem:[#allocation5 + $0x2b8] sm:$0xff]
    %v1065 = vld [vmem:[#allocation5 + $0x2d0] sm:$0xff]
    %v1066 = vld [vmem:[#allocation5 + $0x2d8] sm:$0xff]
    %v1067 = vld [vmem:[#allocation5 + $0x2f0] sm:$0xff]
    %v1068 = vld [vmem:[#allocation5 + $0x2f8] sm:$0xff]
    %v1069 = vld [vmem:[#allocation5 + $0x310] sm:$0xff]
    %v1070 = vld [vmem:[#allocation5 + $0x318] sm:$0xff]
    %v1071 = vld [vmem:[#allocation5 + $0x330] sm:$0xff]
    %v1072 = vld [vmem:[#allocation5 + $0x338] sm:$0xff]
    %v1073 = vld [vmem:[#allocation5 + $0x350] sm:$0xff]
    %v1074 = vld [vmem:[#allocation5 + $0x358] sm:$0xff]
    %v1075 = vld [vmem:[#allocation5 + $0x370] sm:$0xff]
    %v1076 = vld [vmem:[#allocation5 + $0x378] sm:$0xff]
    %v1077 = vld [vmem:[#allocation5 + $0x390] sm:$0xff]
    %v1078 = vld [vmem:[#allocation5 + $0x398] sm:$0xff]
    %v1079 = vld [vmem:[#allocation5 + $0x3b0] sm:$0xff]
    %v1080 = vld [vmem:[#allocation5 + $0x3b8] sm:$0xff]
    %v1081 = vld [vmem:[#allocation5 + $0x3d0] sm:$0xff]
    %v1082 = vld [vmem:[#allocation5 + $0x3d8] sm:$0xff]
    %v1083 = vld [vmem:[#allocation5 + $0x3f0] sm:$0xff]
    %v1084 = vld [vmem:[#allocation5 + $0x3f8] sm:$0xff]
    %v1085 = vld [vmem:[#allocation5 + $0x410] sm:$0xff]
    %v1086 = vld [vmem:[#allocation5 + $0x418] sm:$0xff]
    %v1087 = vld [vmem:[#allocation5 + $0x430] sm:$0xff]
    %v1088 = vld [vmem:[#allocation5 + $0x438] sm:$0xff]
    %v1089 = vld [vmem:[#allocation5 + $0x450] sm:$0xff]
    %v1090 = vld [vmem:[#allocation5 + $0x458] sm:$0xff]
    %v1091 = vld [vmem:[#allocation5 + $0x470] sm:$0xff]
    %v1092 = vld [vmem:[#allocation5 + $0x478] sm:$0xff]
    %v1093 = vld [vmem:[#allocation5 + $0x490] sm:$0xff]
    %v1094 = vld [vmem:[#allocation5 + $0x498] sm:$0xff]
    %v1095 = vld [vmem:[#allocation5 + $0x4b0] sm:$0xff]
    %v1096 = vld [vmem:[#allocation5 + $0x4b8] sm:$0xff]
    %v1097 = vld [vmem:[#allocation5 + $0x4d0] sm:$0xff]
    %v1098 = vld [vmem:[#allocation5 + $0x4d8] sm:$0xff]
    %v1099 = vld [vmem:[#allocation5 + $0x4f0] sm:$0xff]
    %v1100 = vld [vmem:[#allocation5 + $0x4f8] sm:$0xff]
    %v1101 = vld [vmem:[#allocation5 + $0x510] sm:$0xff]
    %v1102 = vld [vmem:[#allocation5 + $0x518] sm:$0xff]
    %v1103 = vld [vmem:[#allocation5 + $0x530] sm:$0xff]
    %v1104 = vld [vmem:[#allocation5 + $0x538] sm:$0xff]
    %v1105 = vld [vmem:[#allocation5 + $0x550] sm:$0xff]
    %v1106 = vld [vmem:[#allocation5 + $0x558] sm:$0xff]
    %v1107 = vld [vmem:[#allocation5 + $0x570] sm:$0xff]
    %v1108 = vld [vmem:[#allocation5 + $0x578] sm:$0xff]
    %v1109 = vld [vmem:[#allocation5 + $0x590] sm:$0xff]
    %v1110 = vld [vmem:[#allocation5 + $0x598] sm:$0xff]
    %v1111 = vld [vmem:[#allocation5 + $0x5b0] sm:$0xff]
    %v1112 = vld [vmem:[#allocation5 + $0x5b8] sm:$0xff]
    %v1113 = vld [vmem:[#allocation5 + $0x5d0] sm:$0xff]
    %v1114 = vld [vmem:[#allocation5 + $0x5d8] sm:$0xff]
    %v1115 = vld [vmem:[#allocation5 + $0x5f0] sm:$0xff]
    %v1116 = vld [vmem:[#allocation5 + $0x5f8] sm:$0xff]
    %v1117 = vld [vmem:[#allocation5 + $0x610] sm:$0xff]
    %v1118 = vld [vmem:[#allocation5 + $0x618] sm:$0xff]
    %v1119 = vld [vmem:[#allocation5 + $0x630] sm:$0xff]
    %v1120 = vld [vmem:[#allocation5 + $0x638] sm:$0xff]
    %v1121 = vld [vmem:[#allocation5 + $0x650] sm:$0xff]
    %v1122 = vld [vmem:[#allocation5 + $0x658] sm:$0xff]
    %v1123 = vld [vmem:[#allocation5 + $0x670] sm:$0xff]
    %v1124 = vld [vmem:[#allocation5 + $0x678] sm:$0xff]
    %v1125 = vld [vmem:[#allocation5 + $0x690] sm:$0xff]
    %v1126 = vld [vmem:[#allocation5 + $0x698] sm:$0xff]
    %v1127 = vld [vmem:[#allocation5 + $0x6b0] sm:$0xff]
    %v1128 = vld [vmem:[#allocation5 + $0x6b8] sm:$0xff]
    %v1129 = vld [vmem:[#allocation5 + $0x6d0] sm:$0xff]
    %v1130 = vld [vmem:[#allocation5 + $0x6d8] sm:$0xff]
    %v1131 = vld [vmem:[#allocation5 + $0x6f0] sm:$0xff]
    %v1132 = vld [vmem:[#allocation5 + $0x6f8] sm:$0xff]
    %v1133 = vld [vmem:[#allocation5 + $0x710] sm:$0xff]
    %v1134 = vld [vmem:[#allocation5 + $0x718] sm:$0xff]
    %v1135 = vld [vmem:[#allocation5 + $0x730] sm:$0xff]
    %v1136 = vld [vmem:[#allocation5 + $0x738] sm:$0xff]
    %v1137 = vld [vmem:[#allocation5 + $0x750] sm:$0xff]
    %v1138 = vld [vmem:[#allocation5 + $0x758] sm:$0xff]
    %v1139 = vld [vmem:[#allocation5 + $0x770] sm:$0xff]
    %v1140 = vld [vmem:[#allocation5 + $0x778] sm:$0xff]
    %v1141 = vld [vmem:[#allocation5 + $0x790] sm:$0xff]
    %v1142 = vld [vmem:[#allocation5 + $0x798] sm:$0xff]
    %v1143 = vld [vmem:[#allocation5 + $0x7b0] sm:$0xff]
    %v1144 = vld [vmem:[#allocation5 + $0x7b8] sm:$0xff]
    %v1145 = vld [vmem:[#allocation5 + $0x7d0] sm:$0xff]
    %v1146 = vld [vmem:[#allocation5 + $0x7d8] sm:$0xff]
    %v1147 = vld [vmem:[#allocation5 + $0x7f0] sm:$0xff]
    %v1148 = vld [vmem:[#allocation5 + $0x7f8] sm:$0xff]
    %v1277 = vunpack.c.l.b16 %v1021
    %v1278 = vunpack.c.h.b16 %v1021
    %v1279 = vunpack.c.l.b16 %v1022
    %v1280 = vunpack.c.h.b16 %v1022
    %v1281 = vunpack.c.l.b16 %v1023
    %v1282 = vunpack.c.h.b16 %v1023
    %v1283 = vunpack.c.l.b16 %v1024
    %v1284 = vunpack.c.h.b16 %v1024
    %v1285 = vunpack.c.l.b16 %v1025
    %v1286 = vunpack.c.h.b16 %v1025
    %v1287 = vunpack.c.l.b16 %v1026
    %v1288 = vunpack.c.h.b16 %v1026
    %v1289 = vunpack.c.l.b16 %v1027
    %v1290 = vunpack.c.h.b16 %v1027
    %v1291 = vunpack.c.l.b16 %v1028
    %v1292 = vunpack.c.h.b16 %v1028
    %v1293 = vunpack.c.l.b16 %v1029
    %v1294 = vunpack.c.h.b16 %v1029
    %v1295 = vunpack.c.l.b16 %v1030
    %v1296 = vunpack.c.h.b16 %v1030
    %v1297 = vunpack.c.l.b16 %v1031
    %v1298 = vunpack.c.h.b16 %v1031
    %v1299 = vunpack.c.l.b16 %v1032
    %v1300 = vunpack.c.h.b16 %v1032
    %v1301 = vunpack.c.l.b16 %v1033
    %v1302 = vunpack.c.h.b16 %v1033
    %v1303 = vunpack.c.l.b16 %v1034
    %v1304 = vunpack.c.h.b16 %v1034
    %v1305 = vunpack.c.l.b16 %v1035
    %v1306 = vunpack.c.h.b16 %v1035
    %v1307 = vunpack.c.l.b16 %v1036
    %v1308 = vunpack.c.h.b16 %v1036
    %v1309 = vunpack.c.l.b16 %v1037
    %v1310 = vunpack.c.h.b16 %v1037
    %v1311 = vunpack.c.l.b16 %v1038
    %v1312 = vunpack.c.h.b16 %v1038
    %v1313 = vunpack.c.l.b16 %v1039
    %v1314 = vunpack.c.h.b16 %v1039
    %v1315 = vunpack.c.l.b16 %v1040
    %v1316 = vunpack.c.h.b16 %v1040
    %v1317 = vunpack.c.l.b16 %v1041
    %v1318 = vunpack.c.h.b16 %v1041
    %v1319 = vunpack.c.l.b16 %v1042
    %v1320 = vunpack.c.h.b16 %v1042
    %v1321 = vunpack.c.l.b16 %v1043
    %v1322 = vunpack.c.h.b16 %v1043
    %v1323 = vunpack.c.l.b16 %v1044
    %v1324 = vunpack.c.h.b16 %v1044
    %v1325 = vunpack.c.l.b16 %v1045
    %v1326 = vunpack.c.h.b16 %v1045
    %v1327 = vunpack.c.l.b16 %v1046
    %v1328 = vunpack.c.h.b16 %v1046
    %v1329 = vunpack.c.l.b16 %v1047
    %v1330 = vunpack.c.h.b16 %v1047
    %v1331 = vunpack.c.l.b16 %v1048
    %v1332 = vunpack.c.h.b16 %v1048
    %v1333 = vunpack.c.l.b16 %v1049
    %v1334 = vunpack.c.h.b16 %v1049
    %v1335 = vunpack.c.l.b16 %v1050
    %v1336 = vunpack.c.h.b16 %v1050
    %v1337 = vunpack.c.l.b16 %v1051
    %v1338 = vunpack.c.h.b16 %v1051
    %v1339 = vunpack.c.l.b16 %v1052
    %v1340 = vunpack.c.h.b16 %v1052
    %v1341 = vunpack.c.l.b16 %v1053
    %v1342 = vunpack.c.h.b16 %v1053
    %v1343 = vunpack.c.l.b16 %v1054
    %v1344 = vunpack.c.h.b16 %v1054
    %v1345 = vunpack.c.l.b16 %v1055
    %v1346 = vunpack.c.h.b16 %v1055
    %v1347 = vunpack.c.l.b16 %v1056
    %v1348 = vunpack.c.h.b16 %v1056
    %v1349 = vunpack.c.l.b16 %v1057
    %v1350 = vunpack.c.h.b16 %v1057
    %v1351 = vunpack.c.l.b16 %v1058
    %v1352 = vunpack.c.h.b16 %v1058
    %v1353 = vunpack.c.l.b16 %v1059
    %v1354 = vunpack.c.h.b16 %v1059
    %v1355 = vunpack.c.l.b16 %v1060
    %v1356 = vunpack.c.h.b16 %v1060
    %v1357 = vunpack.c.l.b16 %v1061
    %v1358 = vunpack.c.h.b16 %v1061
    %v1359 = vunpack.c.l.b16 %v1062
    %v1360 = vunpack.c.h.b16 %v1062
    %v1361 = vunpack.c.l.b16 %v1063
    %v1362 = vunpack.c.h.b16 %v1063
    %v1363 = vunpack.c.l.b16 %v1064
    %v1364 = vunpack.c.h.b16 %v1064
    %v1365 = vunpack.c.l.b16 %v1065
    %v1366 = vunpack.c.h.b16 %v1065
    %v1367 = vunpack.c.l.b16 %v1066
    %v1368 = vunpack.c.h.b16 %v1066
    %v1369 = vunpack.c.l.b16 %v1067
    %v1370 = vunpack.c.h.b16 %v1067
    %v1371 = vunpack.c.l.b16 %v1068
    %v1372 = vunpack.c.h.b16 %v1068
    %v1373 = vunpack.c.l.b16 %v1069
    %v1374 = vunpack.c.h.b16 %v1069
    %v1375 = vunpack.c.l.b16 %v1070
    %v1376 = vunpack.c.h.b16 %v1070
    %v1377 = vunpack.c.l.b16 %v1071
    %v1378 = vunpack.c.h.b16 %v1071
    %v1379 = vunpack.c.l.b16 %v1072
    %v1380 = vunpack.c.h.b16 %v1072
    %v1381 = vunpack.c.l.b16 %v1073
    %v1382 = vunpack.c.h.b16 %v1073
    %v1383 = vunpack.c.l.b16 %v1074
    %v1384 = vunpack.c.h.b16 %v1074
    %v1385 = vunpack.c.l.b16 %v1075
    %v1386 = vunpack.c.h.b16 %v1075
    %v1387 = vunpack.c.l.b16 %v1076
    %v1388 = vunpack.c.h.b16 %v1076
    %v1389 = vunpack.c.l.b16 %v1077
    %v1390 = vunpack.c.h.b16 %v1077
    %v1391 = vunpack.c.l.b16 %v1078
    %v1392 = vunpack.c.h.b16 %v1078
    %v1393 = vunpack.c.l.b16 %v1079
    %v1394 = vunpack.c.h.b16 %v1079
    %v1395 = vunpack.c.l.b16 %v1080
    %v1396 = vunpack.c.h.b16 %v1080
    %v1397 = vunpack.c.l.b16 %v1081
    %v1398 = vunpack.c.h.b16 %v1081
    %v1399 = vunpack.c.l.b16 %v1082
    %v1400 = vunpack.c.h.b16 %v1082
    %v1401 = vunpack.c.l.b16 %v1083
    %v1402 = vunpack.c.h.b16 %v1083
    %v1403 = vunpack.c.l.b16 %v1084
    %v1404 = vunpack.c.h.b16 %v1084
    %v1405 = vunpack.c.l.b16 %v1085
    %v1406 = vunpack.c.h.b16 %v1085
    %v1407 = vunpack.c.l.b16 %v1086
    %v1408 = vunpack.c.h.b16 %v1086
    %v1409 = vunpack.c.l.b16 %v1087
    %v1410 = vunpack.c.h.b16 %v1087
    %v1411 = vunpack.c.l.b16 %v1088
    %v1412 = vunpack.c.h.b16 %v1088
    %v1413 = vunpack.c.l.b16 %v1089
    %v1414 = vunpack.c.h.b16 %v1089
    %v1415 = vunpack.c.l.b16 %v1090
    %v1416 = vunpack.c.h.b16 %v1090
    %v1417 = vunpack.c.l.b16 %v1091
    %v1418 = vunpack.c.h.b16 %v1091
    %v1419 = vunpack.c.l.b16 %v1092
    %v1420 = vunpack.c.h.b16 %v1092
    %v1421 = vunpack.c.l.b16 %v1093
    %v1422 = vunpack.c.h.b16 %v1093
    %v1423 = vunpack.c.l.b16 %v1094
    %v1424 = vunpack.c.h.b16 %v1094
    %v1425 = vunpack.c.l.b16 %v1095
    %v1426 = vunpack.c.h.b16 %v1095
    %v1427 = vunpack.c.l.b16 %v1096
    %v1428 = vunpack.c.h.b16 %v1096
    %v1429 = vunpack.c.l.b16 %v1097
    %v1430 = vunpack.c.h.b16 %v1097
    %v1431 = vunpack.c.l.b16 %v1098
    %v1432 = vunpack.c.h.b16 %v1098
    %v1433 = vunpack.c.l.b16 %v1099
    %v1434 = vunpack.c.h.b16 %v1099
    %v1435 = vunpack.c.l.b16 %v1100
    %v1436 = vunpack.c.h.b16 %v1100
    %v1437 = vunpack.c.l.b16 %v1101
    %v1438 = vunpack.c.h.b16 %v1101
    %v1439 = vunpack.c.l.b16 %v1102
    %v1440 = vunpack.c.h.b16 %v1102
    %v1441 = vunpack.c.l.b16 %v1103
    %v1442 = vunpack.c.h.b16 %v1103
    %v1443 = vunpack.c.l.b16 %v1104
    %v1444 = vunpack.c.h.b16 %v1104
    %v1445 = vunpack.c.l.b16 %v1105
    %v1446 = vunpack.c.h.b16 %v1105
    %v1447 = vunpack.c.l.b16 %v1106
    %v1448 = vunpack.c.h.b16 %v1106
    %v1449 = vunpack.c.l.b16 %v1107
    %v1450 = vunpack.c.h.b16 %v1107
    %v1451 = vunpack.c.l.b16 %v1108
    %v1452 = vunpack.c.h.b16 %v1108
    %v1453 = vunpack.c.l.b16 %v1109
    %v1454 = vunpack.c.h.b16 %v1109
    %v1455 = vunpack.c.l.b16 %v1110
    %v1456 = vunpack.c.h.b16 %v1110
    %v1457 = vunpack.c.l.b16 %v1111
    %v1458 = vunpack.c.h.b16 %v1111
    %v1459 = vunpack.c.l.b16 %v1112
    %v1460 = vunpack.c.h.b16 %v1112
    %v1461 = vunpack.c.l.b16 %v1113
    %v1462 = vunpack.c.h.b16 %v1113
    %v1463 = vunpack.c.l.b16 %v1114
    %v1464 = vunpack.c.h.b16 %v1114
    %v1465 = vunpack.c.l.b16 %v1115
    %v1466 = vunpack.c.h.b16 %v1115
    %v1467 = vunpack.c.l.b16 %v1116
    %v1468 = vunpack.c.h.b16 %v1116
    %v1469 = vunpack.c.l.b16 %v1117
    %v1470 = vunpack.c.h.b16 %v1117
    %v1471 = vunpack.c.l.b16 %v1118
    %v1472 = vunpack.c.h.b16 %v1118
    %v1473 = vunpack.c.l.b16 %v1119
    %v1474 = vunpack.c.h.b16 %v1119
    %v1475 = vunpack.c.l.b16 %v1120
    %v1476 = vunpack.c.h.b16 %v1120
    %v1477 = vunpack.c.l.b16 %v1121
    %v1478 = vunpack.c.h.b16 %v1121
    %v1479 = vunpack.c.l.b16 %v1122
    %v1480 = vunpack.c.h.b16 %v1122
    %v1481 = vunpack.c.l.b16 %v1123
    %v1482 = vunpack.c.h.b16 %v1123
    %v1483 = vunpack.c.l.b16 %v1124
    %v1484 = vunpack.c.h.b16 %v1124
    %v1485 = vunpack.c.l.b16 %v1125
    %v1486 = vunpack.c.h.b16 %v1125
    %v1487 = vunpack.c.l.b16 %v1126
    %v1488 = vunpack.c.h.b16 %v1126
    %v1489 = vunpack.c.l.b16 %v1127
    %v1490 = vunpack.c.h.b16 %v1127
    %v1491 = vunpack.c.l.b16 %v1128
    %v1492 = vunpack.c.h.b16 %v1128
    %v1493 = vunpack.c.l.b16 %v1129
    %v1494 = vunpack.c.h.b16 %v1129
    %v1495 = vunpack.c.l.b16 %v1130
    %v1496 = vunpack.c.h.b16 %v1130
    %v1497 = vunpack.c.l.b16 %v1131
    %v1498 = vunpack.c.h.b16 %v1131
    %v1499 = vunpack.c.l.b16 %v1132
    %v1500 = vunpack.c.h.b16 %v1132
    %v1501 = vunpack.c.l.b16 %v1133
    %v1502 = vunpack.c.h.b16 %v1133
    %v1503 = vunpack.c.l.b16 %v1134
    %v1504 = vunpack.c.h.b16 %v1134
    %v1505 = vunpack.c.l.b16 %v1135
    %v1506 = vunpack.c.h.b16 %v1135
    %v1507 = vunpack.c.l.b16 %v1136
    %v1508 = vunpack.c.h.b16 %v1136
    %v1509 = vunpack.c.l.b16 %v1137
    %v1510 = vunpack.c.h.b16 %v1137
    %v1511 = vunpack.c.l.b16 %v1138
    %v1512 = vunpack.c.h.b16 %v1138
    %v1513 = vunpack.c.l.b16 %v1139
    %v1514 = vunpack.c.h.b16 %v1139
    %v1515 = vunpack.c.l.b16 %v1140
    %v1516 = vunpack.c.h.b16 %v1140
    %v1517 = vunpack.c.l.b16 %v1141
    %v1518 = vunpack.c.h.b16 %v1141
    %v1519 = vunpack.c.l.b16 %v1142
    %v1520 = vunpack.c.h.b16 %v1142
    %v1521 = vunpack.c.l.b16 %v1143
    %v1522 = vunpack.c.h.b16 %v1143
    %v1523 = vunpack.c.l.b16 %v1144
    %v1524 = vunpack.c.h.b16 %v1144
    %v1525 = vunpack.c.l.b16 %v1145
    %v1526 = vunpack.c.h.b16 %v1145
    %v1527 = vunpack.c.l.b16 %v1146
    %v1528 = vunpack.c.h.b16 %v1146
    %v1529 = vunpack.c.l.b16 %v1147
    %v1530 = vunpack.c.h.b16 %v1147
    %v1531 = vunpack.c.l.b16 %v1148
    %v1532 = vunpack.c.h.b16 %v1148
    %v1533 = vpack.c.b16 %v1281, %v1277
    %v1534 = vpack.c.b16 %v1282, %v1278
    %v1535 = vpack.c.b16 %v1283, %v1279
    %v1536 = vpack.c.b16 %v1284, %v1280
    %v1537 = vpack.c.b16 %v1289, %v1285
    %v1538 = vpack.c.b16 %v1290, %v1286
    %v1539 = vpack.c.b16 %v1291, %v1287
    %v1540 = vpack.c.b16 %v1292, %v1288
    %v1541 = vpack.c.b16 %v1297, %v1293
    %v1542 = vpack.c.b16 %v1298, %v1294
    %v1543 = vpack.c.b16 %v1299, %v1295
    %v1544 = vpack.c.b16 %v1300, %v1296
    %v1545 = vpack.c.b16 %v1305, %v1301
    %v1546 = vpack.c.b16 %v1306, %v1302
    %v1547 = vpack.c.b16 %v1307, %v1303
    %v1548 = vpack.c.b16 %v1308, %v1304
    %v1549 = vpack.c.b16 %v1313, %v1309
    %v1550 = vpack.c.b16 %v1314, %v1310
    %v1551 = vpack.c.b16 %v1315, %v1311
    %v1552 = vpack.c.b16 %v1316, %v1312
    %v1553 = vpack.c.b16 %v1321, %v1317
    %v1554 = vpack.c.b16 %v1322, %v1318
    %v1555 = vpack.c.b16 %v1323, %v1319
    %v1556 = vpack.c.b16 %v1324, %v1320
    %v1557 = vpack.c.b16 %v1329, %v1325
    %v1558 = vpack.c.b16 %v1330, %v1326
    %v1559 = vpack.c.b16 %v1331, %v1327
    %v1560 = vpack.c.b16 %v1332, %v1328
    %v1561 = vpack.c.b16 %v1337, %v1333
    %v1562 = vpack.c.b16 %v1338, %v1334
    %v1563 = vpack.c.b16 %v1339, %v1335
    %v1564 = vpack.c.b16 %v1340, %v1336
    %v1565 = vpack.c.b16 %v1345, %v1341
    %v1566 = vpack.c.b16 %v1346, %v1342
    %v1567 = vpack.c.b16 %v1347, %v1343
    %v1568 = vpack.c.b16 %v1348, %v1344
    %v1569 = vpack.c.b16 %v1353, %v1349
    %v1570 = vpack.c.b16 %v1354, %v1350
    %v1571 = vpack.c.b16 %v1355, %v1351
    %v1572 = vpack.c.b16 %v1356, %v1352
    %v1573 = vpack.c.b16 %v1361, %v1357
    %v1574 = vpack.c.b16 %v1362, %v1358
    %v1575 = vpack.c.b16 %v1363, %v1359
    %v1576 = vpack.c.b16 %v1364, %v1360
    %v1577 = vpack.c.b16 %v1369, %v1365
    %v1578 = vpack.c.b16 %v1370, %v1366
    %v1579 = vpack.c.b16 %v1371, %v1367
    %v1580 = vpack.c.b16 %v1372, %v1368
    %v1581 = vpack.c.b16 %v1377, %v1373
    %v1582 = vpack.c.b16 %v1378, %v1374
    %v1583 = vpack.c.b16 %v1379, %v1375
    %v1584 = vpack.c.b16 %v1380, %v1376
    %v1585 = vpack.c.b16 %v1385, %v1381
    %v1586 = vpack.c.b16 %v1386, %v1382
    %v1587 = vpack.c.b16 %v1387, %v1383
    %v1588 = vpack.c.b16 %v1388, %v1384
    %v1589 = vpack.c.b16 %v1393, %v1389
    %v1590 = vpack.c.b16 %v1394, %v1390
    %v1591 = vpack.c.b16 %v1395, %v1391
    %v1592 = vpack.c.b16 %v1396, %v1392
    %v1593 = vpack.c.b16 %v1401, %v1397
    %v1594 = vpack.c.b16 %v1402, %v1398
    %v1595 = vpack.c.b16 %v1403, %v1399
    %v1596 = vpack.c.b16 %v1404, %v1400
    %v1597 = vpack.c.b16 %v1409, %v1405
    %v1598 = vpack.c.b16 %v1410, %v1406
    %v1599 = vpack.c.b16 %v1411, %v1407
    %v1600 = vpack.c.b16 %v1412, %v1408
    %v1601 = vpack.c.b16 %v1417, %v1413
    %v1602 = vpack.c.b16 %v1418, %v1414
    %v1603 = vpack.c.b16 %v1419, %v1415
    %v1604 = vpack.c.b16 %v1420, %v1416
    %v1605 = vpack.c.b16 %v1425, %v1421
    %v1606 = vpack.c.b16 %v1426, %v1422
    %v1607 = vpack.c.b16 %v1427, %v1423
    %v1608 = vpack.c.b16 %v1428, %v1424
    %v1609 = vpack.c.b16 %v1433, %v1429
    %v1610 = vpack.c.b16 %v1434, %v1430
    %v1611 = vpack.c.b16 %v1435, %v1431
    %v1612 = vpack.c.b16 %v1436, %v1432
    %v1613 = vpack.c.b16 %v1441, %v1437
    %v1614 = vpack.c.b16 %v1442, %v1438
    %v1615 = vpack.c.b16 %v1443, %v1439
    %v1616 = vpack.c.b16 %v1444, %v1440
    %v1617 = vpack.c.b16 %v1449, %v1445
    %v1618 = vpack.c.b16 %v1450, %v1446
    %v1619 = vpack.c.b16 %v1451, %v1447
    %v1620 = vpack.c.b16 %v1452, %v1448
    %v1621 = vpack.c.b16 %v1457, %v1453
    %v1622 = vpack.c.b16 %v1458, %v1454
    %v1623 = vpack.c.b16 %v1459, %v1455
    %v1624 = vpack.c.b16 %v1460, %v1456
    %v1625 = vpack.c.b16 %v1465, %v1461
    %v1626 = vpack.c.b16 %v1466, %v1462
    %v1627 = vpack.c.b16 %v1467, %v1463
    %v1628 = vpack.c.b16 %v1468, %v1464
    %v1629 = vpack.c.b16 %v1473, %v1469
    %v1630 = vpack.c.b16 %v1474, %v1470
    %v1631 = vpack.c.b16 %v1475, %v1471
    %v1632 = vpack.c.b16 %v1476, %v1472
    %v1633 = vpack.c.b16 %v1481, %v1477
    %v1634 = vpack.c.b16 %v1482, %v1478
    %v1635 = vpack.c.b16 %v1483, %v1479
    %v1636 = vpack.c.b16 %v1484, %v1480
    %v1637 = vpack.c.b16 %v1489, %v1485
    %v1638 = vpack.c.b16 %v1490, %v1486
    %v1639 = vpack.c.b16 %v1491, %v1487
    %v1640 = vpack.c.b16 %v1492, %v1488
    %v1641 = vpack.c.b16 %v1497, %v1493
    %v1642 = vpack.c.b16 %v1498, %v1494
    %v1643 = vpack.c.b16 %v1499, %v1495
    %v1644 = vpack.c.b16 %v1500, %v1496
    %v1645 = vpack.c.b16 %v1505, %v1501
    %v1646 = vpack.c.b16 %v1506, %v1502
    %v1647 = vpack.c.b16 %v1507, %v1503
    %v1648 = vpack.c.b16 %v1508, %v1504
    %v1649 = vpack.c.b16 %v1513, %v1509
    %v1650 = vpack.c.b16 %v1514, %v1510
    %v1651 = vpack.c.b16 %v1515, %v1511
    %v1652 = vpack.c.b16 %v1516, %v1512
    %v1653 = vpack.c.b16 %v1521, %v1517
    %v1654 = vpack.c.b16 %v1522, %v1518
    %v1655 = vpack.c.b16 %v1523, %v1519
    %v1656 = vpack.c.b16 %v1524, %v1520
    %v1657 = vpack.c.b16 %v1529, %v1525
    %v1658 = vpack.c.b16 %v1530, %v1526
    %v1659 = vpack.c.b16 %v1531, %v1527
    %v1660 = vpack.c.b16 %v1532, %v1528
    %1789 = vmatprep.subr.bf16.mxu0 %v1534
    %1790 = vmatpush1.bf16.msra.mxu0 %v1533
    %1791 = vmatprep.subr.bf16.mxu0 %v1538
    %1792 = vmatpush1.bf16.msra.mxu0 %v1537
    %1793 = vmatprep.subr.bf16.mxu0 %v1542
    %1794 = vmatpush1.bf16.msra.mxu0 %v1541
    %1795 = vmatprep.subr.bf16.mxu0 %v1546
    %1796 = vmatpush1.bf16.msra.mxu0 %v1545
    %1797 = vmatprep.subr.bf16.mxu0 %v1550
    %1798 = vmatpush1.bf16.msra.mxu0 %v1549
    %1799 = vmatprep.subr.bf16.mxu0 %v1554
    %1800 = vmatpush1.bf16.msra.mxu0 %v1553
    %1801 = vmatprep.subr.bf16.mxu0 %v1558
    %1802 = vmatpush1.bf16.msra.mxu0 %v1557
    %1803 = vmatprep.subr.bf16.mxu0 %v1562
    %1804 = vmatpush1.bf16.msra.mxu0 %v1561
    %1805 = vmatprep.subr.bf16.mxu0 %v1566
    %1806 = vmatpush1.bf16.msra.mxu0 %v1565
    %1807 = vmatprep.subr.bf16.mxu0 %v1570
    %1808 = vmatpush1.bf16.msra.mxu0 %v1569
    %1809 = vmatprep.subr.bf16.mxu0 %v1574
    %1810 = vmatpush1.bf16.msra.mxu0 %v1573
    %1811 = vmatprep.subr.bf16.mxu0 %v1578
    %1812 = vmatpush1.bf16.msra.mxu0 %v1577
    %1813 = vmatprep.subr.bf16.mxu0 %v1582
    %1814 = vmatpush1.bf16.msra.mxu0 %v1581
    %1815 = vmatprep.subr.bf16.mxu0 %v1586
    %1816 = vmatpush1.bf16.msra.mxu0 %v1585
    %1817 = vmatprep.subr.bf16.mxu0 %v1590
    %1818 = vmatpush1.bf16.msra.mxu0 %v1589
    %1819 = vmatprep.subr.bf16.mxu0 %v1594
    %1820 = vmatpush1.bf16.msra.mxu0 %v1593
    %1821 = vmatprep.mubr.bf16.mxu0 %v73
    %1822 = vmatmul.mubr.bf16.gmra.mrb[0].mxu0 %v72
    %v1823 = vpop.f32.mrb[0].mxu0
    %v1824 = vadd.f32 0.0, %v1823
    %v1825 = vpop.f32.mrb[0].mxu0
    %v1826 = vadd.f32 0.0, %v1825
    %v1827 = vpop.f32.mrb[0].mxu0
    %v1828 = vpop.f32.mrb[0].mxu0
    %1829 = vdwg.mxu0
    %1830 = vmatprep.subr.bf16.mxu0 %v1598
    %1831 = vmatpush1.bf16.msra.mxu0 %v1597
    %1832 = vmatprep.subr.bf16.mxu0 %v1602
    %1833 = vmatpush1.bf16.msra.mxu0 %v1601
    %1834 = vmatprep.subr.bf16.mxu0 %v1606
    %1835 = vmatpush1.bf16.msra.mxu0 %v1605
    %1836 = vmatprep.subr.bf16.mxu0 %v1610
    %1837 = vmatpush1.bf16.msra.mxu0 %v1609
    %1838 = vmatprep.subr.bf16.mxu0 %v1614
    %1839 = vmatpush1.bf16.msra.mxu0 %v1613
    %1840 = vmatprep.subr.bf16.mxu0 %v1618
    %1841 = vmatpush1.bf16.msra.mxu0 %v1617
    %1842 = vmatprep.subr.bf16.mxu0 %v1622
    %1843 = vmatpush1.bf16.msra.mxu0 %v1621
    %1844 = vmatprep.subr.bf16.mxu0 %v1626
    %1845 = vmatpush1.bf16.msra.mxu0 %v1625
    %1846 = vmatprep.subr.bf16.mxu0 %v1630
    %1847 = vmatpush1.bf16.msra.mxu0 %v1629
    %1848 = vmatprep.subr.bf16.mxu0 %v1634
    %1849 = vmatpush1.bf16.msra.mxu0 %v1633
    %1850 = vmatprep.subr.bf16.mxu0 %v1638
    %1851 = vmatpush1.bf16.msra.mxu0 %v1637
    %1852 = vmatprep.subr.bf16.mxu0 %v1642
    %1853 = vmatpush1.bf16.msra.mxu0 %v1641
    %1854 = vmatprep.subr.bf16.mxu0 %v1646
    %1855 = vmatpush1.bf16.msra.mxu0 %v1645
    %1856 = vmatprep.subr.bf16.mxu0 %v1650
    %1857 = vmatpush1.bf16.msra.mxu0 %v1649
    %1858 = vmatprep.subr.bf16.mxu0 %v1654
    %1859 = vmatpush1.bf16.msra.mxu0 %v1653
    %1860 = vmatprep.subr.bf16.mxu0 %v1658
    %1861 = vmatpush1.bf16.msra.mxu0 %v1657
    %1862 = vmatprep.mubr.bf16.mxu0 %v75
    %1863 = vmatmul.mubr.bf16.gmra.mrb[0].mxu0 %v74
    %v1864 = vpop.f32.mrb[0].mxu0
    %v1865 = vadd.f32 %v1824, %v1864
    %v1866 = vpop.f32.mrb[0].mxu0
    %v1867 = vadd.f32 %v1826, %v1866
    %v1868 = vpop.f32.mrb[0].mxu0
    %v1869 = vpop.f32.mrb[0].mxu0
    %1870 = vdwg.mxu0
    %1871 = vmatprep.subr.bf16.mxu0 %v1536
    %1872 = vmatpush1.bf16.msra.mxu0 %v1535
    %1873 = vmatprep.subr.bf16.mxu0 %v1540
    %1874 = vmatpush1.bf16.msra.mxu0 %v1539
    %1875 = vmatprep.subr.bf16.mxu0 %v1544
    %1876 = vmatpush1.bf16.msra.mxu0 %v1543
    %1877 = vmatprep.subr.bf16.mxu0 %v1548
    %1878 = vmatpush1.bf16.msra.mxu0 %v1547
    %1879 = vmatprep.subr.bf16.mxu0 %v1552
    %1880 = vmatpush1.bf16.msra.mxu0 %v1551
    %1881 = vmatprep.subr.bf16.mxu0 %v1556
    %1882 = vmatpush1.bf16.msra.mxu0 %v1555
    %1883 = vmatprep.subr.bf16.mxu0 %v1560
    %1884 = vmatpush1.bf16.msra.mxu0 %v1559
    %1885 = vmatprep.subr.bf16.mxu0 %v1564
    %1886 = vmatpush1.bf16.msra.mxu0 %v1563
    %1887 = vmatprep.subr.bf16.mxu0 %v1568
    %1888 = vmatpush1.bf16.msra.mxu0 %v1567
    %1889 = vmatprep.subr.bf16.mxu0 %v1572
    %1890 = vmatpush1.bf16.msra.mxu0 %v1571
    %1891 = vmatprep.subr.bf16.mxu0 %v1576
    %1892 = vmatpush1.bf16.msra.mxu0 %v1575
    %1893 = vmatprep.subr.bf16.mxu0 %v1580
    %1894 = vmatpush1.bf16.msra.mxu0 %v1579
    %1895 = vmatprep.subr.bf16.mxu0 %v1584
    %1896 = vmatpush1.bf16.msra.mxu0 %v1583
    %1897 = vmatprep.subr.bf16.mxu0 %v1588
    %1898 = vmatpush1.bf16.msra.mxu0 %v1587
    %1899 = vmatprep.subr.bf16.mxu0 %v1592
    %1900 = vmatpush1.bf16.msra.mxu0 %v1591
    %1901 = vmatprep.subr.bf16.mxu0 %v1596
    %1902 = vmatpush1.bf16.msra.mxu0 %v1595
    %1903 = vmatprep.mubr.bf16.mxu0 %v73
    %1904 = vmatmul.mubr.bf16.gmra.mrb[0].mxu0 %v72
    %v1905 = vpop.f32.mrb[0].mxu0
    %v1906 = vadd.f32 0.0, %v1905
    %v1907 = vpop.f32.mrb[0].mxu0
    %v1908 = vadd.f32 0.0, %v1907
    %v1909 = vpop.f32.mrb[0].mxu0
    %v1910 = vpop.f32.mrb[0].mxu0
    %1911 = vdwg.mxu0
    %1912 = vmatprep.subr.bf16.mxu0 %v1600
    %1913 = vmatpush1.bf16.msra.mxu0 %v1599
    %1914 = vmatprep.subr.bf16.mxu0 %v1604
    %1915 = vmatpush1.bf16.msra.mxu0 %v1603
    %1916 = vmatprep.subr.bf16.mxu0 %v1608
    %1917 = vmatpush1.bf16.msra.mxu0 %v1607
    %1918 = vmatprep.subr.bf16.mxu0 %v1612
    %1919 = vmatpush1.bf16.msra.mxu0 %v1611
    %1920 = vmatprep.subr.bf16.mxu0 %v1616
    %1921 = vmatpush1.bf16.msra.mxu0 %v1615
    %1922 = vmatprep.subr.bf16.mxu0 %v1620
    %1923 = vmatpush1.bf16.msra.mxu0 %v1619
    %1924 = vmatprep.subr.bf16.mxu0 %v1624
    %1925 = vmatpush1.bf16.msra.mxu0 %v1623
    %1926 = vmatprep.subr.bf16.mxu0 %v1628
    %1927 = vmatpush1.bf16.msra.mxu0 %v1627
    %1928 = vmatprep.subr.bf16.mxu0 %v1632
    %1929 = vmatpush1.bf16.msra.mxu0 %v1631
    %1930 = vmatprep.subr.bf16.mxu0 %v1636
    %1931 = vmatpush1.bf16.msra.mxu0 %v1635
    %1932 = vmatprep.subr.bf16.mxu0 %v1640
    %1933 = vmatpush1.bf16.msra.mxu0 %v1639
    %1934 = vmatprep.subr.bf16.mxu0 %v1644
    %1935 = vmatpush1.bf16.msra.mxu0 %v1643
    %1936 = vmatprep.subr.bf16.mxu0 %v1648
    %1937 = vmatpush1.bf16.msra.mxu0 %v1647
    %1938 = vmatprep.subr.bf16.mxu0 %v1652
    %1939 = vmatpush1.bf16.msra.mxu0 %v1651
    %1940 = vmatprep.subr.bf16.mxu0 %v1656
    %1941 = vmatpush1.bf16.msra.mxu0 %v1655
    %1942 = vmatprep.subr.bf16.mxu0 %v1660
    %1943 = vmatpush1.bf16.msra.mxu0 %v1659
    %1944 = vmatprep.mubr.bf16.mxu0 %v75
    %1945 = vmatmul.mubr.bf16.gmra.mrb[0].mxu0 %v74
    %v1946 = vpop.f32.mrb[0].mxu0
    %v1947 = vadd.f32 %v1906, %v1946
    %v1948 = vpop.f32.mrb[0].mxu0
    %v1949 = vadd.f32 %v1908, %v1948
    %v1950 = vpop.f32.mrb[0].mxu0
    %v1951 = vpop.f32.mrb[0].mxu0
    %1952 = vdwg.mxu0
    %v1953 = vld [vmem:[%s3] sm:$0x1]
    %v1954 = vld [vmem:[%s4] sm:$0x1]
    %v1955 = vld [vmem:[%s5] sm:$0xff]
    %v1956 = vld [vmem:[%s6] sm:$0xff]
    %s1957 = scalar_lea.vmem %s5, %s67
    %v1958 = vld [vmem:[%s1957] sm:$0xff]
    %s1959 = scalar_lea.vmem %s6, %s67
    %v1960 = vld [vmem:[%s1959] sm:$0xff]
    %v1961 = vlaneseq
    %v1962 = vshrl.u32 %v1961, 7
    %v1963 = vadd.s32 %v1962, 8
    %v1964 = vlaneseq
    %v1965 = vand.u32 %v1964, 127
    %vm1966 = vcmp.lt.s32.totalorder %v1962, 0
    %v1967 = vsub.s32 0, %v1962
    %v1968 = vsel %vm1966, %v1967, %v1962
    %v1969 = vshrl.u32 %v1968, 3
    %v1970 = vand.u32 %v1968, 7
    %v1971 = vsub.s32 0, %v1970
    %v1972 = vsel %vm1966, %v1971, %v1970
    %vm1973 = vcmp.lt.s32.totalorder %v1963, 0
    %v1974 = vsub.s32 0, %v1963
    %v1975 = vsel %vm1973, %v1974, %v1963
    %v1976 = vshrl.u32 %v1975, 3
    %v1977 = vand.u32 %v1975, 7
    %v1978 = vsub.s32 0, %v1977
    %v1979 = vsel %vm1973, %v1978, %v1977
    %vm1980 = vcmp.ne.s32.totalorder %v1972, 0
    %vm1981 = vcmp.ne.s32.totalorder %v1979, 0
    %vm1982 = vcmp.lt.s32.totalorder %v1972, 0
    %vm1983 = vcmp.lt.s32.totalorder %v1979, 0
    %vm1984 = vmand %vm1982, %vm1980
    %vm1985 = vmand %vm1983, %vm1981
    %v1986 = vadd.s32 %v1972, 8
    %v1987 = vadd.s32 %v1979, 8
    %v1988 = vsel %vm1984, %v1986, %v1972
    %v1989 = vsel %vm1985, %v1987, %v1979
    %v1990 = vstv %s67
    %v1991 = vadd.s32 %v1990, %v1988
    %v1992 = vadd.s32 %v1990, %v1989
    %vm1993 = vcmp.le.s32.totalorder %v1965, %v1991
    %vm1994 = vcmp.le.s32.totalorder %v1965, %v1992
    %v1995 = vmul.f32 %v1865, %v1865
    %1996 = vadd.xlane.f32.xlu0 %v1995
    %v1997 = vpop.xlane.xlu0 %1996
    %v1998 = vrcp.pop 128.0
    %v1999 = vmul.f32 %v1997, %v1998
    %v2000 = vadd.f32 %v1999, 1e-06
    %v2001 = vrsqrt.pop %v2000
    %v2002 = vmul.f32 %v1865, %v2001
    %v2004 = vlaneseq
    %v2005 = vshrl.u32 %v2004, 7
    %v2006 = vsub.s32 0, %v2005
    %v2007 = vrot.slane %v1954, %v2006
    %v2009 = vmul.f32 %v2002, %v2007
    %v2010 = vmul.f32 %v2009, %v1955
    %2011 = vrot.lane.b32.xlu0 %v2009, 64
    %v2012 = vpop.permute.xlu0 %2011
    %v2013 = vmul.f32 %v2012, %v1956
    %v2014 = vadd.f32 %v2010, %v2013
    %v2015 = vpack.c.bf16 %v2014, %v2014
    %v2016 = vpack.c.bf16 %v1947, %v1947
    %v2017 = vmul.f32 %v933, %v933
    %2018 = vadd.xlane.f32.xlu0 %v2017
    %v2019 = vpop.xlane.xlu0 %2018
    %v2020 = vmul.f32 %v2019, %v1998
    %v2021 = vadd.f32 %v2020, 1e-06
    %v2022 = vrsqrt.pop %v2021
    %v2023 = vmul.f32 %v933, %v2022
    %v2025 = vlaneseq
    %v2026 = vshrl.u32 %v2025, 7
    %v2027 = vsub.s32 0, %v2026
    %v2028 = vrot.slane %v1953, %v2027
    %v2030 = vmul.f32 %v2023, %v2028
    %v2031 = vmul.f32 %v2030, %v1958
    %2032 = vrot.lane.b32.xlu0 %v2030, 64
    %v2033 = vpop.permute.xlu0 %2032
    %v2034 = vmul.f32 %v2033, %v1960
    %v2035 = vadd.f32 %v2031, %v2034
    %v2036 = vmul.f32 %v935, %v935
    %2037 = vadd.xlane.f32.xlu0 %v2036
    %v2038 = vpop.xlane.xlu0 %2037
    %v2039 = vmul.f32 %v2038, %v1998
    %v2040 = vadd.f32 %v2039, 1e-06
    %v2041 = vrsqrt.pop %v2040
    %v2042 = vmul.f32 %v935, %v2041
    %v2043 = vmul.f32 %v2042, %v2028
    %v2044 = vmul.f32 %v2043, %v1958
    %2045 = vrot.lane.b32.xlu0 %v2043, 64
    %v2046 = vpop.permute.xlu0 %2045
    %v2047 = vmul.f32 %v2046, %v1960
    %v2048 = vadd.f32 %v2044, %v2047
    %v2049 = vpack.c.bf16 %v2048, %v2035
    %2050 = vmatprep.subr.bf16.mxu0 0
    %2051 = vmatpush1.bf16.xpose.msra.mxu0 %v2015
    %2052 = vmatprep.subr.bf16.mxu0 0
    %2053 = vmatpush1.bf16.xpose.msra.mxu0 0
    %2054 = vmatprep.subr.bf16.mxu0 0
    %2055 = vmatpush1.bf16.xpose.msra.mxu0 0
    %2056 = vmatprep.subr.bf16.mxu0 0
    %2057 = vmatpush1.bf16.xpose.msra.mxu0 0
    %2058 = vmatprep.subr.bf16.mxu0 0
    %2059 = vmatpush1.bf16.xpose.msra.mxu0 0
    %2060 = vmatprep.subr.bf16.mxu0 0
    %2061 = vmatpush1.bf16.xpose.msra.mxu0 0
    %2062 = vmatprep.subr.bf16.mxu0 0
    %2063 = vmatpush1.bf16.xpose.msra.mxu0 0
    %2064 = vmatprep.subr.bf16.mxu0 0
    %2065 = vmatpush1.bf16.xpose.msra.mxu0 0
    %2066 = vmatprep.subr.bf16.mxu0 0
    %2067 = vmatpush1.bf16.xpose.msra.mxu0 0
    %2068 = vmatprep.subr.bf16.mxu0 0
    %2069 = vmatpush1.bf16.xpose.msra.mxu0 0
    %2070 = vmatprep.subr.bf16.mxu0 0
    %2071 = vmatpush1.bf16.xpose.msra.mxu0 0
    %2072 = vmatprep.subr.bf16.mxu0 0
    %2073 = vmatpush1.bf16.xpose.msra.mxu0 0
    %2074 = vmatprep.subr.bf16.mxu0 0
    %2075 = vmatpush1.bf16.xpose.msra.mxu0 0
    %2076 = vmatprep.subr.bf16.mxu0 0
    %2077 = vmatpush1.bf16.xpose.msra.mxu0 0
    %2078 = vmatprep.subr.bf16.mxu0 0
    %2079 = vmatpush1.bf16.xpose.msra.mxu0 0
    %2080 = vmatprep.subr.bf16.mxu0 0
    %2081 = vmatpush1.bf16.xpose.msra.mxu0 0
    %2082 = vmatprep.mubr.bf16.mxu0 0
    %2083 = vmatmul.mubr.bf16.gmra.mrb[0].mxu0 %v2049
    %v2084 = vpop.f32.mrb[0].mxu0
    %v2085 = vadd.f32 0.0, %v2084
    %v2086 = vpop.f32.mrb[0].mxu0
    %v2087 = vpop.f32.mrb[0].mxu0
    %v2088 = vadd.f32 0.0, %v2087
    %v2089 = vpop.f32.mrb[0].mxu0
    %2090 = vdwg.mxu0
    %v2091 = vsel %vm1993, %v2085, -1e+30
    %v2092 = vsel %vm1994, %v2088, -1e+30
    %vm2093 = vcmask 64512
    %v2094 = vsel %vm2093, %v2091, -inf
    %2095 = vmax.xlane.f32.xlu0 %v2094
    %v2096 = vpop.xlane.xlu0 %2095
    %v2097 = vsel %vm2093, %v2092, -inf
    %2098 = vmax.xlane.f32.xlu0 %v2097
    %v2099 = vpop.xlane.xlu0 %2098
    %v2100 = vsub.f32 %v2091, %v2096
    %v2101 = vsub.f32 %v2092, %v2099
    %v2102 = vmul.f32 %v2100, 1.442695
    %v2103 = vpow.pop %v2102
    %v2104 = vmul.f32 %v2101, 1.442695
    %v2105 = vpow.pop %v2104
    %v2106 = vsel %vm2093, %v2103, 0.0
    %2107 = vadd.xlane.f32.xlu0 %v2106
    %v2108 = vpop.xlane.xlu0 %2107
    %v2109 = vsel %vm2093, %v2105, 0.0
    %2110 = vadd.xlane.f32.xlu0 %v2109
    %v2111 = vpop.xlane.xlu0 %2110
    %v2112 = vrcp.pop %v2108
    %v2113 = vrcp.pop %v2111
    %v2114 = vmul.f32 %v2103, %v2112
    %v2115 = vmul.f32 %v2105, %v2113
    %v2116 = vpack.c.bf16 %v2115, %v2114
    %v2118 = vsel %vm2093, %v2116, 0
    %vm2120 = vcmask 1043456
    %v2122 = vsel %vm2120, %v2016, 0
    %2124 = vmatprep.subr.bf16.mxu0 0
    %2125 = vmatpush1.bf16.msra.mxu0 %v2122
    %2126 = vmatprep.subr.bf16.mxu0 0
    %2127 = vmatpush1.bf16.msra.mxu0 0
    %2128 = vmatprep.subr.bf16.mxu0 0
    %2129 = vmatpush1.bf16.msra.mxu0 0
    %2130 = vmatprep.subr.bf16.mxu0 0
    %2131 = vmatpush1.bf16.msra.mxu0 0
    %2132 = vmatprep.subr.bf16.mxu0 0
    %2133 = vmatpush1.bf16.msra.mxu0 0
    %2134 = vmatprep.subr.bf16.mxu0 0
    %2135 = vmatpush1.bf16.msra.mxu0 0
    %2136 = vmatprep.subr.bf16.mxu0 0
    %2137 = vmatpush1.bf16.msra.mxu0 0
    %2138 = vmatprep.subr.bf16.mxu0 0
    %2139 = vmatpush1.bf16.msra.mxu0 0
    %2140 = vmatprep.subr.bf16.mxu0 0
    %2141 = vmatpush1.bf16.msra.mxu0 0
    %2142 = vmatprep.subr.bf16.mxu0 0
    %2143 = vmatpush1.bf16.msra.mxu0 0
    %2144 = vmatprep.subr.bf16.mxu0 0
    %2145 = vmatpush1.bf16.msra.mxu0 0
    %2146 = vmatprep.subr.bf16.mxu0 0
    %2147 = vmatpush1.bf16.msra.mxu0 0
    %2148 = vmatprep.subr.bf16.mxu0 0
    %2149 = vmatpush1.bf16.msra.mxu0 0
    %2150 = vmatprep.subr.bf16.mxu0 0
    %2151 = vmatpush1.bf16.msra.mxu0 0
    %2152 = vmatprep.subr.bf16.mxu0 0
    %2153 = vmatpush1.bf16.msra.mxu0 0
    %2154 = vmatprep.subr.bf16.mxu0 0
    %2155 = vmatpush1.bf16.msra.mxu0 0
    %2156 = vmatprep.mubr.bf16.mxu0 0
    %2157 = vmatmul.mubr.bf16.gmra.mrb[0].mxu0 %v2118
    %v2158 = vpop.f32.mrb[0].mxu0
    %v2159 = vadd.f32 0.0, %v2158
    %v2160 = vpop.f32.mrb[0].mxu0
    %v2161 = vpop.f32.mrb[0].mxu0
    %v2162 = vadd.f32 0.0, %v2161
    %v2163 = vpop.f32.mrb[0].mxu0
    %2164 = vdwg.mxu0
    %v2165 = vpack.c.bf16 %v2159, %v2159
    %v2166 = vld [vmem:[#allocation7] sm:$0xff]
    %v2167 = vld [vmem:[#allocation7 + $0x8] sm:$0xff]
    %v2168 = vld [vmem:[#allocation7 + $0x10] sm:$0xff]
    %v2169 = vld [vmem:[#allocation7 + $0x18] sm:$0xff]
    %v2170 = vld [vmem:[#allocation7 + $0x20] sm:$0xff]
    %v2171 = vld [vmem:[#allocation7 + $0x28] sm:$0xff]
    %v2172 = vld [vmem:[#allocation7 + $0x30] sm:$0xff]
    %v2173 = vld [vmem:[#allocation7 + $0x38] sm:$0xff]
    %v2174 = vld [vmem:[#allocation7 + $0x40] sm:$0xff]
    %v2175 = vld [vmem:[#allocation7 + $0x48] sm:$0xff]
    %v2176 = vld [vmem:[#allocation7 + $0x50] sm:$0xff]
    %v2177 = vld [vmem:[#allocation7 + $0x58] sm:$0xff]
    %v2178 = vld [vmem:[#allocation7 + $0x60] sm:$0xff]
    %v2179 = vld [vmem:[#allocation7 + $0x68] sm:$0xff]
    %v2180 = vld [vmem:[#allocation7 + $0x70] sm:$0xff]
    %v2181 = vld [vmem:[#allocation7 + $0x78] sm:$0xff]
    %v2182 = vld [vmem:[#allocation7 + $0x80] sm:$0xff]
    %v2183 = vld [vmem:[#allocation7 + $0x88] sm:$0xff]
    %v2184 = vld [vmem:[#allocation7 + $0x90] sm:$0xff]
    %v2185 = vld [vmem:[#allocation7 + $0x98] sm:$0xff]
    %v2186 = vld [vmem:[#allocation7 + $0xa0] sm:$0xff]
    %v2187 = vld [vmem:[#allocation7 + $0xa8] sm:$0xff]
    %v2188 = vld [vmem:[#allocation7 + $0xb0] sm:$0xff]
    %v2189 = vld [vmem:[#allocation7 + $0xb8] sm:$0xff]
    %v2190 = vld [vmem:[#allocation7 + $0xc0] sm:$0xff]
    %v2191 = vld [vmem:[#allocation7 + $0xc8] sm:$0xff]
    %v2192 = vld [vmem:[#allocation7 + $0xd0] sm:$0xff]
    %v2193 = vld [vmem:[#allocation7 + $0xd8] sm:$0xff]
    %v2194 = vld [vmem:[#allocation7 + $0xe0] sm:$0xff]
    %v2195 = vld [vmem:[#allocation7 + $0xe8] sm:$0xff]
    %v2196 = vld [vmem:[#allocation7 + $0xf0] sm:$0xff]
    %v2197 = vld [vmem:[#allocation7 + $0xf8] sm:$0xff]
    %v2198 = vpack.c.bf16 %v2162, %v2162
    %v2199 = vld [vmem:[#allocation7 + $0x100] sm:$0xff]
    %v2200 = vld [vmem:[#allocation7 + $0x108] sm:$0xff]
    %v2201 = vld [vmem:[#allocation7 + $0x110] sm:$0xff]
    %v2202 = vld [vmem:[#allocation7 + $0x118] sm:$0xff]
    %v2203 = vld [vmem:[#allocation7 + $0x120] sm:$0xff]
    %v2204 = vld [vmem:[#allocation7 + $0x128] sm:$0xff]
    %v2205 = vld [vmem:[#allocation7 + $0x130] sm:$0xff]
    %v2206 = vld [vmem:[#allocation7 + $0x138] sm:$0xff]
    %v2207 = vld [vmem:[#allocation7 + $0x140] sm:$0xff]
    %v2208 = vld [vmem:[#allocation7 + $0x148] sm:$0xff]
    %v2209 = vld [vmem:[#allocation7 + $0x150] sm:$0xff]
    %v2210 = vld [vmem:[#allocation7 + $0x158] sm:$0xff]
    %v2211 = vld [vmem:[#allocation7 + $0x160] sm:$0xff]
    %v2212 = vld [vmem:[#allocation7 + $0x168] sm:$0xff]
    %v2213 = vld [vmem:[#allocation7 + $0x170] sm:$0xff]
    %v2214 = vld [vmem:[#allocation7 + $0x178] sm:$0xff]
    %v2215 = vld [vmem:[#allocation7 + $0x180] sm:$0xff]
    %v2216 = vld [vmem:[#allocation7 + $0x188] sm:$0xff]
    %v2217 = vld [vmem:[#allocation7 + $0x190] sm:$0xff]
    %v2218 = vld [vmem:[#allocation7 + $0x198] sm:$0xff]
    %v2219 = vld [vmem:[#allocation7 + $0x1a0] sm:$0xff]
    %v2220 = vld [vmem:[#allocation7 + $0x1a8] sm:$0xff]
    %v2221 = vld [vmem:[#allocation7 + $0x1b0] sm:$0xff]
    %v2222 = vld [vmem:[#allocation7 + $0x1b8] sm:$0xff]
    %v2223 = vld [vmem:[#allocation7 + $0x1c0] sm:$0xff]
    %v2224 = vld [vmem:[#allocation7 + $0x1c8] sm:$0xff]
    %v2225 = vld [vmem:[#allocation7 + $0x1d0] sm:$0xff]
    %v2226 = vld [vmem:[#allocation7 + $0x1d8] sm:$0xff]
    %v2227 = vld [vmem:[#allocation7 + $0x1e0] sm:$0xff]
    %v2228 = vld [vmem:[#allocation7 + $0x1e8] sm:$0xff]
    %v2229 = vld [vmem:[#allocation7 + $0x1f0] sm:$0xff]
    %v2230 = vld [vmem:[#allocation7 + $0x1f8] sm:$0xff]
    %v2263 = vunpack.c.l.b16 %v2199
    %v2264 = vunpack.c.h.b16 %v2199
    %v2265 = vunpack.c.l.b16 %v2200
    %v2266 = vunpack.c.h.b16 %v2200
    %v2267 = vunpack.c.l.b16 %v2201
    %v2268 = vunpack.c.h.b16 %v2201
    %v2269 = vunpack.c.l.b16 %v2202
    %v2270 = vunpack.c.h.b16 %v2202
    %v2271 = vunpack.c.l.b16 %v2203
    %v2272 = vunpack.c.h.b16 %v2203
    %v2273 = vunpack.c.l.b16 %v2204
    %v2274 = vunpack.c.h.b16 %v2204
    %v2275 = vunpack.c.l.b16 %v2205
    %v2276 = vunpack.c.h.b16 %v2205
    %v2277 = vunpack.c.l.b16 %v2206
    %v2278 = vunpack.c.h.b16 %v2206
    %v2279 = vunpack.c.l.b16 %v2207
    %v2280 = vunpack.c.h.b16 %v2207
    %v2281 = vunpack.c.l.b16 %v2208
    %v2282 = vunpack.c.h.b16 %v2208
    %v2283 = vunpack.c.l.b16 %v2209
    %v2284 = vunpack.c.h.b16 %v2209
    %v2285 = vunpack.c.l.b16 %v2210
    %v2286 = vunpack.c.h.b16 %v2210
    %v2287 = vunpack.c.l.b16 %v2211
    %v2288 = vunpack.c.h.b16 %v2211
    %v2289 = vunpack.c.l.b16 %v2212
    %v2290 = vunpack.c.h.b16 %v2212
    %v2291 = vunpack.c.l.b16 %v2213
    %v2292 = vunpack.c.h.b16 %v2213
    %v2293 = vunpack.c.l.b16 %v2214
    %v2294 = vunpack.c.h.b16 %v2214
    %v2295 = vunpack.c.l.b16 %v2215
    %v2296 = vunpack.c.h.b16 %v2215
    %v2297 = vunpack.c.l.b16 %v2216
    %v2298 = vunpack.c.h.b16 %v2216
    %v2299 = vunpack.c.l.b16 %v2217
    %v2300 = vunpack.c.h.b16 %v2217
    %v2301 = vunpack.c.l.b16 %v2218
    %v2302 = vunpack.c.h.b16 %v2218
    %v2303 = vunpack.c.l.b16 %v2219
    %v2304 = vunpack.c.h.b16 %v2219
    %v2305 = vunpack.c.l.b16 %v2220
    %v2306 = vunpack.c.h.b16 %v2220
    %v2307 = vunpack.c.l.b16 %v2221
    %v2308 = vunpack.c.h.b16 %v2221
    %v2309 = vunpack.c.l.b16 %v2222
    %v2310 = vunpack.c.h.b16 %v2222
    %v2311 = vunpack.c.l.b16 %v2223
    %v2312 = vunpack.c.h.b16 %v2223
    %v2313 = vunpack.c.l.b16 %v2224
    %v2314 = vunpack.c.h.b16 %v2224
    %v2315 = vunpack.c.l.b16 %v2225
    %v2316 = vunpack.c.h.b16 %v2225
    %v2317 = vunpack.c.l.b16 %v2226
    %v2318 = vunpack.c.h.b16 %v2226
    %v2319 = vunpack.c.l.b16 %v2227
    %v2320 = vunpack.c.h.b16 %v2227
    %v2321 = vunpack.c.l.b16 %v2228
    %v2322 = vunpack.c.h.b16 %v2228
    %v2323 = vunpack.c.l.b16 %v2229
    %v2324 = vunpack.c.h.b16 %v2229
    %v2325 = vunpack.c.l.b16 %v2230
    %v2326 = vunpack.c.h.b16 %v2230
    %v2327 = vpack.c.b16 %v2267, %v2263
    %v2328 = vpack.c.b16 %v2268, %v2264
    %v2329 = vpack.c.b16 %v2269, %v2265
    %v2330 = vpack.c.b16 %v2270, %v2266
    %v2331 = vpack.c.b16 %v2275, %v2271
    %v2332 = vpack.c.b16 %v2276, %v2272
    %v2333 = vpack.c.b16 %v2277, %v2273
    %v2334 = vpack.c.b16 %v2278, %v2274
    %v2335 = vpack.c.b16 %v2283, %v2279
    %v2336 = vpack.c.b16 %v2284, %v2280
    %v2337 = vpack.c.b16 %v2285, %v2281
    %v2338 = vpack.c.b16 %v2286, %v2282
    %v2339 = vpack.c.b16 %v2291, %v2287
    %v2340 = vpack.c.b16 %v2292, %v2288
    %v2341 = vpack.c.b16 %v2293, %v2289
    %v2342 = vpack.c.b16 %v2294, %v2290
    %v2343 = vpack.c.b16 %v2299, %v2295
    %v2344 = vpack.c.b16 %v2300, %v2296
    %v2345 = vpack.c.b16 %v2301, %v2297
    %v2346 = vpack.c.b16 %v2302, %v2298
    %v2347 = vpack.c.b16 %v2307, %v2303
    %v2348 = vpack.c.b16 %v2308, %v2304
    %v2349 = vpack.c.b16 %v2309, %v2305
    %v2350 = vpack.c.b16 %v2310, %v2306
    %v2351 = vpack.c.b16 %v2315, %v2311
    %v2352 = vpack.c.b16 %v2316, %v2312
    %v2353 = vpack.c.b16 %v2317, %v2313
    %v2354 = vpack.c.b16 %v2318, %v2314
    %v2355 = vpack.c.b16 %v2323, %v2319
    %v2356 = vpack.c.b16 %v2324, %v2320
    %v2357 = vpack.c.b16 %v2325, %v2321
    %v2358 = vpack.c.b16 %v2326, %v2322
    %2391 = vmatprep.subr.bf16.mxu0 %v2328
    %2392 = vmatpush1.bf16.msra.mxu0 %v2327
    %2393 = vmatprep.subr.bf16.mxu0 %v2332
    %2394 = vmatpush1.bf16.msra.mxu0 %v2331
    %2395 = vmatprep.subr.bf16.mxu0 %v2336
    %2396 = vmatpush1.bf16.msra.mxu0 %v2335
    %2397 = vmatprep.subr.bf16.mxu0 %v2340
    %2398 = vmatpush1.bf16.msra.mxu0 %v2339
    %2399 = vmatprep.subr.bf16.mxu0 %v2344
    %2400 = vmatpush1.bf16.msra.mxu0 %v2343
    %2401 = vmatprep.subr.bf16.mxu0 %v2348
    %2402 = vmatpush1.bf16.msra.mxu0 %v2347
    %2403 = vmatprep.subr.bf16.mxu0 %v2352
    %2404 = vmatpush1.bf16.msra.mxu0 %v2351
    %2405 = vmatprep.subr.bf16.mxu0 %v2356
    %2406 = vmatpush1.bf16.msra.mxu0 %v2355
    %2407 = vmatprep.subr.bf16.mxu0 0
    %2408 = vmatpush1.bf16.msra.mxu0 0
    %2409 = vmatprep.subr.bf16.mxu0 0
    %2410 = vmatpush1.bf16.msra.mxu0 0
    %2411 = vmatprep.subr.bf16.mxu0 0
    %2412 = vmatpush1.bf16.msra.mxu0 0
    %2413 = vmatprep.subr.bf16.mxu0 0
    %2414 = vmatpush1.bf16.msra.mxu0 0
    %2415 = vmatprep.subr.bf16.mxu0 0
    %2416 = vmatpush1.bf16.msra.mxu0 0
    %2417 = vmatprep.subr.bf16.mxu0 0
    %2418 = vmatpush1.bf16.msra.mxu0 0
    %2419 = vmatprep.subr.bf16.mxu0 0
    %2420 = vmatpush1.bf16.msra.mxu0 0
    %2421 = vmatprep.subr.bf16.mxu0 0
    %2422 = vmatpush1.bf16.msra.mxu0 0
    %2423 = vmatprep.mubr.bf16.mxu0 0
    %2424 = vmatmul.mubr.bf16.gmra.mrb[0].mxu0 %v2198
    %v2425 = vpop.f32.mrb[0].mxu0
    %v2426 = vadd.f32 0.0, %v2425
    %v2427 = vpop.f32.mrb[0].mxu0
    %v2428 = vadd.f32 0.0, %v2427
    %v2429 = vpop.f32.mrb[0].mxu0
    %v2430 = vpop.f32.mrb[0].mxu0
    %2431 = vdwg.mxu0
    %2432 = vmatprep.subr.bf16.mxu0 %v2330
    %2433 = vmatpush1.bf16.msra.mxu0 %v2329
    %2434 = vmatprep.subr.bf16.mxu0 %v2334
    %2435 = vmatpush1.bf16.msra.mxu0 %v2333
    %2436 = vmatprep.subr.bf16.mxu0 %v2338
    %2437 = vmatpush1.bf16.msra.mxu0 %v2337
    %2438 = vmatprep.subr.bf16.mxu0 %v2342
    %2439 = vmatpush1.bf16.msra.mxu0 %v2341
    %2440 = vmatprep.subr.bf16.mxu0 %v2346
    %2441 = vmatpush1.bf16.msra.mxu0 %v2345
    %2442 = vmatprep.subr.bf16.mxu0 %v2350
    %2443 = vmatpush1.bf16.msra.mxu0 %v2349
    %2444 = vmatprep.subr.bf16.mxu0 %v2354
    %2445 = vmatpush1.bf16.msra.mxu0 %v2353
    %2446 = vmatprep.subr.bf16.mxu0 %v2358
    %2447 = vmatpush1.bf16.msra.mxu0 %v2357
    %2448 = vmatprep.subr.bf16.mxu0 0
    %2449 = vmatpush1.bf16.msra.mxu0 0
    %2450 = vmatprep.subr.bf16.mxu0 0
    %2451 = vmatpush1.bf16.msra.mxu0 0
    %2452 = vmatprep.subr.bf16.mxu0 0
    %2453 = vmatpush1.bf16.msra.mxu0 0
    %2454 = vmatprep.subr.bf16.mxu0 0
    %2455 = vmatpush1.bf16.msra.mxu0 0
    %2456 = vmatprep.subr.bf16.mxu0 0
    %2457 = vmatpush1.bf16.msra.mxu0 0
    %2458 = vmatprep.subr.bf16.mxu0 0
    %2459 = vmatpush1.bf16.msra.mxu0 0
    %2460 = vmatprep.subr.bf16.mxu0 0
    %2461 = vmatpush1.bf16.msra.mxu0 0
    %2462 = vmatprep.subr.bf16.mxu0 0
    %2463 = vmatpush1.bf16.msra.mxu0 0
    %2464 = vmatprep.mubr.bf16.mxu0 0
    %2465 = vmatmul.mubr.bf16.gmra.mrb[0].mxu0 %v2198
    %v2466 = vpop.f32.mrb[0].mxu0
    %v2467 = vadd.f32 0.0, %v2466
    %v2468 = vpop.f32.mrb[0].mxu0
    %v2469 = vadd.f32 0.0, %v2468
    %v2470 = vpop.f32.mrb[0].mxu0
    %v2471 = vpop.f32.mrb[0].mxu0
    %2472 = vdwg.mxu0
    %v2505 = vunpack.c.l.b16 %v2166
    %v2506 = vunpack.c.h.b16 %v2166
    %v2507 = vunpack.c.l.b16 %v2167
    %v2508 = vunpack.c.h.b16 %v2167
    %v2509 = vunpack.c.l.b16 %v2168
    %v2510 = vunpack.c.h.b16 %v2168
    %v2511 = vunpack.c.l.b16 %v2169
    %v2512 = vunpack.c.h.b16 %v2169
    %v2513 = vunpack.c.l.b16 %v2170
    %v2514 = vunpack.c.h.b16 %v2170
    %v2515 = vunpack.c.l.b16 %v2171
    %v2516 = vunpack.c.h.b16 %v2171
    %v2517 = vunpack.c.l.b16 %v2172
    %v2518 = vunpack.c.h.b16 %v2172
    %v2519 = vunpack.c.l.b16 %v2173
    %v2520 = vunpack.c.h.b16 %v2173
    %v2521 = vunpack.c.l.b16 %v2174
    %v2522 = vunpack.c.h.b16 %v2174
    %v2523 = vunpack.c.l.b16 %v2175
    %v2524 = vunpack.c.h.b16 %v2175
    %v2525 = vunpack.c.l.b16 %v2176
    %v2526 = vunpack.c.h.b16 %v2176
    %v2527 = vunpack.c.l.b16 %v2177
    %v2528 = vunpack.c.h.b16 %v2177
    %v2529 = vunpack.c.l.b16 %v2178
    %v2530 = vunpack.c.h.b16 %v2178
    %v2531 = vunpack.c.l.b16 %v2179
    %v2532 = vunpack.c.h.b16 %v2179
    %v2533 = vunpack.c.l.b16 %v2180
    %v2534 = vunpack.c.h.b16 %v2180
    %v2535 = vunpack.c.l.b16 %v2181
    %v2536 = vunpack.c.h.b16 %v2181
    %v2537 = vunpack.c.l.b16 %v2182
    %v2538 = vunpack.c.h.b16 %v2182
    %v2539 = vunpack.c.l.b16 %v2183
    %v2540 = vunpack.c.h.b16 %v2183
    %v2541 = vunpack.c.l.b16 %v2184
    %v2542 = vunpack.c.h.b16 %v2184
    %v2543 = vunpack.c.l.b16 %v2185
    %v2544 = vunpack.c.h.b16 %v2185
    %v2545 = vunpack.c.l.b16 %v2186
    %v2546 = vunpack.c.h.b16 %v2186
    %v2547 = vunpack.c.l.b16 %v2187
    %v2548 = vunpack.c.h.b16 %v2187
    %v2549 = vunpack.c.l.b16 %v2188
    %v2550 = vunpack.c.h.b16 %v2188
    %v2551 = vunpack.c.l.b16 %v2189
    %v2552 = vunpack.c.h.b16 %v2189
    %v2553 = vunpack.c.l.b16 %v2190
    %v2554 = vunpack.c.h.b16 %v2190
    %v2555 = vunpack.c.l.b16 %v2191
    %v2556 = vunpack.c.h.b16 %v2191
    %v2557 = vunpack.c.l.b16 %v2192
    %v2558 = vunpack.c.h.b16 %v2192
    %v2559 = vunpack.c.l.b16 %v2193
    %v2560 = vunpack.c.h.b16 %v2193
    %v2561 = vunpack.c.l.b16 %v2194
    %v2562 = vunpack.c.h.b16 %v2194
    %v2563 = vunpack.c.l.b16 %v2195
    %v2564 = vunpack.c.h.b16 %v2195
    %v2565 = vunpack.c.l.b16 %v2196
    %v2566 = vunpack.c.h.b16 %v2196
    %v2567 = vunpack.c.l.b16 %v2197
    %v2568 = vunpack.c.h.b16 %v2197
    %v2569 = vpack.c.b16 %v2509, %v2505
    %v2570 = vpack.c.b16 %v2510, %v2506
    %v2571 = vpack.c.b16 %v2511, %v2507
    %v2572 = vpack.c.b16 %v2512, %v2508
    %v2573 = vpack.c.b16 %v2517, %v2513
    %v2574 = vpack.c.b16 %v2518, %v2514
    %v2575 = vpack.c.b16 %v2519, %v2515
    %v2576 = vpack.c.b16 %v2520, %v2516
    %v2577 = vpack.c.b16 %v2525, %v2521
    %v2578 = vpack.c.b16 %v2526, %v2522
    %v2579 = vpack.c.b16 %v2527, %v2523
    %v2580 = vpack.c.b16 %v2528, %v2524
    %v2581 = vpack.c.b16 %v2533, %v2529
    %v2582 = vpack.c.b16 %v2534, %v2530
    %v2583 = vpack.c.b16 %v2535, %v2531
    %v2584 = vpack.c.b16 %v2536, %v2532
    %v2585 = vpack.c.b16 %v2541, %v2537
    %v2586 = vpack.c.b16 %v2542, %v2538
    %v2587 = vpack.c.b16 %v2543, %v2539
    %v2588 = vpack.c.b16 %v2544, %v2540
    %v2589 = vpack.c.b16 %v2549, %v2545
    %v2590 = vpack.c.b16 %v2550, %v2546
    %v2591 = vpack.c.b16 %v2551, %v2547
    %v2592 = vpack.c.b16 %v2552, %v2548
    %v2593 = vpack.c.b16 %v2557, %v2553
    %v2594 = vpack.c.b16 %v2558, %v2554
    %v2595 = vpack.c.b16 %v2559, %v2555
    %v2596 = vpack.c.b16 %v2560, %v2556
    %v2597 = vpack.c.b16 %v2565, %v2561
    %v2598 = vpack.c.b16 %v2566, %v2562
    %v2599 = vpack.c.b16 %v2567, %v2563
    %v2600 = vpack.c.b16 %v2568, %v2564
    %2633 = vmatprep.subr.bf16.mxu0 %v2570
    %2634 = vmatpush1.bf16.msra.mxu0 %v2569
    %2635 = vmatprep.subr.bf16.mxu0 %v2574
    %2636 = vmatpush1.bf16.msra.mxu0 %v2573
    %2637 = vmatprep.subr.bf16.mxu0 %v2578
    %2638 = vmatpush1.bf16.msra.mxu0 %v2577
    %2639 = vmatprep.subr.bf16.mxu0 %v2582
    %2640 = vmatpush1.bf16.msra.mxu0 %v2581
    %2641 = vmatprep.subr.bf16.mxu0 %v2586
    %2642 = vmatpush1.bf16.msra.mxu0 %v2585
    %2643 = vmatprep.subr.bf16.mxu0 %v2590
    %2644 = vmatpush1.bf16.msra.mxu0 %v2589
    %2645 = vmatprep.subr.bf16.mxu0 %v2594
    %2646 = vmatpush1.bf16.msra.mxu0 %v2593
    %2647 = vmatprep.subr.bf16.mxu0 %v2598
    %2648 = vmatpush1.bf16.msra.mxu0 %v2597
    %2649 = vmatprep.subr.bf16.mxu0 0
    %2650 = vmatpush1.bf16.msra.mxu0 0
    %2651 = vmatprep.subr.bf16.mxu0 0
    %2652 = vmatpush1.bf16.msra.mxu0 0
    %2653 = vmatprep.subr.bf16.mxu0 0
    %2654 = vmatpush1.bf16.msra.mxu0 0
    %2655 = vmatprep.subr.bf16.mxu0 0
    %2656 = vmatpush1.bf16.msra.mxu0 0
    %2657 = vmatprep.subr.bf16.mxu0 0
    %2658 = vmatpush1.bf16.msra.mxu0 0
    %2659 = vmatprep.subr.bf16.mxu0 0
    %2660 = vmatpush1.bf16.msra.mxu0 0
    %2661 = vmatprep.subr.bf16.mxu0 0
    %2662 = vmatpush1.bf16.msra.mxu0 0
    %2663 = vmatprep.subr.bf16.mxu0 0
    %2664 = vmatpush1.bf16.msra.mxu0 0
    %2665 = vmatprep.mubr.bf16.mxu0 0
    %2666 = vmatmul.mubr.bf16.gmra.mrb[0].mxu0 %v2165
    %v2667 = vpop.f32.mrb[0].mxu0
    %v2668 = vadd.f32 %v2426, %v2667
    %v2669 = vpop.f32.mrb[0].mxu0
    %v2670 = vadd.f32 %v2428, %v2669
    %v2671 = vpop.f32.mrb[0].mxu0
    %v2672 = vpop.f32.mrb[0].mxu0
    %2673 = vdwg.mxu0
    %2674 = vmatprep.subr.bf16.mxu0 %v2572
    %2675 = vmatpush1.bf16.msra.mxu0 %v2571
    %2676 = vmatprep.subr.bf16.mxu0 %v2576
    %2677 = vmatpush1.bf16.msra.mxu0 %v2575
    %2678 = vmatprep.subr.bf16.mxu0 %v2580
    %2679 = vmatpush1.bf16.msra.mxu0 %v2579
    %2680 = vmatprep.subr.bf16.mxu0 %v2584
    %2681 = vmatpush1.bf16.msra.mxu0 %v2583
    %2682 = vmatprep.subr.bf16.mxu0 %v2588
    %2683 = vmatpush1.bf16.msra.mxu0 %v2587
    %2684 = vmatprep.subr.bf16.mxu0 %v2592
    %2685 = vmatpush1.bf16.msra.mxu0 %v2591
    %2686 = vmatprep.subr.bf16.mxu0 %v2596
    %2687 = vmatpush1.bf16.msra.mxu0 %v2595
    %2688 = vmatprep.subr.bf16.mxu0 %v2600
    %2689 = vmatpush1.bf16.msra.mxu0 %v2599
    %2690 = vmatprep.subr.bf16.mxu0 0
    %2691 = vmatpush1.bf16.msra.mxu0 0
    %2692 = vmatprep.subr.bf16.mxu0 0
    %2693 = vmatpush1.bf16.msra.mxu0 0
    %2694 = vmatprep.subr.bf16.mxu0 0
    %2695 = vmatpush1.bf16.msra.mxu0 0
    %2696 = vmatprep.subr.bf16.mxu0 0
    %2697 = vmatpush1.bf16.msra.mxu0 0
    %2698 = vmatprep.subr.bf16.mxu0 0
    %2699 = vmatpush1.bf16.msra.mxu0 0
    %2700 = vmatprep.subr.bf16.mxu0 0
    %2701 = vmatpush1.bf16.msra.mxu0 0
    %2702 = vmatprep.subr.bf16.mxu0 0
    %2703 = vmatpush1.bf16.msra.mxu0 0
    %2704 = vmatprep.subr.bf16.mxu0 0
    %2705 = vmatpush1.bf16.msra.mxu0 0
    %2706 = vmatprep.mubr.bf16.mxu0 0
    %2707 = vmatmul.mubr.bf16.gmra.mrb[0].mxu0 %v2165
    %v2708 = vpop.f32.mrb[0].mxu0
    %v2709 = vadd.f32 %v2467, %v2708
    %v2710 = vpop.f32.mrb[0].mxu0
    %v2711 = vadd.f32 %v2469, %v2710
    %v2712 = vpop.f32.mrb[0].mxu0
    %v2713 = vpop.f32.mrb[0].mxu0
    %2714 = vdwg.mxu0
    %v2715 = vmul.f32 %v1867, %v1867
    %2716 = vadd.xlane.f32.xlu0 %v2715
    %v2717 = vpop.xlane.xlu0 %2716
    %v2718 = vmul.f32 %v2717, %v1998
    %v2719 = vadd.f32 %v2718, 1e-06
    %v2720 = vrsqrt.pop %v2719
    %v2721 = vmul.f32 %v1867, %v2720
    %v2722 = vmul.f32 %v2721, %v2007
    %v2723 = vmul.f32 %v2722, %v1955
    %2724 = vrot.lane.b32.xlu0 %v2722, 64
    %v2725 = vpop.permute.xlu0 %2724
    %v2726 = vmul.f32 %v2725, %v1956
    %v2727 = vadd.f32 %v2723, %v2726
    %v2728 = vpack.c.bf16 %v2727, %v2727
    %v2729 = vpack.c.bf16 %v1949, %v1949
    %v2730 = vmul.f32 %v1015, %v1015
    %2731 = vadd.xlane.f32.xlu0 %v2730
    %v2732 = vpop.xlane.xlu0 %2731
    %v2733 = vmul.f32 %v2732, %v1998
    %v2734 = vadd.f32 %v2733, 1e-06
    %v2735 = vrsqrt.pop %v2734
    %v2736 = vmul.f32 %v1015, %v2735
    %v2737 = vmul.f32 %v2736, %v2028
    %v2738 = vmul.f32 %v2737, %v1958
    %2739 = vrot.lane.b32.xlu0 %v2737, 64
    %v2740 = vpop.permute.xlu0 %2739
    %v2741 = vmul.f32 %v2740, %v1960
    %v2742 = vadd.f32 %v2738, %v2741
    %v2743 = vmul.f32 %v1017, %v1017
    %2744 = vadd.xlane.f32.xlu0 %v2743
    %v2745 = vpop.xlane.xlu0 %2744
    %v2746 = vmul.f32 %v2745, %v1998
    %v2747 = vadd.f32 %v2746, 1e-06
    %v2748 = vrsqrt.pop %v2747
    %v2749 = vmul.f32 %v1017, %v2748
    %v2750 = vmul.f32 %v2749, %v2028
    %v2751 = vmul.f32 %v2750, %v1958
    %2752 = vrot.lane.b32.xlu0 %v2750, 64
    %v2753 = vpop.permute.xlu0 %2752
    %v2754 = vmul.f32 %v2753, %v1960
    %v2755 = vadd.f32 %v2751, %v2754
    %v2756 = vpack.c.bf16 %v2755, %v2742
    %2757 = vmatprep.subr.bf16.mxu0 0
    %2758 = vmatpush1.bf16.xpose.msra.mxu0 %v2728
    %2759 = vmatprep.subr.bf16.mxu0 0
    %2760 = vmatpush1.bf16.xpose.msra.mxu0 0
    %2761 = vmatprep.subr.bf16.mxu0 0
    %2762 = vmatpush1.bf16.xpose.msra.mxu0 0
    %2763 = vmatprep.subr.bf16.mxu0 0
    %2764 = vmatpush1.bf16.xpose.msra.mxu0 0
    %2765 = vmatprep.subr.bf16.mxu0 0
    %2766 = vmatpush1.bf16.xpose.msra.mxu0 0
    %2767 = vmatprep.subr.bf16.mxu0 0
    %2768 = vmatpush1.bf16.xpose.msra.mxu0 0
    %2769 = vmatprep.subr.bf16.mxu0 0
    %2770 = vmatpush1.bf16.xpose.msra.mxu0 0
    %2771 = vmatprep.subr.bf16.mxu0 0
    %2772 = vmatpush1.bf16.xpose.msra.mxu0 0
    %2773 = vmatprep.subr.bf16.mxu0 0
    %2774 = vmatpush1.bf16.xpose.msra.mxu0 0
    %2775 = vmatprep.subr.bf16.mxu0 0
    %2776 = vmatpush1.bf16.xpose.msra.mxu0 0
    %2777 = vmatprep.subr.bf16.mxu0 0
    %2778 = vmatpush1.bf16.xpose.msra.mxu0 0
    %2779 = vmatprep.subr.bf16.mxu0 0
    %2780 = vmatpush1.bf16.xpose.msra.mxu0 0
    %2781 = vmatprep.subr.bf16.mxu0 0
    %2782 = vmatpush1.bf16.xpose.msra.mxu0 0
    %2783 = vmatprep.subr.bf16.mxu0 0
    %2784 = vmatpush1.bf16.xpose.msra.mxu0 0
    %2785 = vmatprep.subr.bf16.mxu0 0
    %2786 = vmatpush1.bf16.xpose.msra.mxu0 0
    %2787 = vmatprep.subr.bf16.mxu0 0
    %2788 = vmatpush1.bf16.xpose.msra.mxu0 0
    %2789 = vmatprep.mubr.bf16.mxu0 0
    %2790 = vmatmul.mubr.bf16.gmra.mrb[0].mxu0 %v2756
    %v2791 = vpop.f32.mrb[0].mxu0
    %v2792 = vadd.f32 0.0, %v2791
    %v2793 = vpop.f32.mrb[0].mxu0
    %v2794 = vpop.f32.mrb[0].mxu0
    %v2795 = vadd.f32 0.0, %v2794
    %v2796 = vpop.f32.mrb[0].mxu0
    %2797 = vdwg.mxu0
    %v2798 = vsel %vm1993, %v2792, -1e+30
    %v2799 = vsel %vm1994, %v2795, -1e+30
    %v2800 = vsel %vm2093, %v2798, -inf
    %2801 = vmax.xlane.f32.xlu0 %v2800
    %v2802 = vpop.xlane.xlu0 %2801
    %v2803 = vsel %vm2093, %v2799, -inf
    %2804 = vmax.xlane.f32.xlu0 %v2803
    %v2805 = vpop.xlane.xlu0 %2804
    %v2806 = vsub.f32 %v2798, %v2802
    %v2807 = vsub.f32 %v2799, %v2805
    %v2808 = vmul.f32 %v2806, 1.442695
    %v2809 = vpow.pop %v2808
    %v2810 = vmul.f32 %v2807, 1.442695
    %v2811 = vpow.pop %v2810
    %v2812 = vsel %vm2093, %v2809, 0.0
    %2813 = vadd.xlane.f32.xlu0 %v2812
    %v2814 = vpop.xlane.xlu0 %2813
    %v2815 = vsel %vm2093, %v2811, 0.0
    %2816 = vadd.xlane.f32.xlu0 %v2815
    %v2817 = vpop.xlane.xlu0 %2816
    %v2818 = vrcp.pop %v2814
    %v2819 = vrcp.pop %v2817
    %v2820 = vmul.f32 %v2809, %v2818
    %v2821 = vmul.f32 %v2811, %v2819
    %v2822 = vpack.c.bf16 %v2821, %v2820
    %v2824 = vsel %vm2093, %v2822, 0
    %v2827 = vsel %vm2120, %v2729, 0
    %2829 = vmatprep.subr.bf16.mxu0 0
    %2830 = vmatpush1.bf16.msra.mxu0 %v2827
    %2831 = vmatprep.subr.bf16.mxu0 0
    %2832 = vmatpush1.bf16.msra.mxu0 0
    %2833 = vmatprep.subr.bf16.mxu0 0
    %2834 = vmatpush1.bf16.msra.mxu0 0
    %2835 = vmatprep.subr.bf16.mxu0 0
    %2836 = vmatpush1.bf16.msra.mxu0 0
    %2837 = vmatprep.subr.bf16.mxu0 0
    %2838 = vmatpush1.bf16.msra.mxu0 0
    %2839 = vmatprep.subr.bf16.mxu0 0
    %2840 = vmatpush1.bf16.msra.mxu0 0
    %2841 = vmatprep.subr.bf16.mxu0 0
    %2842 = vmatpush1.bf16.msra.mxu0 0
    %2843 = vmatprep.subr.bf16.mxu0 0
    %2844 = vmatpush1.bf16.msra.mxu0 0
    %2845 = vmatprep.subr.bf16.mxu0 0
    %2846 = vmatpush1.bf16.msra.mxu0 0
    %2847 = vmatprep.subr.bf16.mxu0 0
    %2848 = vmatpush1.bf16.msra.mxu0 0
    %2849 = vmatprep.subr.bf16.mxu0 0
    %2850 = vmatpush1.bf16.msra.mxu0 0
    %2851 = vmatprep.subr.bf16.mxu0 0
    %2852 = vmatpush1.bf16.msra.mxu0 0
    %2853 = vmatprep.subr.bf16.mxu0 0
    %2854 = vmatpush1.bf16.msra.mxu0 0
    %2855 = vmatprep.subr.bf16.mxu0 0
    %2856 = vmatpush1.bf16.msra.mxu0 0
    %2857 = vmatprep.subr.bf16.mxu0 0
    %2858 = vmatpush1.bf16.msra.mxu0 0
    %2859 = vmatprep.subr.bf16.mxu0 0
    %2860 = vmatpush1.bf16.msra.mxu0 0
    %2861 = vmatprep.mubr.bf16.mxu0 0
    %2862 = vmatmul.mubr.bf16.gmra.mrb[0].mxu0 %v2824
    %v2863 = vpop.f32.mrb[0].mxu0
    %v2864 = vadd.f32 0.0, %v2863
    %v2865 = vpop.f32.mrb[0].mxu0
    %v2866 = vpop.f32.mrb[0].mxu0
    %v2867 = vadd.f32 0.0, %v2866
    %v2868 = vpop.f32.mrb[0].mxu0
    %2869 = vdwg.mxu0
    %v2870 = vpack.c.bf16 %v2864, %v2864
    %v2871 = vld [vmem:[#allocation7 + $0x200] sm:$0xff]
    %v2872 = vld [vmem:[#allocation7 + $0x208] sm:$0xff]
    %v2873 = vld [vmem:[#allocation7 + $0x210] sm:$0xff]
    %v2874 = vld [vmem:[#allocation7 + $0x218] sm:$0xff]
    %v2875 = vld [vmem:[#allocation7 + $0x220] sm:$0xff]
    %v2876 = vld [vmem:[#allocation7 + $0x228] sm:$0xff]
    %v2877 = vld [vmem:[#allocation7 + $0x230] sm:$0xff]
    %v2878 = vld [vmem:[#allocation7 + $0x238] sm:$0xff]
    %v2879 = vld [vmem:[#allocation7 + $0x240] sm:$0xff]
    %v2880 = vld [vmem:[#allocation7 + $0x248] sm:$0xff]
    %v2881 = vld [vmem:[#allocation7 + $0x250] sm:$0xff]
    %v2882 = vld [vmem:[#allocation7 + $0x258] sm:$0xff]
    %v2883 = vld [vmem:[#allocation7 + $0x260] sm:$0xff]
    %v2884 = vld [vmem:[#allocation7 + $0x268] sm:$0xff]
    %v2885 = vld [vmem:[#allocation7 + $0x270] sm:$0xff]
    %v2886 = vld [vmem:[#allocation7 + $0x278] sm:$0xff]
    %v2887 = vld [vmem:[#allocation7 + $0x280] sm:$0xff]
    %v2888 = vld [vmem:[#allocation7 + $0x288] sm:$0xff]
    %v2889 = vld [vmem:[#allocation7 + $0x290] sm:$0xff]
    %v2890 = vld [vmem:[#allocation7 + $0x298] sm:$0xff]
    %v2891 = vld [vmem:[#allocation7 + $0x2a0] sm:$0xff]
    %v2892 = vld [vmem:[#allocation7 + $0x2a8] sm:$0xff]
    %v2893 = vld [vmem:[#allocation7 + $0x2b0] sm:$0xff]
    %v2894 = vld [vmem:[#allocation7 + $0x2b8] sm:$0xff]
    %v2895 = vld [vmem:[#allocation7 + $0x2c0] sm:$0xff]
    %v2896 = vld [vmem:[#allocation7 + $0x2c8] sm:$0xff]
    %v2897 = vld [vmem:[#allocation7 + $0x2d0] sm:$0xff]
    %v2898 = vld [vmem:[#allocation7 + $0x2d8] sm:$0xff]
    %v2899 = vld [vmem:[#allocation7 + $0x2e0] sm:$0xff]
    %v2900 = vld [vmem:[#allocation7 + $0x2e8] sm:$0xff]
    %v2901 = vld [vmem:[#allocation7 + $0x2f0] sm:$0xff]
    %v2902 = vld [vmem:[#allocation7 + $0x2f8] sm:$0xff]
    %v2935 = vunpack.c.l.b16 %v2871
    %v2936 = vunpack.c.h.b16 %v2871
    %v2937 = vunpack.c.l.b16 %v2872
    %v2938 = vunpack.c.h.b16 %v2872
    %v2939 = vunpack.c.l.b16 %v2873
    %v2940 = vunpack.c.h.b16 %v2873
    %v2941 = vunpack.c.l.b16 %v2874
    %v2942 = vunpack.c.h.b16 %v2874
    %v2943 = vunpack.c.l.b16 %v2875
    %v2944 = vunpack.c.h.b16 %v2875
    %v2945 = vunpack.c.l.b16 %v2876
    %v2946 = vunpack.c.h.b16 %v2876
    %v2947 = vunpack.c.l.b16 %v2877
    %v2948 = vunpack.c.h.b16 %v2877
    %v2949 = vunpack.c.l.b16 %v2878
    %v2950 = vunpack.c.h.b16 %v2878
    %v2951 = vunpack.c.l.b16 %v2879
    %v2952 = vunpack.c.h.b16 %v2879
    %v2953 = vunpack.c.l.b16 %v2880
    %v2954 = vunpack.c.h.b16 %v2880
    %v2955 = vunpack.c.l.b16 %v2881
    %v2956 = vunpack.c.h.b16 %v2881
    %v2957 = vunpack.c.l.b16 %v2882
    %v2958 = vunpack.c.h.b16 %v2882
    %v2959 = vunpack.c.l.b16 %v2883
    %v2960 = vunpack.c.h.b16 %v2883
    %v2961 = vunpack.c.l.b16 %v2884
    %v2962 = vunpack.c.h.b16 %v2884
    %v2963 = vunpack.c.l.b16 %v2885
    %v2964 = vunpack.c.h.b16 %v2885
    %v2965 = vunpack.c.l.b16 %v2886
    %v2966 = vunpack.c.h.b16 %v2886
    %v2967 = vunpack.c.l.b16 %v2887
    %v2968 = vunpack.c.h.b16 %v2887
    %v2969 = vunpack.c.l.b16 %v2888
    %v2970 = vunpack.c.h.b16 %v2888
    %v2971 = vunpack.c.l.b16 %v2889
    %v2972 = vunpack.c.h.b16 %v2889
    %v2973 = vunpack.c.l.b16 %v2890
    %v2974 = vunpack.c.h.b16 %v2890
    %v2975 = vunpack.c.l.b16 %v2891
    %v2976 = vunpack.c.h.b16 %v2891
    %v2977 = vunpack.c.l.b16 %v2892
    %v2978 = vunpack.c.h.b16 %v2892
    %v2979 = vunpack.c.l.b16 %v2893
    %v2980 = vunpack.c.h.b16 %v2893
    %v2981 = vunpack.c.l.b16 %v2894
    %v2982 = vunpack.c.h.b16 %v2894
    %v2983 = vunpack.c.l.b16 %v2895
    %v2984 = vunpack.c.h.b16 %v2895
    %v2985 = vunpack.c.l.b16 %v2896
    %v2986 = vunpack.c.h.b16 %v2896
    %v2987 = vunpack.c.l.b16 %v2897
    %v2988 = vunpack.c.h.b16 %v2897
    %v2989 = vunpack.c.l.b16 %v2898
    %v2990 = vunpack.c.h.b16 %v2898
    %v2991 = vunpack.c.l.b16 %v2899
    %v2992 = vunpack.c.h.b16 %v2899
    %v2993 = vunpack.c.l.b16 %v2900
    %v2994 = vunpack.c.h.b16 %v2900
    %v2995 = vunpack.c.l.b16 %v2901
    %v2996 = vunpack.c.h.b16 %v2901
    %v2997 = vunpack.c.l.b16 %v2902
    %v2998 = vunpack.c.h.b16 %v2902
    %v2999 = vpack.c.b16 %v2939, %v2935
    %v3000 = vpack.c.b16 %v2940, %v2936
    %v3001 = vpack.c.b16 %v2941, %v2937
    %v3002 = vpack.c.b16 %v2942, %v2938
    %v3003 = vpack.c.b16 %v2947, %v2943
    %v3004 = vpack.c.b16 %v2948, %v2944
    %v3005 = vpack.c.b16 %v2949, %v2945
    %v3006 = vpack.c.b16 %v2950, %v2946
    %v3007 = vpack.c.b16 %v2955, %v2951
    %v3008 = vpack.c.b16 %v2956, %v2952
    %v3009 = vpack.c.b16 %v2957, %v2953
    %v3010 = vpack.c.b16 %v2958, %v2954
    %v3011 = vpack.c.b16 %v2963, %v2959
    %v3012 = vpack.c.b16 %v2964, %v2960
    %v3013 = vpack.c.b16 %v2965, %v2961
    %v3014 = vpack.c.b16 %v2966, %v2962
    %v3015 = vpack.c.b16 %v2971, %v2967
    %v3016 = vpack.c.b16 %v2972, %v2968
    %v3017 = vpack.c.b16 %v2973, %v2969
    %v3018 = vpack.c.b16 %v2974, %v2970
    %v3019 = vpack.c.b16 %v2979, %v2975
    %v3020 = vpack.c.b16 %v2980, %v2976
    %v3021 = vpack.c.b16 %v2981, %v2977
    %v3022 = vpack.c.b16 %v2982, %v2978
    %v3023 = vpack.c.b16 %v2987, %v2983
    %v3024 = vpack.c.b16 %v2988, %v2984
    %v3025 = vpack.c.b16 %v2989, %v2985
    %v3026 = vpack.c.b16 %v2990, %v2986
    %v3027 = vpack.c.b16 %v2995, %v2991
    %v3028 = vpack.c.b16 %v2996, %v2992
    %v3029 = vpack.c.b16 %v2997, %v2993
    %v3030 = vpack.c.b16 %v2998, %v2994
    %3063 = vmatprep.subr.bf16.mxu0 %v3000
    %3064 = vmatpush1.bf16.msra.mxu0 %v2999
    %3065 = vmatprep.subr.bf16.mxu0 %v3004
    %3066 = vmatpush1.bf16.msra.mxu0 %v3003
    %3067 = vmatprep.subr.bf16.mxu0 %v3008
    %3068 = vmatpush1.bf16.msra.mxu0 %v3007
    %3069 = vmatprep.subr.bf16.mxu0 %v3012
    %3070 = vmatpush1.bf16.msra.mxu0 %v3011
    %3071 = vmatprep.subr.bf16.mxu0 %v3016
    %3072 = vmatpush1.bf16.msra.mxu0 %v3015
    %3073 = vmatprep.subr.bf16.mxu0 %v3020
    %3074 = vmatpush1.bf16.msra.mxu0 %v3019
    %3075 = vmatprep.subr.bf16.mxu0 %v3024
    %3076 = vmatpush1.bf16.msra.mxu0 %v3023
    %3077 = vmatprep.subr.bf16.mxu0 %v3028
    %3078 = vmatpush1.bf16.msra.mxu0 %v3027
    %3079 = vmatprep.subr.bf16.mxu0 0
    %3080 = vmatpush1.bf16.msra.mxu0 0
    %3081 = vmatprep.subr.bf16.mxu0 0
    %3082 = vmatpush1.bf16.msra.mxu0 0
    %3083 = vmatprep.subr.bf16.mxu0 0
    %3084 = vmatpush1.bf16.msra.mxu0 0
    %3085 = vmatprep.subr.bf16.mxu0 0
    %3086 = vmatpush1.bf16.msra.mxu0 0
    %3087 = vmatprep.subr.bf16.mxu0 0
    %3088 = vmatpush1.bf16.msra.mxu0 0
    %3089 = vmatprep.subr.bf16.mxu0 0
    %3090 = vmatpush1.bf16.msra.mxu0 0
    %3091 = vmatprep.subr.bf16.mxu0 0
    %3092 = vmatpush1.bf16.msra.mxu0 0
    %3093 = vmatprep.subr.bf16.mxu0 0
    %3094 = vmatpush1.bf16.msra.mxu0 0
    %3095 = vmatprep.mubr.bf16.mxu0 0
    %3096 = vmatmul.mubr.bf16.gmra.mrb[0].mxu0 %v2870
    %v3097 = vpop.f32.mrb[0].mxu0
    %v3098 = vadd.f32 0.0, %v3097
    %v3099 = vpop.f32.mrb[0].mxu0
    %v3100 = vadd.f32 0.0, %v3099
    %v3101 = vpop.f32.mrb[0].mxu0
    %v3102 = vpop.f32.mrb[0].mxu0
    %3103 = vdwg.mxu0
    %3104 = vmatprep.subr.bf16.mxu0 %v3002
    %3105 = vmatpush1.bf16.msra.mxu0 %v3001
    %3106 = vmatprep.subr.bf16.mxu0 %v3006
    %3107 = vmatpush1.bf16.msra.mxu0 %v3005
    %3108 = vmatprep.subr.bf16.mxu0 %v3010
    %3109 = vmatpush1.bf16.msra.mxu0 %v3009
    %3110 = vmatprep.subr.bf16.mxu0 %v3014
    %3111 = vmatpush1.bf16.msra.mxu0 %v3013
    %3112 = vmatprep.subr.bf16.mxu0 %v3018
    %3113 = vmatpush1.bf16.msra.mxu0 %v3017
    %3114 = vmatprep.subr.bf16.mxu0 %v3022
    %3115 = vmatpush1.bf16.msra.mxu0 %v3021
    %3116 = vmatprep.subr.bf16.mxu0 %v3026
    %3117 = vmatpush1.bf16.msra.mxu0 %v3025
    %3118 = vmatprep.subr.bf16.mxu0 %v3030
    %3119 = vmatpush1.bf16.msra.mxu0 %v3029
    %3120 = vmatprep.subr.bf16.mxu0 0
    %3121 = vmatpush1.bf16.msra.mxu0 0
    %3122 = vmatprep.subr.bf16.mxu0 0
    %3123 = vmatpush1.bf16.msra.mxu0 0
    %3124 = vmatprep.subr.bf16.mxu0 0
    %3125 = vmatpush1.bf16.msra.mxu0 0
    %3126 = vmatprep.subr.bf16.mxu0 0
    %3127 = vmatpush1.bf16.msra.mxu0 0
    %3128 = vmatprep.subr.bf16.mxu0 0
    %3129 = vmatpush1.bf16.msra.mxu0 0
    %3130 = vmatprep.subr.bf16.mxu0 0
    %3131 = vmatpush1.bf16.msra.mxu0 0
    %3132 = vmatprep.subr.bf16.mxu0 0
    %3133 = vmatpush1.bf16.msra.mxu0 0
    %3134 = vmatprep.subr.bf16.mxu0 0
    %3135 = vmatpush1.bf16.msra.mxu0 0
    %3136 = vmatprep.mubr.bf16.mxu0 0
    %3137 = vmatmul.mubr.bf16.gmra.mrb[0].mxu0 %v2870
    %v3138 = vpop.f32.mrb[0].mxu0
    %v3139 = vadd.f32 0.0, %v3138
    %v3140 = vpop.f32.mrb[0].mxu0
    %v3141 = vadd.f32 0.0, %v3140
    %v3142 = vpop.f32.mrb[0].mxu0
    %v3143 = vpop.f32.mrb[0].mxu0
    %3144 = vdwg.mxu0
    %v3145 = vadd.f32 %v2668, %v3098
    %v3146 = vadd.f32 %v2670, %v3100
    %v3147 = vadd.f32 %v2709, %v3139
    %v3148 = vadd.f32 %v2711, %v3141
    %v3149 = vpack.c.bf16 %v2867, %v2867
    %v3150 = vld [vmem:[#allocation7 + $0x300] sm:$0xff]
    %v3151 = vld [vmem:[#allocation7 + $0x308] sm:$0xff]
    %v3152 = vld [vmem:[#allocation7 + $0x310] sm:$0xff]
    %v3153 = vld [vmem:[#allocation7 + $0x318] sm:$0xff]
    %v3154 = vld [vmem:[#allocation7 + $0x320] sm:$0xff]
    %v3155 = vld [vmem:[#allocation7 + $0x328] sm:$0xff]
    %v3156 = vld [vmem:[#allocation7 + $0x330] sm:$0xff]
    %v3157 = vld [vmem:[#allocation7 + $0x338] sm:$0xff]
    %v3158 = vld [vmem:[#allocation7 + $0x340] sm:$0xff]
    %v3159 = vld [vmem:[#allocation7 + $0x348] sm:$0xff]
    %v3160 = vld [vmem:[#allocation7 + $0x350] sm:$0xff]
    %v3161 = vld [vmem:[#allocation7 + $0x358] sm:$0xff]
    %v3162 = vld [vmem:[#allocation7 + $0x360] sm:$0xff]
    %v3163 = vld [vmem:[#allocation7 + $0x368] sm:$0xff]
    %v3164 = vld [vmem:[#allocation7 + $0x370] sm:$0xff]
    %v3165 = vld [vmem:[#allocation7 + $0x378] sm:$0xff]
    %v3166 = vld [vmem:[#allocation7 + $0x380] sm:$0xff]
    %v3167 = vld [vmem:[#allocation7 + $0x388] sm:$0xff]
    %v3168 = vld [vmem:[#allocation7 + $0x390] sm:$0xff]
    %v3169 = vld [vmem:[#allocation7 + $0x398] sm:$0xff]
    %v3170 = vld [vmem:[#allocation7 + $0x3a0] sm:$0xff]
    %v3171 = vld [vmem:[#allocation7 + $0x3a8] sm:$0xff]
    %v3172 = vld [vmem:[#allocation7 + $0x3b0] sm:$0xff]
    %v3173 = vld [vmem:[#allocation7 + $0x3b8] sm:$0xff]
    %v3174 = vld [vmem:[#allocation7 + $0x3c0] sm:$0xff]
    %v3175 = vld [vmem:[#allocation7 + $0x3c8] sm:$0xff]
    %v3176 = vld [vmem:[#allocation7 + $0x3d0] sm:$0xff]
    %v3177 = vld [vmem:[#allocation7 + $0x3d8] sm:$0xff]
    %v3178 = vld [vmem:[#allocation7 + $0x3e0] sm:$0xff]
    %v3179 = vld [vmem:[#allocation7 + $0x3e8] sm:$0xff]
    %v3180 = vld [vmem:[#allocation7 + $0x3f0] sm:$0xff]
    %v3181 = vld [vmem:[#allocation7 + $0x3f8] sm:$0xff]
    %v3214 = vunpack.c.l.b16 %v3150
    %v3215 = vunpack.c.h.b16 %v3150
    %v3216 = vunpack.c.l.b16 %v3151
    %v3217 = vunpack.c.h.b16 %v3151
    %v3218 = vunpack.c.l.b16 %v3152
    %v3219 = vunpack.c.h.b16 %v3152
    %v3220 = vunpack.c.l.b16 %v3153
    %v3221 = vunpack.c.h.b16 %v3153
    %v3222 = vunpack.c.l.b16 %v3154
    %v3223 = vunpack.c.h.b16 %v3154
    %v3224 = vunpack.c.l.b16 %v3155
    %v3225 = vunpack.c.h.b16 %v3155
    %v3226 = vunpack.c.l.b16 %v3156
    %v3227 = vunpack.c.h.b16 %v3156
    %v3228 = vunpack.c.l.b16 %v3157
    %v3229 = vunpack.c.h.b16 %v3157
    %v3230 = vunpack.c.l.b16 %v3158
    %v3231 = vunpack.c.h.b16 %v3158
    %v3232 = vunpack.c.l.b16 %v3159
    %v3233 = vunpack.c.h.b16 %v3159
    %v3234 = vunpack.c.l.b16 %v3160
    %v3235 = vunpack.c.h.b16 %v3160
    %v3236 = vunpack.c.l.b16 %v3161
    %v3237 = vunpack.c.h.b16 %v3161
    %v3238 = vunpack.c.l.b16 %v3162
    %v3239 = vunpack.c.h.b16 %v3162
    %v3240 = vunpack.c.l.b16 %v3163
    %v3241 = vunpack.c.h.b16 %v3163
    %v3242 = vunpack.c.l.b16 %v3164
    %v3243 = vunpack.c.h.b16 %v3164
    %v3244 = vunpack.c.l.b16 %v3165
    %v3245 = vunpack.c.h.b16 %v3165
    %v3246 = vunpack.c.l.b16 %v3166
    %v3247 = vunpack.c.h.b16 %v3166
    %v3248 = vunpack.c.l.b16 %v3167
    %v3249 = vunpack.c.h.b16 %v3167
    %v3250 = vunpack.c.l.b16 %v3168
    %v3251 = vunpack.c.h.b16 %v3168
    %v3252 = vunpack.c.l.b16 %v3169
    %v3253 = vunpack.c.h.b16 %v3169
    %v3254 = vunpack.c.l.b16 %v3170
    %v3255 = vunpack.c.h.b16 %v3170
    %v3256 = vunpack.c.l.b16 %v3171
    %v3257 = vunpack.c.h.b16 %v3171
    %v3258 = vunpack.c.l.b16 %v3172
    %v3259 = vunpack.c.h.b16 %v3172
    %v3260 = vunpack.c.l.b16 %v3173
    %v3261 = vunpack.c.h.b16 %v3173
    %v3262 = vunpack.c.l.b16 %v3174
    %v3263 = vunpack.c.h.b16 %v3174
    %v3264 = vunpack.c.l.b16 %v3175
    %v3265 = vunpack.c.h.b16 %v3175
    %v3266 = vunpack.c.l.b16 %v3176
    %v3267 = vunpack.c.h.b16 %v3176
    %v3268 = vunpack.c.l.b16 %v3177
    %v3269 = vunpack.c.h.b16 %v3177
    %v3270 = vunpack.c.l.b16 %v3178
    %v3271 = vunpack.c.h.b16 %v3178
    %v3272 = vunpack.c.l.b16 %v3179
    %v3273 = vunpack.c.h.b16 %v3179
    %v3274 = vunpack.c.l.b16 %v3180
    %v3275 = vunpack.c.h.b16 %v3180
    %v3276 = vunpack.c.l.b16 %v3181
    %v3277 = vunpack.c.h.b16 %v3181
    %v3278 = vpack.c.b16 %v3218, %v3214
    %v3279 = vpack.c.b16 %v3219, %v3215
    %v3280 = vpack.c.b16 %v3220, %v3216
    %v3281 = vpack.c.b16 %v3221, %v3217
    %v3282 = vpack.c.b16 %v3226, %v3222
    %v3283 = vpack.c.b16 %v3227, %v3223
    %v3284 = vpack.c.b16 %v3228, %v3224
    %v3285 = vpack.c.b16 %v3229, %v3225
    %v3286 = vpack.c.b16 %v3234, %v3230
    %v3287 = vpack.c.b16 %v3235, %v3231
    %v3288 = vpack.c.b16 %v3236, %v3232
    %v3289 = vpack.c.b16 %v3237, %v3233
    %v3290 = vpack.c.b16 %v3242, %v3238
    %v3291 = vpack.c.b16 %v3243, %v3239
    %v3292 = vpack.c.b16 %v3244, %v3240
    %v3293 = vpack.c.b16 %v3245, %v3241
    %v3294 = vpack.c.b16 %v3250, %v3246
    %v3295 = vpack.c.b16 %v3251, %v3247
    %v3296 = vpack.c.b16 %v3252, %v3248
    %v3297 = vpack.c.b16 %v3253, %v3249
    %v3298 = vpack.c.b16 %v3258, %v3254
    %v3299 = vpack.c.b16 %v3259, %v3255
    %v3300 = vpack.c.b16 %v3260, %v3256
    %v3301 = vpack.c.b16 %v3261, %v3257
    %v3302 = vpack.c.b16 %v3266, %v3262
    %v3303 = vpack.c.b16 %v3267, %v3263
    %v3304 = vpack.c.b16 %v3268, %v3264
    %v3305 = vpack.c.b16 %v3269, %v3265
    %v3306 = vpack.c.b16 %v3274, %v3270
    %v3307 = vpack.c.b16 %v3275, %v3271
    %v3308 = vpack.c.b16 %v3276, %v3272
    %v3309 = vpack.c.b16 %v3277, %v3273
    %3342 = vmatprep.subr.bf16.mxu0 %v3279
    %3343 = vmatpush1.bf16.msra.mxu0 %v3278
    %3344 = vmatprep.subr.bf16.mxu0 %v3283
    %3345 = vmatpush1.bf16.msra.mxu0 %v3282
    %3346 = vmatprep.subr.bf16.mxu0 %v3287
    %3347 = vmatpush1.bf16.msra.mxu0 %v3286
    %3348 = vmatprep.subr.bf16.mxu0 %v3291
    %3349 = vmatpush1.bf16.msra.mxu0 %v3290
    %3350 = vmatprep.subr.bf16.mxu0 %v3295
    %3351 = vmatpush1.bf16.msra.mxu0 %v3294
    %3352 = vmatprep.subr.bf16.mxu0 %v3299
    %3353 = vmatpush1.bf16.msra.mxu0 %v3298
    %3354 = vmatprep.subr.bf16.mxu0 %v3303
    %3355 = vmatpush1.bf16.msra.mxu0 %v3302
    %3356 = vmatprep.subr.bf16.mxu0 %v3307
    %3357 = vmatpush1.bf16.msra.mxu0 %v3306
    %3358 = vmatprep.subr.bf16.mxu0 0
    %3359 = vmatpush1.bf16.msra.mxu0 0
    %3360 = vmatprep.subr.bf16.mxu0 0
    %3361 = vmatpush1.bf16.msra.mxu0 0
    %3362 = vmatprep.subr.bf16.mxu0 0
    %3363 = vmatpush1.bf16.msra.mxu0 0
    %3364 = vmatprep.subr.bf16.mxu0 0
    %3365 = vmatpush1.bf16.msra.mxu0 0
    %3366 = vmatprep.subr.bf16.mxu0 0
    %3367 = vmatpush1.bf16.msra.mxu0 0
    %3368 = vmatprep.subr.bf16.mxu0 0
    %3369 = vmatpush1.bf16.msra.mxu0 0
    %3370 = vmatprep.subr.bf16.mxu0 0
    %3371 = vmatpush1.bf16.msra.mxu0 0
    %3372 = vmatprep.subr.bf16.mxu0 0
    %3373 = vmatpush1.bf16.msra.mxu0 0
    %3374 = vmatprep.mubr.bf16.mxu0 0
    %3375 = vmatmul.mubr.bf16.gmra.mrb[0].mxu0 %v3149
    %v3376 = vpop.f32.mrb[0].mxu0
    %v3377 = vadd.f32 0.0, %v3376
    %v3378 = vpop.f32.mrb[0].mxu0
    %v3379 = vadd.f32 0.0, %v3378
    %v3380 = vpop.f32.mrb[0].mxu0
    %v3381 = vpop.f32.mrb[0].mxu0
    %3382 = vdwg.mxu0
    %3383 = vmatprep.subr.bf16.mxu0 %v3281
    %3384 = vmatpush1.bf16.msra.mxu0 %v3280
    %3385 = vmatprep.subr.bf16.mxu0 %v3285
    %3386 = vmatpush1.bf16.msra.mxu0 %v3284
    %3387 = vmatprep.subr.bf16.mxu0 %v3289
    %3388 = vmatpush1.bf16.msra.mxu0 %v3288
    %3389 = vmatprep.subr.bf16.mxu0 %v3293
    %3390 = vmatpush1.bf16.msra.mxu0 %v3292
    %3391 = vmatprep.subr.bf16.mxu0 %v3297
    %3392 = vmatpush1.bf16.msra.mxu0 %v3296
    %3393 = vmatprep.subr.bf16.mxu0 %v3301
    %3394 = vmatpush1.bf16.msra.mxu0 %v3300
    %3395 = vmatprep.subr.bf16.mxu0 %v3305
    %3396 = vmatpush1.bf16.msra.mxu0 %v3304
    %3397 = vmatprep.subr.bf16.mxu0 %v3309
    %3398 = vmatpush1.bf16.msra.mxu0 %v3308
    %3399 = vmatprep.subr.bf16.mxu0 0
    %3400 = vmatpush1.bf16.msra.mxu0 0
    %3401 = vmatprep.subr.bf16.mxu0 0
    %3402 = vmatpush1.bf16.msra.mxu0 0
    %3403 = vmatprep.subr.bf16.mxu0 0
    %3404 = vmatpush1.bf16.msra.mxu0 0
    %3405 = vmatprep.subr.bf16.mxu0 0
    %3406 = vmatpush1.bf16.msra.mxu0 0
    %3407 = vmatprep.subr.bf16.mxu0 0
    %3408 = vmatpush1.bf16.msra.mxu0 0
    %3409 = vmatprep.subr.bf16.mxu0 0
    %3410 = vmatpush1.bf16.msra.mxu0 0
    %3411 = vmatprep.subr.bf16.mxu0 0
    %3412 = vmatpush1.bf16.msra.mxu0 0
    %3413 = vmatprep.subr.bf16.mxu0 0
    %3414 = vmatpush1.bf16.msra.mxu0 0
    %3415 = vmatprep.mubr.bf16.mxu0 0
    %3416 = vmatmul.mubr.bf16.gmra.mrb[0].mxu0 %v3149
    %v3417 = vpop.f32.mrb[0].mxu0
    %v3418 = vadd.f32 0.0, %v3417
    %v3419 = vpop.f32.mrb[0].mxu0
    %v3420 = vadd.f32 0.0, %v3419
    %v3421 = vpop.f32.mrb[0].mxu0
    %v3422 = vpop.f32.mrb[0].mxu0
    %3423 = vdwg.mxu0
    %v3424 = vadd.f32 %v3145, %v3377
    %v3425 = vadd.f32 %v3146, %v3379
    %v3426 = vadd.f32 %v3147, %v3418
    %v3427 = vadd.f32 %v3148, %v3420
    %3428 = vst [vmem:[#allocation8] sm:$0xff] %v3424
    %3429 = vst [vmem:[#allocation8 + $0x8] sm:$0xff] %v3425
    %3430 = vst [vmem:[#allocation8 + $0x10] sm:$0xff] %v3426
    %3431 = vst [vmem:[#allocation8 + $0x18] sm:$0xff] %v3427
    // Predicated region
    $region42: #{tpu_custom_call.1} parent=1 // pred_check
      _
    $region43: #{tpu_custom_call.1} parent=1 // pred_check_branch
      %3433 = sbr.rel (0) target = $region45
    $region44: #{tpu_custom_call.1} parent=1 // pred_region
      %s3435 = ssub.s32 512, 512
      %3436 = vsyncadd [#allocation4], %s3435
      %s3438 = sshll.u32 [#allocation8], 4
      %s3439 = int_to_ptr.vmem [resolvable:$true] %s3438
      %3441 = dma.vmem_to_hbm [thread:$0]  %s3439, 512, %s7, [#allocation4]
    $region45: #{tpu_custom_call.1} parent=1 // pred_fallthru
      _
    // Predicated region
    $region46: #{tpu_custom_call.1} parent=1 // pred_check
      _
    $region47: #{tpu_custom_call.1} parent=1 // pred_check_branch
      %3443 = sbr.rel (0) target = $region49
    $region48: #{tpu_custom_call.1} parent=1 // pred_region
      %3444 = dma.done [#allocation4], 512
    $region49: #{tpu_custom_call.1} parent=1 // pred_fallthru
      _
    %3445 = vsyncpa [#allocation3], 1
    %3446 = vsyncpa [#allocation6], 1
    %3447 = vsyncpa [#allocation4], 1

</llo_original>
